<compile_context>
chip_gen: v7x
topology: tpu7x:2x2x1
jax: 0.10.0
libtpu: 0.0.40
codegen_flags: <defaults>
</compile_context>

<pallas_src>
import functools

import jax
import jax.numpy as jnp
from jax.experimental import pallas as pl
from jax.experimental.pallas import tpu as pltpu


def _make_residual_block_kernel(H, W, C, Wpad):
    """Kernel for one batch image.

    Ref shapes seen by the kernel:
      x_ref   : (H, W, C)        input image (compute dtype)
      w*_ref  : (9C, C)          flattened HWIO weights, row = (kh*3+kw)*C + cin
      b*_ref  : (1, C)           biases (f32)
      o_ref   : (H, W, C)        output image
      xp_ref  : (H+3, Wpad, C)   VMEM scratch: reflect-padded x / h (+ spare row)
      lhs_ref : (H*Wpad, 9C)     VMEM scratch: im2col matrix
    """
    HS = H + 3              # H + 2 reflect-padded rows + 1 spare row (tap overrun)
    M = H * Wpad            # merged (row, padded-col) output rows per conv
    # Correctness of the flattened-width im2col relies on:
    #   * Wpad >= W + 2  -> junk columns (>= W+2) never feed kept outputs (kw <= 2)
    #   * the spare row only feeds junk output rows (flattened-tap overrun <= 2)
    assert Wpad >= W + 2

    def kernel(x_ref, w1_ref, b1_ref, w2_ref, b2_ref, o_ref, xp_ref, lhs_ref):
        cdt = xp_ref.dtype
        x = x_ref[...]                                        # (H, W, C)

        # Deterministic fill of the never-overwritten junk regions (spare row
        # and lane-padding columns).  They never reach a stored output, so this
        # is only ~(Wpad + (H+2)*(Wpad-W-2))*C elements of insurance per step.
        xp_ref[H + 2:H + 3, :, :] = jnp.zeros((1, Wpad, C), cdt)
        if Wpad > W + 2:
            xp_ref[0:H + 2, W + 2:Wpad, :] = jnp.zeros(
                (H + 2, Wpad - (W + 2), C), cdt)

        def reflect_pad_into_scratch(img):
            # PyTorch ReflectionPad2d((1,1,1,1)) of img -> xp_ref rows 0..H+1.
            xp_ref[1:H + 1, 1:W + 1, :] = img
            xp_ref[1:H + 1, 0:1, :] = img[:, 1:2, :]                  # left
            xp_ref[1:H + 1, W + 1:W + 2, :] = img[:, W - 2:W - 1, :]  # right
            xp_ref[0:1, :, :] = xp_ref[2:3, :, :]                     # top
            xp_ref[H + 1:H + 2, :, :] = xp_ref[H - 1:H, :, :]         # bottom

        def conv3x3(w_flat, bias):
            # im2col: tap (kh, kw) of merged output row m reads padded pixel
            # m + kh*Wpad + kw, i.e. a contiguous row slice of the flattened
            # pad scratch.  One masked slice store per tap, paid once, then a
            # single K=9C MXU matmul with an f32 result.
            src = xp_ref[...].reshape(HS * Wpad, C)
            for kh in range(3):
                for kw in range(3):
                    d = kh * Wpad + kw
                    c0 = (kh * 3 + kw) * C
                    lhs_ref[:, c0:c0 + C] = src[d:d + M, :]
            acc = jnp.dot(lhs_ref[...], w_flat,
                          preferred_element_type=jnp.float32)
            return acc + bias                                 # (M, C) f32

        w1 = w1_ref[...]
        w2 = w2_ref[...]
        b1 = b1_ref[...].astype(jnp.float32)
        b2 = b2_ref[...].astype(jnp.float32)

        # ---- conv1 -> ReLU -------------------------------------------------
        reflect_pad_into_scratch(x)
        h = jnp.maximum(conv3x3(w1, b1), 0.0)                 # (M, C) f32
        h3 = h.reshape(H, Wpad, C)                            # free: Wpad % 8 == 0

        # ---- conv2 (reuse pad scratch for padded h) -> +residual -> ReLU ----
        reflect_pad_into_scratch(h3[:, 0:W, :].astype(cdt))
        y = conv3x3(w2, b2).reshape(H, Wpad, C)[:, 0:W, :]    # (H, W, C) f32
        # NOTE: with C < 128 this store is lane-masked; a lane-dense (H, W*C)
        # output layout is a possible further optimization for chained blocks.
        o_ref[...] = jnp.maximum(y + x.astype(jnp.float32), 0.0).astype(o_ref.dtype)

    return kernel


def _sublane_pack(dtype):
    # 8 rows/sublane-tile for 4-byte dtypes, 16 for 2-byte, 32 for 1-byte.
    return max(8, 32 // jnp.dtype(dtype).itemsize)


@functools.partial(jax.jit, static_argnames=("compute_dtype", "out_dtype"))
def residual_block(x_nchw, w1, b1, w2, b2, *, compute_dtype=jnp.float32,
                   out_dtype=jnp.float32):
    """Fused ResidualBlock forward.

    x_nchw: (B, C, H, W).  w1/w2: (3, 3, C, C) HWIO.  b1/b2: (C,).
    Returns (B, C, H, W) in out_dtype.
    """
    B, C, H, W = x_nchw.shape
    assert H >= 2 and W >= 2, "reflection padding requires H, W >= 2"

    pack = _sublane_pack(compute_dtype)
    Wpad = ((W + 2 + pack - 1) // pack) * pack   # >= W+2; keeps reshapes layout-free
    M = H * Wpad

    # NCHW -> NHWC (C on the lane axis).
    # TODO(synk): when chaining residual blocks, keep activations NHWC
    # end-to-end so these two transposes are paid once per net, not per block.
    x = jnp.transpose(x_nchw, (0, 2, 3, 1)).astype(compute_dtype)
    w1f = w1.reshape(9 * C, C).astype(compute_dtype)   # row = (kh*3 + kw)*C + cin
    w2f = w2.reshape(9 * C, C).astype(compute_dtype)
    b1r = b1.reshape(1, C).astype(jnp.float32)
    b2r = b2.reshape(1, C).astype(jnp.float32)

    kernel = _make_residual_block_kernel(H, W, C, Wpad)

    cdt_size = jnp.dtype(compute_dtype).itemsize
    out_size = jnp.dtype(out_dtype).itemsize
    flops = 2 * 2 * 9 * B * H * W * C * C
    bytes_accessed = (B * H * W * C * (cdt_size + out_size)
                      + 2 * 9 * C * C * cdt_size + 2 * C * 4)

    # Per-step VMEM working set (double-buffered blocks + scratch + big live
    # values), with 2x headroom but capped inside v7x's 64 MiB physical VMEM.
    vmem_needed = (2 * H * W * C * cdt_size                  # input block x2
                   + 2 * H * W * C * out_size                # output block x2
                   + 2 * (2 * 9 * C * C * cdt_size + 2 * C * 4)   # weights/bias
                   + (H + 3) * Wpad * C * cdt_size           # pad scratch
                   + M * 9 * C * cdt_size                    # im2col scratch
                   + (H + 3) * Wpad * C * cdt_size           # src value
                   + 2 * M * C * 4)                          # f32 conv results
    vmem_limit = int(min(60 * 1024 * 1024, max(8 * 1024 * 1024, 2 * vmem_needed)))

    out_nhwc = pl.pallas_call(
        kernel,
        out_shape=jax.ShapeDtypeStruct((B, H, W, C), out_dtype),
        grid_spec=pltpu.PrefetchScalarGridSpec(
            num_scalar_prefetch=0,
            grid=(B,),
            in_specs=[
                pl.BlockSpec((None, H, W, C), lambda b: (b, 0, 0, 0)),
                pl.BlockSpec((9 * C, C), lambda b: (0, 0)),
                pl.BlockSpec((1, C), lambda b: (0, 0)),
                pl.BlockSpec((9 * C, C), lambda b: (0, 0)),
                pl.BlockSpec((1, C), lambda b: (0, 0)),
            ],
            out_specs=pl.BlockSpec((None, H, W, C), lambda b: (b, 0, 0, 0)),
            scratch_shapes=[
                pltpu.VMEM((H + 3, Wpad, C), compute_dtype),
                pltpu.VMEM((M, 9 * C), compute_dtype),
            ],
        ),
        compiler_params=pltpu.CompilerParams(
            dimension_semantics=("parallel",),
            vmem_limit_bytes=vmem_limit,
        ),
        cost_estimate=pl.CostEstimate(flops=flops, transcendentals=0,
                                      bytes_accessed=bytes_accessed),
    )(x, w1f, b1r, w2f, b2r)

    # TODO(synk): for very large frames add an H-band grid axis with a
    # manual-DMA halo so the im2col working set stays bounded; unnecessary at
    # Atari-scale spatial sizes.
    return jnp.transpose(out_nhwc, (0, 3, 1, 2))


# ---------------- pure-JAX reference (for correctness check) ----------------
def _conv_same_ref(x_nhwc, w_hwio, b):
    xp = jnp.pad(x_nhwc, ((0, 0), (1, 1), (1, 1), (0, 0)), mode="reflect")
    y = jax.lax.conv_general_dilated(
        xp, w_hwio, (1, 1), "VALID",
        dimension_numbers=("NHWC", "HWIO", "NHWC"))
    return y + b


def residual_block_ref(x_nchw, w1, b1, w2, b2):
    x = jnp.transpose(x_nchw, (0, 2, 3, 1)).astype(jnp.float32)
    h = jax.nn.relu(_conv_same_ref(x, w1, b1))
    y = jax.nn.relu(_conv_same_ref(h, w2, b2) + x)
    return jnp.transpose(y, (0, 3, 1, 2))


if __name__ == "__main__":
    B, C, H, W = 2, 4, 16, 16
    key = jax.random.PRNGKey(0)
    kx, kw1, kb1, kw2, kb2 = jax.random.split(key, 5)

    x = jax.random.normal(kx, (B, C, H, W), dtype=jnp.float32)

    # Deterministic PyTorch Conv2d-style uniform init: U(-1/sqrt(fan_in), ...).
    fan_in = C * 3 * 3
    bound = 1.0 / (fan_in ** 0.5)
    w1 = jax.random.uniform(kw1, (3, 3, C, C), jnp.float32, -bound, bound)
    b1 = jax.random.uniform(kb1, (C,), jnp.float32, -bound, bound)
    w2 = jax.random.uniform(kw2, (3, 3, C, C), jnp.float32, -bound, bound)
    b2 = jax.random.uniform(kb2, (C,), jnp.float32, -bound, bound)

    ref = jax.block_until_ready(residual_block_ref(x, w1, b1, w2, b2))

    # f32 path (exercises the Wpad > W+2 junk-column branch: W=16 -> Wpad=24).
    out = jax.block_until_ready(residual_block(x, w1, b1, w2, b2))
    assert out.shape == (B, C, H, W)
    assert jnp.allclose(out, ref, atol=1e-5, rtol=1e-5), "f32 mismatch vs reference"

    # Odd sizes + Wpad == W+2 branch (W=14 -> Wpad=16), grid of one.
    x2 = jax.random.normal(kx, (1, 3, 10, 14), dtype=jnp.float32)
    fan2 = 3 * 9
    bnd2 = 1.0 / fan2 ** 0.5
    w1b = jax.random.uniform(kw1, (3, 3, 3, 3), jnp.float32, -bnd2, bnd2)
    b1b = jax.random.uniform(kb1, (3,), jnp.float32, -bnd2, bnd2)
    w2b = jax.random.uniform(kw2, (3, 3, 3, 3), jnp.float32, -bnd2, bnd2)
    b2b = jax.random.uniform(kb2, (3,), jnp.float32, -bnd2, bnd2)
    ref2 = residual_block_ref(x2, w1b, b1b, w2b, b2b)
    out2 = jax.block_until_ready(residual_block(x2, w1b, b1b, w2b, b2b))
    assert jnp.allclose(out2, ref2, atol=1e-5, rtol=1e-5), "odd-shape mismatch"

    # bf16 production path (bf16 storage/MXU inputs, f32 accumulation): loose tol.
    out_bf = jax.block_until_ready(
        residual_block(x, w1, b1, w2, b2, compute_dtype=jnp.bfloat16))
    assert out_bf.shape == (B, C, H, W)
    max_err = float(jnp.max(jnp.abs(out_bf.astype(jnp.float32) - ref)))
    assert max_err < 0.25, f"bf16 path error too large: {max_err}"

    print("KERNEL_OK")
</pallas_src>

<mosaic_0001>
module attributes {stable_mosaic.version = 11 : i64} {
  func.func @kernel(%arg0: i32, %arg1: memref<1x16x16x4xf32, #tpu.memory_space<vmem>>, %arg2: memref<36x4xf32, #tpu.memory_space<vmem>>, %arg3: memref<1x4xf32, #tpu.memory_space<vmem>>, %arg4: memref<36x4xf32, #tpu.memory_space<vmem>>, %arg5: memref<1x4xf32, #tpu.memory_space<vmem>>, %arg6: memref<1x16x16x4xf32, #tpu.memory_space<vmem>>, %arg7: memref<19x24x4xf32, #tpu.memory_space<vmem>>, %arg8: memref<384x36xf32, #tpu.memory_space<vmem>>) attributes {dimension_semantics = [#tpu.dimension_semantics<parallel>], iteration_bounds = array<i64: 2>, scalar_prefetch = 0 : i64, scratch_operands = 2 : i64, tpu.core_type = #tpu.core_type<tc>, window_params = [{transform_indices = @transform_0, window_bounds = array<i64: 1, 16, 16, 4>}, {pipeline_mode = #tpu.pipeline_mode<synchronous>, transform_indices = @transform_1, window_bounds = array<i64: 36, 4>}, {pipeline_mode = #tpu.pipeline_mode<synchronous>, transform_indices = @transform_2, window_bounds = array<i64: 1, 4>}, {pipeline_mode = #tpu.pipeline_mode<synchronous>, transform_indices = @transform_3, window_bounds = array<i64: 36, 4>}, {pipeline_mode = #tpu.pipeline_mode<synchronous>, transform_indices = @transform_4, window_bounds = array<i64: 1, 4>}, {transform_indices = @transform_5, window_bounds = array<i64: 1, 16, 16, 4>}]} {
    %c0 = arith.constant 0 : index
    %c0_0 = arith.constant 0 : index
    %c0_1 = arith.constant 0 : index
    %c0_2 = arith.constant 0 : index
    %0 = vector.load %arg1[%c0, %c0_0, %c0_1, %c0_2] : memref<1x16x16x4xf32, #tpu.memory_space<vmem>>, vector<1x16x16x4xf32>
    %1 = vector.shape_cast %0 : vector<1x16x16x4xf32> to vector<16x16x4xf32>
    %cst = arith.constant 0.000000e+00 : f32
    %2 = vector.broadcast %cst : f32 to vector<1x24x4xf32>
    %c18 = arith.constant 18 : index
    %c0_3 = arith.constant 0 : index
    %c0_4 = arith.constant 0 : index
    %3 = vector.load %arg7[%c18, %c0_3, %c0_4] : memref<19x24x4xf32, #tpu.memory_space<vmem>>, vector<1x24x4xf32>
    tpu.vector_store %arg7[%c18, %c0_3, %c0_4], %2 {strides = array<i32>} : memref<19x24x4xf32, #tpu.memory_space<vmem>>, vector<1x24x4xf32>,
    %cst_5 = arith.constant 0.000000e+00 : f32
    %4 = vector.broadcast %cst_5 : f32 to vector<18x6x4xf32>
    %c0_6 = arith.constant 0 : index
    %c18_7 = arith.constant 18 : index
    %c0_8 = arith.constant 0 : index
    %5 = vector.load %arg7[%c0_6, %c18_7, %c0_8] : memref<19x24x4xf32, #tpu.memory_space<vmem>>, vector<18x6x4xf32>
    tpu.vector_store %arg7[%c0_6, %c18_7, %c0_8], %4 {strides = array<i32>} : memref<19x24x4xf32, #tpu.memory_space<vmem>>, vector<18x6x4xf32>,
    %c0_9 = arith.constant 0 : index
    %c0_10 = arith.constant 0 : index
    %6 = vector.load %arg2[%c0_9, %c0_10] : memref<36x4xf32, #tpu.memory_space<vmem>>, vector<36x4xf32>
    %c0_11 = arith.constant 0 : index
    %c0_12 = arith.constant 0 : index
    %7 = vector.load %arg4[%c0_11, %c0_12] : memref<36x4xf32, #tpu.memory_space<vmem>>, vector<36x4xf32>
    %c0_13 = arith.constant 0 : index
    %c0_14 = arith.constant 0 : index
    %8 = vector.load %arg3[%c0_13, %c0_14] : memref<1x4xf32, #tpu.memory_space<vmem>>, vector<1x4xf32>
    %c0_15 = arith.constant 0 : index
    %c0_16 = arith.constant 0 : index
    %9 = vector.load %arg5[%c0_15, %c0_16] : memref<1x4xf32, #tpu.memory_space<vmem>>, vector<1x4xf32>
    %c1 = arith.constant 1 : index
    %c1_17 = arith.constant 1 : index
    %c0_18 = arith.constant 0 : index
    %10 = vector.load %arg7[%c1, %c1_17, %c0_18] : memref<19x24x4xf32, #tpu.memory_space<vmem>>, vector<16x16x4xf32>
    tpu.vector_store %arg7[%c1, %c1_17, %c0_18], %1 {strides = array<i32>} : memref<19x24x4xf32, #tpu.memory_space<vmem>>, vector<16x16x4xf32>,
    %11 = vector.extract_strided_slice %1 {offsets = [0, 1, 0], sizes = [16, 1, 4], strides = [1, 1, 1]} : vector<16x16x4xf32> to vector<16x1x4xf32>
    %c1_19 = arith.constant 1 : index
    %c0_20 = arith.constant 0 : index
    %c0_21 = arith.constant 0 : index
    %12 = vector.load %arg7[%c1_19, %c0_20, %c0_21] : memref<19x24x4xf32, #tpu.memory_space<vmem>>, vector<16x1x4xf32>
    tpu.vector_store %arg7[%c1_19, %c0_20, %c0_21], %11 {strides = array<i32>} : memref<19x24x4xf32, #tpu.memory_space<vmem>>, vector<16x1x4xf32>,
    %13 = vector.extract_strided_slice %1 {offsets = [0, 14, 0], sizes = [16, 1, 4], strides = [1, 1, 1]} : vector<16x16x4xf32> to vector<16x1x4xf32>
    %c1_22 = arith.constant 1 : index
    %c17 = arith.constant 17 : index
    %c0_23 = arith.constant 0 : index
    %14 = vector.load %arg7[%c1_22, %c17, %c0_23] : memref<19x24x4xf32, #tpu.memory_space<vmem>>, vector<16x1x4xf32>
    tpu.vector_store %arg7[%c1_22, %c17, %c0_23], %13 {strides = array<i32>} : memref<19x24x4xf32, #tpu.memory_space<vmem>>, vector<16x1x4xf32>,
    %c2 = arith.constant 2 : index
    %c0_24 = arith.constant 0 : index
    %c0_25 = arith.constant 0 : index
    %15 = vector.load %arg7[%c2, %c0_24, %c0_25] : memref<19x24x4xf32, #tpu.memory_space<vmem>>, vector<1x24x4xf32>
    %c0_26 = arith.constant 0 : index
    %c0_27 = arith.constant 0 : index
    %c0_28 = arith.constant 0 : index
    %16 = vector.load %arg7[%c0_26, %c0_27, %c0_28] : memref<19x24x4xf32, #tpu.memory_space<vmem>>, vector<1x24x4xf32>
    tpu.vector_store %arg7[%c0_26, %c0_27, %c0_28], %15 {strides = array<i32>} : memref<19x24x4xf32, #tpu.memory_space<vmem>>, vector<1x24x4xf32>,
    %c15 = arith.constant 15 : index
    %c0_29 = arith.constant 0 : index
    %c0_30 = arith.constant 0 : index
    %17 = vector.load %arg7[%c15, %c0_29, %c0_30] : memref<19x24x4xf32, #tpu.memory_space<vmem>>, vector<1x24x4xf32>
    %c17_31 = arith.constant 17 : index
    %c0_32 = arith.constant 0 : index
    %c0_33 = arith.constant 0 : index
    %18 = vector.load %arg7[%c17_31, %c0_32, %c0_33] : memref<19x24x4xf32, #tpu.memory_space<vmem>>, vector<1x24x4xf32>
    tpu.vector_store %arg7[%c17_31, %c0_32, %c0_33], %17 {strides = array<i32>} : memref<19x24x4xf32, #tpu.memory_space<vmem>>, vector<1x24x4xf32>,
    %c0_34 = arith.constant 0 : index
    %c0_35 = arith.constant 0 : index
    %c0_36 = arith.constant 0 : index
    %19 = vector.load %arg7[%c0_34, %c0_35, %c0_36] : memref<19x24x4xf32, #tpu.memory_space<vmem>>, vector<19x24x4xf32>
    %20 = vector.shape_cast %19 : vector<19x24x4xf32> to vector<456x4xf32>
    %21 = vector.extract_strided_slice %20 {offsets = [0, 0], sizes = [384, 4], strides = [1, 1]} : vector<456x4xf32> to vector<384x4xf32>
    %c0_37 = arith.constant 0 : index
    %c0_38 = arith.constant 0 : index
    %22 = vector.load %arg8[%c0_37, %c0_38] : memref<384x36xf32, #tpu.memory_space<vmem>>, vector<384x4xf32>
    tpu.vector_store %arg8[%c0_37, %c0_38], %21 {strides = array<i32>} : memref<384x36xf32, #tpu.memory_space<vmem>>, vector<384x4xf32>,
    %23 = vector.extract_strided_slice %20 {offsets = [1, 0], sizes = [384, 4], strides = [1, 1]} : vector<456x4xf32> to vector<384x4xf32>
    %c0_39 = arith.constant 0 : index
    %c4 = arith.constant 4 : index
    %24 = vector.load %arg8[%c0_39, %c4] : memref<384x36xf32, #tpu.memory_space<vmem>>, vector<384x4xf32>
    tpu.vector_store %arg8[%c0_39, %c4], %23 {strides = array<i32>} : memref<384x36xf32, #tpu.memory_space<vmem>>, vector<384x4xf32>,
    %25 = vector.extract_strided_slice %20 {offsets = [2, 0], sizes = [384, 4], strides = [1, 1]} : vector<456x4xf32> to vector<384x4xf32>
    %c0_40 = arith.constant 0 : index
    %c8 = arith.constant 8 : index
    %26 = vector.load %arg8[%c0_40, %c8] : memref<384x36xf32, #tpu.memory_space<vmem>>, vector<384x4xf32>
    tpu.vector_store %arg8[%c0_40, %c8], %25 {strides = array<i32>} : memref<384x36xf32, #tpu.memory_space<vmem>>, vector<384x4xf32>,
    %27 = vector.extract_strided_slice %20 {offsets = [24, 0], sizes = [384, 4], strides = [1, 1]} : vector<456x4xf32> to vector<384x4xf32>
    %c0_41 = arith.constant 0 : index
    %c12 = arith.constant 12 : index
    %28 = vector.load %arg8[%c0_41, %c12] : memref<384x36xf32, #tpu.memory_space<vmem>>, vector<384x4xf32>
    tpu.vector_store %arg8[%c0_41, %c12], %27 {strides = array<i32>} : memref<384x36xf32, #tpu.memory_space<vmem>>, vector<384x4xf32>,
    %29 = vector.extract_strided_slice %20 {offsets = [25, 0], sizes = [384, 4], strides = [1, 1]} : vector<456x4xf32> to vector<384x4xf32>
    %c0_42 = arith.constant 0 : index
    %c16 = arith.constant 16 : index
    %30 = vector.load %arg8[%c0_42, %c16] : memref<384x36xf32, #tpu.memory_space<vmem>>, vector<384x4xf32>
    tpu.vector_store %arg8[%c0_42, %c16], %29 {strides = array<i32>} : memref<384x36xf32, #tpu.memory_space<vmem>>, vector<384x4xf32>,
    %31 = vector.extract_strided_slice %20 {offsets = [26, 0], sizes = [384, 4], strides = [1, 1]} : vector<456x4xf32> to vector<384x4xf32>
    %c0_43 = arith.constant 0 : index
    %c20 = arith.constant 20 : index
    %32 = vector.load %arg8[%c0_43, %c20] : memref<384x36xf32, #tpu.memory_space<vmem>>, vector<384x4xf32>
    tpu.vector_store %arg8[%c0_43, %c20], %31 {strides = array<i32>} : memref<384x36xf32, #tpu.memory_space<vmem>>, vector<384x4xf32>,
    %33 = vector.extract_strided_slice %20 {offsets = [48, 0], sizes = [384, 4], strides = [1, 1]} : vector<456x4xf32> to vector<384x4xf32>
    %c0_44 = arith.constant 0 : index
    %c24 = arith.constant 24 : index
    %34 = vector.load %arg8[%c0_44, %c24] : memref<384x36xf32, #tpu.memory_space<vmem>>, vector<384x4xf32>
    tpu.vector_store %arg8[%c0_44, %c24], %33 {strides = array<i32>} : memref<384x36xf32, #tpu.memory_space<vmem>>, vector<384x4xf32>,
    %35 = vector.extract_strided_slice %20 {offsets = [49, 0], sizes = [384, 4], strides = [1, 1]} : vector<456x4xf32> to vector<384x4xf32>
    %c0_45 = arith.constant 0 : index
    %c28 = arith.constant 28 : index
    %36 = vector.load %arg8[%c0_45, %c28] : memref<384x36xf32, #tpu.memory_space<vmem>>, vector<384x4xf32>
    tpu.vector_store %arg8[%c0_45, %c28], %35 {strides = array<i32>} : memref<384x36xf32, #tpu.memory_space<vmem>>, vector<384x4xf32>,
    %37 = vector.extract_strided_slice %20 {offsets = [50, 0], sizes = [384, 4], strides = [1, 1]} : vector<456x4xf32> to vector<384x4xf32>
    %c0_46 = arith.constant 0 : index
    %c32 = arith.constant 32 : index
    %38 = vector.load %arg8[%c0_46, %c32] : memref<384x36xf32, #tpu.memory_space<vmem>>, vector<384x4xf32>
    tpu.vector_store %arg8[%c0_46, %c32], %37 {strides = array<i32>} : memref<384x36xf32, #tpu.memory_space<vmem>>, vector<384x4xf32>,
    %c0_47 = arith.constant 0 : index
    %c0_48 = arith.constant 0 : index
    %39 = vector.load %arg8[%c0_47, %c0_48] : memref<384x36xf32, #tpu.memory_space<vmem>>, vector<384x36xf32>
    %cst_49 = arith.constant dense<0.000000e+00> : vector<384x4xf32>
    %40 = tpu.matmul %39, %6, %cst_49 {dimension_numbers = #tpu.dot_dimension_numbers<[1], [0], [0], [1], [0, 0, 1, 1], [], []>} : vector<384x36xf32>, vector<36x4xf32>, vector<384x4xf32> -> vector<384x4xf32>
    %41 = vector.broadcast %8 : vector<1x4xf32> to vector<384x4xf32>
    %42 = arith.addf %40, %41 : vector<384x4xf32>
    %cst_50 = arith.constant 0.000000e+00 : f32
    %43 = vector.broadcast %cst_50 : f32 to vector<384x4xf32>
    %44 = arith.maximumf %42, %43 : vector<384x4xf32>
    %45 = vector.shape_cast %44 : vector<384x4xf32> to vector<16x24x4xf32>
    %46 = vector.extract_strided_slice %45 {offsets = [0, 0, 0], sizes = [16, 16, 4], strides = [1, 1, 1]} : vector<16x24x4xf32> to vector<16x16x4xf32>
    %c1_51 = arith.constant 1 : index
    %c1_52 = arith.constant 1 : index
    %c0_53 = arith.constant 0 : index
    %47 = vector.load %arg7[%c1_51, %c1_52, %c0_53] : memref<19x24x4xf32, #tpu.memory_space<vmem>>, vector<16x16x4xf32>
    tpu.vector_store %arg7[%c1_51, %c1_52, %c0_53], %46 {strides = array<i32>} : memref<19x24x4xf32, #tpu.memory_space<vmem>>, vector<16x16x4xf32>,
    %48 = vector.extract_strided_slice %46 {offsets = [0, 1, 0], sizes = [16, 1, 4], strides = [1, 1, 1]} : vector<16x16x4xf32> to vector<16x1x4xf32>
    %c1_54 = arith.constant 1 : index
    %c0_55 = arith.constant 0 : index
    %c0_56 = arith.constant 0 : index
    %49 = vector.load %arg7[%c1_54, %c0_55, %c0_56] : memref<19x24x4xf32, #tpu.memory_space<vmem>>, vector<16x1x4xf32>
    tpu.vector_store %arg7[%c1_54, %c0_55, %c0_56], %48 {strides = array<i32>} : memref<19x24x4xf32, #tpu.memory_space<vmem>>, vector<16x1x4xf32>,
    %50 = vector.extract_strided_slice %46 {offsets = [0, 14, 0], sizes = [16, 1, 4], strides = [1, 1, 1]} : vector<16x16x4xf32> to vector<16x1x4xf32>
    %c1_57 = arith.constant 1 : index
    %c17_58 = arith.constant 17 : index
    %c0_59 = arith.constant 0 : index
    %51 = vector.load %arg7[%c1_57, %c17_58, %c0_59] : memref<19x24x4xf32, #tpu.memory_space<vmem>>, vector<16x1x4xf32>
    tpu.vector_store %arg7[%c1_57, %c17_58, %c0_59], %50 {strides = array<i32>} : memref<19x24x4xf32, #tpu.memory_space<vmem>>, vector<16x1x4xf32>,
    %c2_60 = arith.constant 2 : index
    %c0_61 = arith.constant 0 : index
    %c0_62 = arith.constant 0 : index
    %52 = vector.load %arg7[%c2_60, %c0_61, %c0_62] : memref<19x24x4xf32, #tpu.memory_space<vmem>>, vector<1x24x4xf32>
    %c0_63 = arith.constant 0 : index
    %c0_64 = arith.constant 0 : index
    %c0_65 = arith.constant 0 : index
    %53 = vector.load %arg7[%c0_63, %c0_64, %c0_65] : memref<19x24x4xf32, #tpu.memory_space<vmem>>, vector<1x24x4xf32>
    tpu.vector_store %arg7[%c0_63, %c0_64, %c0_65], %52 {strides = array<i32>} : memref<19x24x4xf32, #tpu.memory_space<vmem>>, vector<1x24x4xf32>,
    %c15_66 = arith.constant 15 : index
    %c0_67 = arith.constant 0 : index
    %c0_68 = arith.constant 0 : index
    %54 = vector.load %arg7[%c15_66, %c0_67, %c0_68] : memref<19x24x4xf32, #tpu.memory_space<vmem>>, vector<1x24x4xf32>
    %c17_69 = arith.constant 17 : index
    %c0_70 = arith.constant 0 : index
    %c0_71 = arith.constant 0 : index
    %55 = vector.load %arg7[%c17_69, %c0_70, %c0_71] : memref<19x24x4xf32, #tpu.memory_space<vmem>>, vector<1x24x4xf32>
    tpu.vector_store %arg7[%c17_69, %c0_70, %c0_71], %54 {strides = array<i32>} : memref<19x24x4xf32, #tpu.memory_space<vmem>>, vector<1x24x4xf32>,
    %c0_72 = arith.constant 0 : index
    %c0_73 = arith.constant 0 : index
    %c0_74 = arith.constant 0 : index
    %56 = vector.load %arg7[%c0_72, %c0_73, %c0_74] : memref<19x24x4xf32, #tpu.memory_space<vmem>>, vector<19x24x4xf32>
    %57 = vector.shape_cast %56 : vector<19x24x4xf32> to vector<456x4xf32>
    %58 = vector.extract_strided_slice %57 {offsets = [0, 0], sizes = [384, 4], strides = [1, 1]} : vector<456x4xf32> to vector<384x4xf32>
    %c0_75 = arith.constant 0 : index
    %c0_76 = arith.constant 0 : index
    %59 = vector.load %arg8[%c0_75, %c0_76] : memref<384x36xf32, #tpu.memory_space<vmem>>, vector<384x4xf32>
    tpu.vector_store %arg8[%c0_75, %c0_76], %58 {strides = array<i32>} : memref<384x36xf32, #tpu.memory_space<vmem>>, vector<384x4xf32>,
    %60 = vector.extract_strided_slice %57 {offsets = [1, 0], sizes = [384, 4], strides = [1, 1]} : vector<456x4xf32> to vector<384x4xf32>
    %c0_77 = arith.constant 0 : index
    %c4_78 = arith.constant 4 : index
    %61 = vector.load %arg8[%c0_77, %c4_78] : memref<384x36xf32, #tpu.memory_space<vmem>>, vector<384x4xf32>
    tpu.vector_store %arg8[%c0_77, %c4_78], %60 {strides = array<i32>} : memref<384x36xf32, #tpu.memory_space<vmem>>, vector<384x4xf32>,
    %62 = vector.extract_strided_slice %57 {offsets = [2, 0], sizes = [384, 4], strides = [1, 1]} : vector<456x4xf32> to vector<384x4xf32>
    %c0_79 = arith.constant 0 : index
    %c8_80 = arith.constant 8 : index
    %63 = vector.load %arg8[%c0_79, %c8_80] : memref<384x36xf32, #tpu.memory_space<vmem>>, vector<384x4xf32>
    tpu.vector_store %arg8[%c0_79, %c8_80], %62 {strides = array<i32>} : memref<384x36xf32, #tpu.memory_space<vmem>>, vector<384x4xf32>,
    %64 = vector.extract_strided_slice %57 {offsets = [24, 0], sizes = [384, 4], strides = [1, 1]} : vector<456x4xf32> to vector<384x4xf32>
    %c0_81 = arith.constant 0 : index
    %c12_82 = arith.constant 12 : index
    %65 = vector.load %arg8[%c0_81, %c12_82] : memref<384x36xf32, #tpu.memory_space<vmem>>, vector<384x4xf32>
    tpu.vector_store %arg8[%c0_81, %c12_82], %64 {strides = array<i32>} : memref<384x36xf32, #tpu.memory_space<vmem>>, vector<384x4xf32>,
    %66 = vector.extract_strided_slice %57 {offsets = [25, 0], sizes = [384, 4], strides = [1, 1]} : vector<456x4xf32> to vector<384x4xf32>
    %c0_83 = arith.constant 0 : index
    %c16_84 = arith.constant 16 : index
    %67 = vector.load %arg8[%c0_83, %c16_84] : memref<384x36xf32, #tpu.memory_space<vmem>>, vector<384x4xf32>
    tpu.vector_store %arg8[%c0_83, %c16_84], %66 {strides = array<i32>} : memref<384x36xf32, #tpu.memory_space<vmem>>, vector<384x4xf32>,
    %68 = vector.extract_strided_slice %57 {offsets = [26, 0], sizes = [384, 4], strides = [1, 1]} : vector<456x4xf32> to vector<384x4xf32>
    %c0_85 = arith.constant 0 : index
    %c20_86 = arith.constant 20 : index
    %69 = vector.load %arg8[%c0_85, %c20_86] : memref<384x36xf32, #tpu.memory_space<vmem>>, vector<384x4xf32>
    tpu.vector_store %arg8[%c0_85, %c20_86], %68 {strides = array<i32>} : memref<384x36xf32, #tpu.memory_space<vmem>>, vector<384x4xf32>,
    %70 = vector.extract_strided_slice %57 {offsets = [48, 0], sizes = [384, 4], strides = [1, 1]} : vector<456x4xf32> to vector<384x4xf32>
    %c0_87 = arith.constant 0 : index
    %c24_88 = arith.constant 24 : index
    %71 = vector.load %arg8[%c0_87, %c24_88] : memref<384x36xf32, #tpu.memory_space<vmem>>, vector<384x4xf32>
    tpu.vector_store %arg8[%c0_87, %c24_88], %70 {strides = array<i32>} : memref<384x36xf32, #tpu.memory_space<vmem>>, vector<384x4xf32>,
    %72 = vector.extract_strided_slice %57 {offsets = [49, 0], sizes = [384, 4], strides = [1, 1]} : vector<456x4xf32> to vector<384x4xf32>
    %c0_89 = arith.constant 0 : index
    %c28_90 = arith.constant 28 : index
    %73 = vector.load %arg8[%c0_89, %c28_90] : memref<384x36xf32, #tpu.memory_space<vmem>>, vector<384x4xf32>
    tpu.vector_store %arg8[%c0_89, %c28_90], %72 {strides = array<i32>} : memref<384x36xf32, #tpu.memory_space<vmem>>, vector<384x4xf32>,
    %74 = vector.extract_strided_slice %57 {offsets = [50, 0], sizes = [384, 4], strides = [1, 1]} : vector<456x4xf32> to vector<384x4xf32>
    %c0_91 = arith.constant 0 : index
    %c32_92 = arith.constant 32 : index
    %75 = vector.load %arg8[%c0_91, %c32_92] : memref<384x36xf32, #tpu.memory_space<vmem>>, vector<384x4xf32>
    tpu.vector_store %arg8[%c0_91, %c32_92], %74 {strides = array<i32>} : memref<384x36xf32, #tpu.memory_space<vmem>>, vector<384x4xf32>,
    %c0_93 = arith.constant 0 : index
    %c0_94 = arith.constant 0 : index
    %76 = vector.load %arg8[%c0_93, %c0_94] : memref<384x36xf32, #tpu.memory_space<vmem>>, vector<384x36xf32>
    %cst_95 = arith.constant dense<0.000000e+00> : vector<384x4xf32>
    %77 = tpu.matmul %76, %7, %cst_95 {dimension_numbers = #tpu.dot_dimension_numbers<[1], [0], [0], [1], [0, 0, 1, 1], [], []>} : vector<384x36xf32>, vector<36x4xf32>, vector<384x4xf32> -> vector<384x4xf32>
    %78 = vector.broadcast %9 : vector<1x4xf32> to vector<384x4xf32>
    %79 = arith.addf %77, %78 : vector<384x4xf32>
    %80 = vector.shape_cast %79 : vector<384x4xf32> to vector<16x24x4xf32>
    %81 = vector.extract_strided_slice %80 {offsets = [0, 0, 0], sizes = [16, 16, 4], strides = [1, 1, 1]} : vector<16x24x4xf32> to vector<16x16x4xf32>
    %82 = arith.addf %81, %1 : vector<16x16x4xf32>
    %cst_96 = arith.constant 0.000000e+00 : f32
    %83 = vector.broadcast %cst_96 : f32 to vector<16x16x4xf32>
    %84 = arith.maximumf %82, %83 : vector<16x16x4xf32>
    %c0_97 = arith.constant 0 : index
    %c0_98 = arith.constant 0 : index
    %c0_99 = arith.constant 0 : index
    %c0_100 = arith.constant 0 : index
    %85 = vector.load %arg6[%c0_97, %c0_98, %c0_99, %c0_100] : memref<1x16x16x4xf32, #tpu.memory_space<vmem>>, vector<1x16x16x4xf32>
    %86 = vector.shape_cast %85 : vector<1x16x16x4xf32> to vector<16x16x4xf32>
    %87 = vector.shape_cast %84 : vector<16x16x4xf32> to vector<1x16x16x4xf32>
    tpu.vector_store %arg6[%c0_97, %c0_98, %c0_99, %c0_100], %87 {strides = array<i32>} : memref<1x16x16x4xf32, #tpu.memory_space<vmem>>, vector<1x16x16x4xf32>,
    return
  }
  func.func @transform_0(%arg0: i32) -> (i32, i32, i32, i32) {
    %c0_i32 = arith.constant 0 : i32
    %c0_i32_0 = arith.constant 0 : i32
    %c0_i32_1 = arith.constant 0 : i32
    %c0_i32_2 = arith.constant 0 : i32
    return %arg0, %c0_i32, %c0_i32_0, %c0_i32_1 : i32, i32, i32, i32
  }
  func.func @transform_1(%arg0: i32) -> (i32, i32) {
    %c0_i32 = arith.constant 0 : i32
    %c0_i32_0 = arith.constant 0 : i32
    %c0_i32_1 = arith.constant 0 : i32
    return %c0_i32, %c0_i32_0 : i32, i32
  }
  func.func @transform_2(%arg0: i32) -> (i32, i32) {
    %c0_i32 = arith.constant 0 : i32
    %c0_i32_0 = arith.constant 0 : i32
    %c0_i32_1 = arith.constant 0 : i32
    return %c0_i32, %c0_i32_0 : i32, i32
  }
  func.func @transform_3(%arg0: i32) -> (i32, i32) {
    %c0_i32 = arith.constant 0 : i32
    %c0_i32_0 = arith.constant 0 : i32
    %c0_i32_1 = arith.constant 0 : i32
    return %c0_i32, %c0_i32_0 : i32, i32
  }
  func.func @transform_4(%arg0: i32) -> (i32, i32) {
    %c0_i32 = arith.constant 0 : i32
    %c0_i32_0 = arith.constant 0 : i32
    %c0_i32_1 = arith.constant 0 : i32
    return %c0_i32, %c0_i32_0 : i32, i32
  }
  func.func @transform_5(%arg0: i32) -> (i32, i32, i32, i32) {
    %c0_i32 = arith.constant 0 : i32
    %c0_i32_0 = arith.constant 0 : i32
    %c0_i32_1 = arith.constant 0 : i32
    %c0_i32_2 = arith.constant 0 : i32
    return %arg0, %c0_i32, %c0_i32_0, %c0_i32_1 : i32, i32, i32, i32
  }
}

</mosaic_0001>

<llo_original>
// kernel: residual_block.1
$region0: #{residual_block.1}
  #allocation0 [shape = 'u32[]', space=smem, size = 0x4, offset = 0x4, fixed_abs, tag = 'smem constant byte address 0x4 - core index']
  #allocation1 [shape = 'u32[144,128]{1,0:T(1,128)}', space=vmem, size = 0x12000, scoped, tag = 'internal scratch']
  #allocation2 [shape = 'f32[19,24,4]{2,1,0:T(8,128)}', space=vmem, size = 0x39000, scoped, tag = 'scratch operand']
  #allocation3 [shape = 'f32[384,36]{1,0:T(8,128)}', space=vmem, size = 0x30000, scoped, tag = 'scratch operand']
  %s0 = inlined_call_operand.vmem [shape: f32[2,16,16,4], index: 0, kind: input, shape index: {}]
  %s1 = inlined_call_operand.vmem [shape: f32[36,4], index: 1, kind: input, shape index: {}]
  %s2 = inlined_call_operand.vmem [shape: f32[1,4], index: 2, kind: input, shape index: {}]
  %s3 = inlined_call_operand.vmem [shape: f32[36,4], index: 3, kind: input, shape index: {}]
  %s4 = inlined_call_operand.vmem [shape: f32[1,4], index: 4, kind: input, shape index: {}]
  %s5 = inlined_call_operand.vmem [shape: f32[2,16,16,4], index: 5, kind: output, shape index: {}]
  %s6 = sld [smem:[#allocation0]]
  $region53: #{residual_block.1} parent=0
    _
  %s8 = ssub.s32 1, %s6
  %s9 = scalar_select 0, %s8, %s6
  loop: start=0, step=1, limit=4
  $region2: #{residual_block.1} parent=0 // loop_pre_header
    _
  $region3: #{residual_block.1} parent=0 // loop_header
    %s11 = sphi 0, %s15
    %p12 = scmp.ge.s32.totalorder %s11, 4
    %s21 = sphi 0, %s23
    %s24 = sphi 0, %s21
    %s25 = sphi 0, %s24
    %s41 = sphi 0, %s25
    %s45 = sphi 0, %s45
    %s47 = sphi 0, %s45
    %s48 = sphi 0, %s47
    %s62 = sphi 0, %s48
    %s66 = sphi 0, %s66
    %s68 = sphi 0, %s66
    %s69 = sphi 0, %s68
    %s83 = sphi 0, %s69
    %s87 = sphi 0, %s87
    %s89 = sphi 0, %s87
    %s90 = sphi 0, %s89
    %s104 = sphi 0, %s90
    %s108 = sphi 0, %s108
    %s110 = sphi 0, %s108
    %s111 = sphi 0, %s110
    %s125 = sphi 0, %s111
    %s131 = sphi 0, %s133
    %s134 = sphi 0, %s131
    %s135 = sphi 0, %s134
    %s151 = sphi 0, %s135
  $region4: #{residual_block.1} parent=0 // loop_header_branch
    %14 = sbr.rel (%p12) target = $region8
  $region5: #{residual_block.1} parent=0 // loop_body
    %s16 = ssub.s32 %s11, 1
    %s17 = ssub.s32 %s11, 2
    %s18 = sadd.s32 %s11, 1
    %s19 = ssub.s32 %s11, %s18
    %p20 = scmp.eq.s32.totalorder %s19, 0
    %s22 = sadd.s32 %s21, 1
    %s23 = scalar_select %p20, %s21, %s22
    %p26 = pneg %p20
    %p27 = scmp.eq.s32.totalorder %s11, 1
    %p28 = por %p26, %p27
    %p29 = scmp.ne.s32.totalorder %s21, %s24
    %p30 = scmp.eq.s32.totalorder %s11, 0
    %p31 = por %p29, %p30
    %p32 = scmp.ne.s32.totalorder %s21, %s24
    %p33 = scmp.eq.s32.totalorder %s16, 1
    %p34 = por %p32, %p33
    %p35 = scmp.ne.s32.totalorder %s24, %s25
    %p36 = scmp.eq.s32.totalorder %s16, 0
    %p37 = por %p35, %p36
    %p38 = scmp.ne.s32.totalorder %s24, %s25
    %p39 = scmp.eq.s32.totalorder %s17, 1
    %p40 = por %p38, %p39
    %p42 = scmp.ne.s32.totalorder %s25, %s41
    %p43 = scmp.eq.s32.totalorder %s17, 0
    %p44 = por %p42, %p43
    %s46 = sadd.s32 %s45, 1
    %p49 = scmp.eq.s32.totalorder %s11, 1
    %p50 = scmp.ne.s32.totalorder %s45, %s47
    %p51 = scmp.eq.s32.totalorder %s11, 0
    %p52 = por %p50, %p51
    %p53 = scmp.ne.s32.totalorder %s45, %s47
    %p54 = scmp.eq.s32.totalorder %s16, 1
    %p55 = por %p53, %p54
    %p56 = scmp.ne.s32.totalorder %s47, %s48
    %p57 = scmp.eq.s32.totalorder %s16, 0
    %p58 = por %p56, %p57
    %p59 = scmp.ne.s32.totalorder %s47, %s48
    %p60 = scmp.eq.s32.totalorder %s17, 1
    %p61 = por %p59, %p60
    %p63 = scmp.ne.s32.totalorder %s48, %s62
    %p64 = scmp.eq.s32.totalorder %s17, 0
    %p65 = por %p63, %p64
    %s67 = sadd.s32 %s66, 1
    %p70 = scmp.eq.s32.totalorder %s11, 1
    %p71 = scmp.ne.s32.totalorder %s66, %s68
    %p72 = scmp.eq.s32.totalorder %s11, 0
    %p73 = por %p71, %p72
    %p74 = scmp.ne.s32.totalorder %s66, %s68
    %p75 = scmp.eq.s32.totalorder %s16, 1
    %p76 = por %p74, %p75
    %p77 = scmp.ne.s32.totalorder %s68, %s69
    %p78 = scmp.eq.s32.totalorder %s16, 0
    %p79 = por %p77, %p78
    %p80 = scmp.ne.s32.totalorder %s68, %s69
    %p81 = scmp.eq.s32.totalorder %s17, 1
    %p82 = por %p80, %p81
    %p84 = scmp.ne.s32.totalorder %s69, %s83
    %p85 = scmp.eq.s32.totalorder %s17, 0
    %p86 = por %p84, %p85
    %s88 = sadd.s32 %s87, 1
    %p91 = scmp.eq.s32.totalorder %s11, 1
    %p92 = scmp.ne.s32.totalorder %s87, %s89
    %p93 = scmp.eq.s32.totalorder %s11, 0
    %p94 = por %p92, %p93
    %p95 = scmp.ne.s32.totalorder %s87, %s89
    %p96 = scmp.eq.s32.totalorder %s16, 1
    %p97 = por %p95, %p96
    %p98 = scmp.ne.s32.totalorder %s89, %s90
    %p99 = scmp.eq.s32.totalorder %s16, 0
    %p100 = por %p98, %p99
    %p101 = scmp.ne.s32.totalorder %s89, %s90
    %p102 = scmp.eq.s32.totalorder %s17, 1
    %p103 = por %p101, %p102
    %p105 = scmp.ne.s32.totalorder %s90, %s104
    %p106 = scmp.eq.s32.totalorder %s17, 0
    %p107 = por %p105, %p106
    %s109 = sadd.s32 %s108, 1
    %p112 = scmp.eq.s32.totalorder %s11, 1
    %p113 = scmp.ne.s32.totalorder %s108, %s110
    %p114 = scmp.eq.s32.totalorder %s11, 0
    %p115 = por %p113, %p114
    %p116 = scmp.ne.s32.totalorder %s108, %s110
    %p117 = scmp.eq.s32.totalorder %s16, 1
    %p118 = por %p116, %p117
    %p119 = scmp.ne.s32.totalorder %s110, %s111
    %p120 = scmp.eq.s32.totalorder %s16, 0
    %p121 = por %p119, %p120
    %p122 = scmp.ne.s32.totalorder %s110, %s111
    %p123 = scmp.eq.s32.totalorder %s17, 1
    %p124 = por %p122, %p123
    %p126 = scmp.ne.s32.totalorder %s111, %s125
    %p127 = scmp.eq.s32.totalorder %s17, 0
    %p128 = por %p126, %p127
    %s129 = ssub.s32 %s11, %s18
    %p130 = scmp.eq.s32.totalorder %s129, 0
    %s132 = sadd.s32 %s131, 1
    %s133 = scalar_select %p130, %s131, %s132
    %p136 = pneg %p130
    %p137 = scmp.eq.s32.totalorder %s11, 1
    %p138 = por %p136, %p137
    %p139 = scmp.ne.s32.totalorder %s131, %s134
    %p140 = scmp.eq.s32.totalorder %s11, 0
    %p141 = por %p139, %p140
    %p142 = scmp.ne.s32.totalorder %s131, %s134
    %p143 = scmp.eq.s32.totalorder %s16, 1
    %p144 = por %p142, %p143
    %p145 = scmp.ne.s32.totalorder %s134, %s135
    %p146 = scmp.eq.s32.totalorder %s16, 0
    %p147 = por %p145, %p146
    %p148 = scmp.ne.s32.totalorder %s134, %s135
    %p149 = scmp.eq.s32.totalorder %s17, 1
    %p150 = por %p148, %p149
    %p152 = scmp.ne.s32.totalorder %s135, %s151
    %p153 = scmp.eq.s32.totalorder %s17, 0
    %p154 = por %p152, %p153
    %p155 = scmp.le.s32.totalorder 1, %s11
    %p156 = scmp.lt.s32.totalorder %s11, 3
    %p157 = pnand %p155, %p156
    %p158 = pneg %p157
    // Predicated region
    $region9: #{residual_block.1} parent=5 // pred_check
      _
    $region10: #{residual_block.1} parent=5 // pred_check_branch
      %160 = sbr.rel (%p157) target = $region12
    $region11: #{residual_block.1} parent=5 // pred_region
      %s161 = ssub.s32 %s11, 1
      // Predicated region
      $region13: #{residual_block.1} parent=11 // pred_check
        %p162 = pneg %p58
      $region14: #{residual_block.1} parent=11 // pred_check_branch
        %164 = sbr.rel (%p162) target = $region16
      $region15: #{residual_block.1} parent=11 // pred_region
        _
      $region16: #{residual_block.1} parent=11 // pred_fallthru
        _
      // Predicated region
      $region17: #{residual_block.1} parent=11 // pred_check
        %p165 = pneg %p79
      $region18: #{residual_block.1} parent=11 // pred_check_branch
        %167 = sbr.rel (%p165) target = $region20
      $region19: #{residual_block.1} parent=11 // pred_region
        _
      $region20: #{residual_block.1} parent=11 // pred_fallthru
        _
      // Predicated region
      $region21: #{residual_block.1} parent=11 // pred_check
        %p168 = pneg %p100
      $region22: #{residual_block.1} parent=11 // pred_check_branch
        %170 = sbr.rel (%p168) target = $region24
      $region23: #{residual_block.1} parent=11 // pred_region
        _
      $region24: #{residual_block.1} parent=11 // pred_fallthru
        _
      // Predicated region
      $region25: #{residual_block.1} parent=11 // pred_check
        %p171 = pneg %p121
      $region26: #{residual_block.1} parent=11 // pred_check_branch
        %173 = sbr.rel (%p171) target = $region28
      $region27: #{residual_block.1} parent=11 // pred_region
        _
      $region28: #{residual_block.1} parent=11 // pred_fallthru
        _
    $region12: #{residual_block.1} parent=5 // pred_fallthru
      _
    %p174 = scmp.lt.s32.totalorder %s11, 2
    // Predicated region
    $region29: #{residual_block.1} parent=5 // pred_check
      %p175 = pneg %p174
    $region30: #{residual_block.1} parent=5 // pred_check_branch
      %177 = sbr.rel (%p175) target = $region32
    $region31: #{residual_block.1} parent=5 // pred_region
      // Predicated region
      $region33: #{residual_block.1} parent=31 // pred_check
        %p178 = pneg %p31
      $region34: #{residual_block.1} parent=31 // pred_check_branch
        %180 = sbr.rel (%p178) target = $region36
      $region35: #{residual_block.1} parent=31 // pred_region
        %p181 = scmp.lt.s32.totalorder %s11, 1
        %s182 = scalar_select %p181, %s11, 1
        %s183 = smul.addr %s182, 32
        %s184 = smul.addr %s183, 8
        %s185 = scalar_lea.vmem %s0, %s184
      $region36: #{residual_block.1} parent=31 // pred_fallthru
        _
    $region32: #{residual_block.1} parent=5 // pred_fallthru
      _
    %p186 = scmp.le.s32.totalorder 1, %s11
    %p187 = scmp.lt.s32.totalorder %s11, 3
    %p188 = pnand %p186, %p187
    %p189 = pneg %p188
    // Predicated region
    $region37: #{residual_block.1} parent=5 // pred_check
      _
    $region38: #{residual_block.1} parent=5 // pred_check_branch
      %191 = sbr.rel (%p188) target = $region40
    $region39: #{residual_block.1} parent=5 // pred_region
      %s192 = ssub.s32 %s11, 1
      %p193 = scmp.lt.s32.totalorder %s16, 1
      %s194 = scalar_select %p193, %s16, 1
      %s195 = smul.addr %s194, 32
      %s196 = smul.addr %s195, 8
      %s197 = scalar_lea.vmem %s0, %s196
      %p198 = pneg %p37
      %p199 = pneg %p34
      %p200 = pneg %p58
      %p201 = pneg %p55
      %p202 = pneg %p79
      %p203 = pneg %p76
      %p204 = pneg %p100
      %p205 = pneg %p97
      %p206 = pneg %p121
      %p207 = pneg %p118
      %p208 = pneg %p147
      %p209 = pneg %p144
      %p210 = scmp.lt.s32.totalorder %s16, 1
      %s211 = scalar_select %p210, %s16, 1
      %s212 = smul.addr %s211, 32
      %s213 = smul.addr %s212, 8
      %s214 = scalar_lea.vmem %s5, %s213
      %p215 = scmp.lt.s32.totalorder %s16, 1
      %s216 = scalar_select %p215, %s16, 1
      %s217 = smul.addr %s216, 32
      %s218 = smul.addr %s217, 8
      %s219 = scalar_lea.vmem %s0, %s218
      %p220 = scmp.lt.s32.totalorder %s16, 1
      %s221 = scalar_select %p220, %s16, 1
      %s222 = smul.addr %s221, 32
      %s223 = smul.addr %s222, 8
      %s224 = scalar_lea.vmem %s5, %s223
      %v225 = vld [vmem:[%s219] sm:$0xff]
      %v226 = vld [vmem:[%s219 + $0x8] sm:$0xff]
      %v227 = vld [vmem:[%s219 + $0x10] sm:$0xff]
      %v228 = vld [vmem:[%s219 + $0x18] sm:$0xff]
      %v229 = vld [vmem:[%s219 + $0x20] sm:$0xff]
      %v230 = vld [vmem:[%s219 + $0x28] sm:$0xff]
      %v231 = vld [vmem:[%s219 + $0x30] sm:$0xff]
      %v232 = vld [vmem:[%s219 + $0x38] sm:$0xff]
      %v233 = vld [vmem:[%s219 + $0x40] sm:$0xff]
      %v234 = vld [vmem:[%s219 + $0x48] sm:$0xff]
      %v235 = vld [vmem:[%s219 + $0x50] sm:$0xff]
      %v236 = vld [vmem:[%s219 + $0x58] sm:$0xff]
      %v237 = vld [vmem:[%s219 + $0x60] sm:$0xff]
      %v238 = vld [vmem:[%s219 + $0x68] sm:$0xff]
      %v239 = vld [vmem:[%s219 + $0x70] sm:$0xff]
      %v240 = vld [vmem:[%s219 + $0x78] sm:$0xff]
      %v241 = vld [vmem:[%s219 + $0x80] sm:$0xff]
      %v242 = vld [vmem:[%s219 + $0x88] sm:$0xff]
      %v243 = vld [vmem:[%s219 + $0x90] sm:$0xff]
      %v244 = vld [vmem:[%s219 + $0x98] sm:$0xff]
      %v245 = vld [vmem:[%s219 + $0xa0] sm:$0xff]
      %v246 = vld [vmem:[%s219 + $0xa8] sm:$0xff]
      %v247 = vld [vmem:[%s219 + $0xb0] sm:$0xff]
      %v248 = vld [vmem:[%s219 + $0xb8] sm:$0xff]
      %v249 = vld [vmem:[%s219 + $0xc0] sm:$0xff]
      %v250 = vld [vmem:[%s219 + $0xc8] sm:$0xff]
      %v251 = vld [vmem:[%s219 + $0xd0] sm:$0xff]
      %v252 = vld [vmem:[%s219 + $0xd8] sm:$0xff]
      %v253 = vld [vmem:[%s219 + $0xe0] sm:$0xff]
      %v254 = vld [vmem:[%s219 + $0xe8] sm:$0xff]
      %v255 = vld [vmem:[%s219 + $0xf0] sm:$0xff]
      %v256 = vld [vmem:[%s219 + $0xf8] sm:$0xff]
      %s257 = scalar_lea.vmem [#allocation2], 432
      %vm258 = vcmask 31744
      %259 = vst.msk [vmem:[%s257] sm:$0xff] %vm258, 0.0
      %260 = vst.msk [vmem:[%s257 + $0x8] sm:$0xff] %vm258, 0.0
      %261 = vst.msk [vmem:[%s257 + $0x10] sm:$0xff] %vm258, 0.0
      %vm262 = vcmask 29696
      %263 = vst.msk [vmem:[#allocation2 + $0x12] sm:$0x3f] %vm262, 0.0
      %264 = vst.msk [vmem:[#allocation2 + $0x2a] sm:$0x3f] %vm262, 0.0
      %265 = vst.msk [vmem:[#allocation2 + $0x42] sm:$0x3f] %vm262, 0.0
      %266 = vst.msk [vmem:[#allocation2 + $0x5a] sm:$0x3f] %vm262, 0.0
      %267 = vst.msk [vmem:[#allocation2 + $0x72] sm:$0x3f] %vm262, 0.0
      %268 = vst.msk [vmem:[#allocation2 + $0x8a] sm:$0x3f] %vm262, 0.0
      %269 = vst.msk [vmem:[#allocation2 + $0xa2] sm:$0x3f] %vm262, 0.0
      %270 = vst.msk [vmem:[#allocation2 + $0xba] sm:$0x3f] %vm262, 0.0
      %271 = vst.msk [vmem:[#allocation2 + $0xd2] sm:$0x3f] %vm262, 0.0
      %272 = vst.msk [vmem:[#allocation2 + $0xea] sm:$0x3f] %vm262, 0.0
      %273 = vst.msk [vmem:[#allocation2 + $0x102] sm:$0x3f] %vm262, 0.0
      %274 = vst.msk [vmem:[#allocation2 + $0x11a] sm:$0x3f] %vm262, 0.0
      %275 = vst.msk [vmem:[#allocation2 + $0x132] sm:$0x3f] %vm262, 0.0
      %276 = vst.msk [vmem:[#allocation2 + $0x14a] sm:$0x3f] %vm262, 0.0
      %277 = vst.msk [vmem:[#allocation2 + $0x162] sm:$0x3f] %vm262, 0.0
      %278 = vst.msk [vmem:[#allocation2 + $0x17a] sm:$0x3f] %vm262, 0.0
      %279 = vst.msk [vmem:[#allocation2 + $0x192] sm:$0x3f] %vm262, 0.0
      %280 = vst.msk [vmem:[#allocation2 + $0x1aa] sm:$0x3f] %vm262, 0.0
      %v281 = vld [vmem:[%s1] sm:$0xff]
      %v282 = vld [vmem:[%s1 + $0x8] sm:$0xff]
      %v283 = vld [vmem:[%s1 + $0x10] sm:$0xff]
      %v284 = vld [vmem:[%s1 + $0x18] sm:$0xff]
      %v285 = vld [vmem:[%s1 + $0x20] sm:$0xf]
      %v286 = vld [vmem:[%s3] sm:$0xff]
      %v287 = vld [vmem:[%s3 + $0x8] sm:$0xff]
      %v288 = vld [vmem:[%s3 + $0x10] sm:$0xff]
      %v289 = vld [vmem:[%s3 + $0x18] sm:$0xff]
      %v290 = vld [vmem:[%s3 + $0x20] sm:$0xf]
      %v291 = vld [vmem:[%s2] sm:$0x1]
      %v292 = vld [vmem:[%s4] sm:$0x1]
      %s293 = scalar_lea.vmem [#allocation2], 24
      %294 = vst.msk [vmem:[%s293 + $0x1] sm:$0xff] %vm258, %v225
      %295 = vst.msk [vmem:[%s293 + $0x9] sm:$0xff] %vm258, %v226
      %296 = vst.msk [vmem:[%s293 + $0x19] sm:$0xff] %vm258, %v227
      %297 = vst.msk [vmem:[%s293 + $0x21] sm:$0xff] %vm258, %v228
      %298 = vst.msk [vmem:[%s293 + $0x31] sm:$0xff] %vm258, %v229
      %299 = vst.msk [vmem:[%s293 + $0x39] sm:$0xff] %vm258, %v230
      %300 = vst.msk [vmem:[%s293 + $0x49] sm:$0xff] %vm258, %v231
      %301 = vst.msk [vmem:[%s293 + $0x51] sm:$0xff] %vm258, %v232
      %302 = vst.msk [vmem:[%s293 + $0x61] sm:$0xff] %vm258, %v233
      %303 = vst.msk [vmem:[%s293 + $0x69] sm:$0xff] %vm258, %v234
      %304 = vst.msk [vmem:[%s293 + $0x79] sm:$0xff] %vm258, %v235
      %305 = vst.msk [vmem:[%s293 + $0x81] sm:$0xff] %vm258, %v236
      %306 = vst.msk [vmem:[%s293 + $0x91] sm:$0xff] %vm258, %v237
      %307 = vst.msk [vmem:[%s293 + $0x99] sm:$0xff] %vm258, %v238
      %308 = vst.msk [vmem:[%s293 + $0xa9] sm:$0xff] %vm258, %v239
      %309 = vst.msk [vmem:[%s293 + $0xb1] sm:$0xff] %vm258, %v240
      %310 = vst.msk [vmem:[%s293 + $0xc1] sm:$0xff] %vm258, %v241
      %311 = vst.msk [vmem:[%s293 + $0xc9] sm:$0xff] %vm258, %v242
      %312 = vst.msk [vmem:[%s293 + $0xd9] sm:$0xff] %vm258, %v243
      %313 = vst.msk [vmem:[%s293 + $0xe1] sm:$0xff] %vm258, %v244
      %314 = vst.msk [vmem:[%s293 + $0xf1] sm:$0xff] %vm258, %v245
      %315 = vst.msk [vmem:[%s293 + $0xf9] sm:$0xff] %vm258, %v246
      %316 = vst.msk [vmem:[%s293 + $0x109] sm:$0xff] %vm258, %v247
      %317 = vst.msk [vmem:[%s293 + $0x111] sm:$0xff] %vm258, %v248
      %318 = vst.msk [vmem:[%s293 + $0x121] sm:$0xff] %vm258, %v249
      %319 = vst.msk [vmem:[%s293 + $0x129] sm:$0xff] %vm258, %v250
      %320 = vst.msk [vmem:[%s293 + $0x139] sm:$0xff] %vm258, %v251
      %321 = vst.msk [vmem:[%s293 + $0x141] sm:$0xff] %vm258, %v252
      %322 = vst.msk [vmem:[%s293 + $0x151] sm:$0xff] %vm258, %v253
      %323 = vst.msk [vmem:[%s293 + $0x159] sm:$0xff] %vm258, %v254
      %324 = vst.msk [vmem:[%s293 + $0x169] sm:$0xff] %vm258, %v255
      %325 = vst.msk [vmem:[%s293 + $0x171] sm:$0xff] %vm258, %v256
      %vm326 = vcmask 25601
      %327 = vst.msk [vmem:[%s293 - $0x1] sm:$0x2] %vm326, %v225
      %328 = vst.msk [vmem:[%s293 + $0x17] sm:$0x2] %vm326, %v227
      %329 = vst.msk [vmem:[%s293 + $0x2f] sm:$0x2] %vm326, %v229
      %330 = vst.msk [vmem:[%s293 + $0x47] sm:$0x2] %vm326, %v231
      %331 = vst.msk [vmem:[%s293 + $0x5f] sm:$0x2] %vm326, %v233
      %332 = vst.msk [vmem:[%s293 + $0x77] sm:$0x2] %vm326, %v235
      %333 = vst.msk [vmem:[%s293 + $0x8f] sm:$0x2] %vm326, %v237
      %334 = vst.msk [vmem:[%s293 + $0xa7] sm:$0x2] %vm326, %v239
      %335 = vst.msk [vmem:[%s293 + $0xbf] sm:$0x2] %vm326, %v241
      %336 = vst.msk [vmem:[%s293 + $0xd7] sm:$0x2] %vm326, %v243
      %337 = vst.msk [vmem:[%s293 + $0xef] sm:$0x2] %vm326, %v245
      %338 = vst.msk [vmem:[%s293 + $0x107] sm:$0x2] %vm326, %v247
      %339 = vst.msk [vmem:[%s293 + $0x11f] sm:$0x2] %vm326, %v249
      %340 = vst.msk [vmem:[%s293 + $0x137] sm:$0x2] %vm326, %v251
      %341 = vst.msk [vmem:[%s293 + $0x14f] sm:$0x2] %vm326, %v253
      %342 = vst.msk [vmem:[%s293 + $0x167] sm:$0x2] %vm326, %v255
      %vm343 = vcmask 30726
      %344 = vst.msk [vmem:[%s293 + $0xb] sm:$0x40] %vm343, %v226
      %345 = vst.msk [vmem:[%s293 + $0x23] sm:$0x40] %vm343, %v228
      %346 = vst.msk [vmem:[%s293 + $0x3b] sm:$0x40] %vm343, %v230
      %347 = vst.msk [vmem:[%s293 + $0x53] sm:$0x40] %vm343, %v232
      %348 = vst.msk [vmem:[%s293 + $0x6b] sm:$0x40] %vm343, %v234
      %349 = vst.msk [vmem:[%s293 + $0x83] sm:$0x40] %vm343, %v236
      %350 = vst.msk [vmem:[%s293 + $0x9b] sm:$0x40] %vm343, %v238
      %351 = vst.msk [vmem:[%s293 + $0xb3] sm:$0x40] %vm343, %v240
      %352 = vst.msk [vmem:[%s293 + $0xcb] sm:$0x40] %vm343, %v242
      %353 = vst.msk [vmem:[%s293 + $0xe3] sm:$0x40] %vm343, %v244
      %354 = vst.msk [vmem:[%s293 + $0xfb] sm:$0x40] %vm343, %v246
      %355 = vst.msk [vmem:[%s293 + $0x113] sm:$0x40] %vm343, %v248
      %356 = vst.msk [vmem:[%s293 + $0x12b] sm:$0x40] %vm343, %v250
      %357 = vst.msk [vmem:[%s293 + $0x143] sm:$0x40] %vm343, %v252
      %358 = vst.msk [vmem:[%s293 + $0x15b] sm:$0x40] %vm343, %v254
      %359 = vst.msk [vmem:[%s293 + $0x173] sm:$0x40] %vm343, %v256
      %s360 = scalar_lea.vmem [#allocation2], 48
      %v361 = vld [vmem:[%s360] sm:$0xff]
      %v362 = vld [vmem:[%s360 + $0x8] sm:$0xff]
      %v363 = vld [vmem:[%s360 + $0x10] sm:$0xff]
      %364 = vst.msk [vmem:[#allocation2] sm:$0xff] %vm258, %v361
      %365 = vst.msk [vmem:[#allocation2 + $0x8] sm:$0xff] %vm258, %v362
      %366 = vst.msk [vmem:[#allocation2 + $0x10] sm:$0xff] %vm258, %v363
      %s367 = scalar_lea.vmem [#allocation2], 360
      %v368 = vld [vmem:[%s367] sm:$0xff]
      %v369 = vld [vmem:[%s367 + $0x8] sm:$0xff]
      %v370 = vld [vmem:[%s367 + $0x10] sm:$0xff]
      %s371 = scalar_lea.vmem [#allocation2], 408
      %372 = vst.msk [vmem:[%s371] sm:$0xff] %vm258, %v368
      %373 = vst.msk [vmem:[%s371 + $0x8] sm:$0xff] %vm258, %v369
      %374 = vst.msk [vmem:[%s371 + $0x10] sm:$0xff] %vm258, %v370
      %v375 = vld [vmem:[#allocation2] sm:$0xff]
      %v376 = vld [vmem:[#allocation2 + $0x8] sm:$0xff]
      %v377 = vld [vmem:[#allocation2 + $0x10] sm:$0xff]
      %v378 = vld [vmem:[#allocation2 + $0x18] sm:$0xff]
      %v379 = vld [vmem:[#allocation2 + $0x20] sm:$0xff]
      %v380 = vld [vmem:[#allocation2 + $0x28] sm:$0xff]
      %v381 = vld [vmem:[#allocation2 + $0x30] sm:$0xff]
      %v382 = vld [vmem:[#allocation2 + $0x38] sm:$0xff]
      %v383 = vld [vmem:[#allocation2 + $0x40] sm:$0xff]
      %v384 = vld [vmem:[#allocation2 + $0x48] sm:$0xff]
      %v385 = vld [vmem:[#allocation2 + $0x50] sm:$0xff]
      %v386 = vld [vmem:[#allocation2 + $0x58] sm:$0xff]
      %v387 = vld [vmem:[#allocation2 + $0x60] sm:$0xff]
      %v388 = vld [vmem:[#allocation2 + $0x68] sm:$0xff]
      %v389 = vld [vmem:[#allocation2 + $0x70] sm:$0xff]
      %v390 = vld [vmem:[#allocation2 + $0x78] sm:$0xff]
      %v391 = vld [vmem:[#allocation2 + $0x80] sm:$0xff]
      %v392 = vld [vmem:[#allocation2 + $0x88] sm:$0xff]
      %v393 = vld [vmem:[#allocation2 + $0x90] sm:$0xff]
      %v394 = vld [vmem:[#allocation2 + $0x98] sm:$0xff]
      %v395 = vld [vmem:[#allocation2 + $0xa0] sm:$0xff]
      %v396 = vld [vmem:[#allocation2 + $0xa8] sm:$0xff]
      %v397 = vld [vmem:[#allocation2 + $0xb0] sm:$0xff]
      %v398 = vld [vmem:[#allocation2 + $0xb8] sm:$0xff]
      %v399 = vld [vmem:[#allocation2 + $0xc0] sm:$0xff]
      %v400 = vld [vmem:[#allocation2 + $0xc8] sm:$0xff]
      %v401 = vld [vmem:[#allocation2 + $0xd0] sm:$0xff]
      %v402 = vld [vmem:[#allocation2 + $0xd8] sm:$0xff]
      %v403 = vld [vmem:[#allocation2 + $0xe0] sm:$0xff]
      %v404 = vld [vmem:[#allocation2 + $0xe8] sm:$0xff]
      %v405 = vld [vmem:[#allocation2 + $0xf0] sm:$0xff]
      %v406 = vld [vmem:[#allocation2 + $0xf8] sm:$0xff]
      %v407 = vld [vmem:[#allocation2 + $0x100] sm:$0xff]
      %v408 = vld [vmem:[#allocation2 + $0x108] sm:$0xff]
      %v409 = vld [vmem:[#allocation2 + $0x110] sm:$0xff]
      %v410 = vld [vmem:[#allocation2 + $0x118] sm:$0xff]
      %v411 = vld [vmem:[#allocation2 + $0x120] sm:$0xff]
      %v412 = vld [vmem:[#allocation2 + $0x128] sm:$0xff]
      %v413 = vld [vmem:[#allocation2 + $0x130] sm:$0xff]
      %v414 = vld [vmem:[#allocation2 + $0x138] sm:$0xff]
      %v415 = vld [vmem:[#allocation2 + $0x140] sm:$0xff]
      %v416 = vld [vmem:[#allocation2 + $0x148] sm:$0xff]
      %v417 = vld [vmem:[#allocation2 + $0x150] sm:$0xff]
      %v418 = vld [vmem:[#allocation2 + $0x158] sm:$0xff]
      %v419 = vld [vmem:[#allocation2 + $0x160] sm:$0xff]
      %v420 = vld [vmem:[#allocation2 + $0x168] sm:$0xff]
      %v421 = vld [vmem:[#allocation2 + $0x170] sm:$0xff]
      %v422 = vld [vmem:[#allocation2 + $0x178] sm:$0xff]
      %v423 = vld [vmem:[#allocation2 + $0x180] sm:$0xff]
      %v424 = vld [vmem:[#allocation2 + $0x188] sm:$0xff]
      %v425 = vld [vmem:[#allocation2 + $0x190] sm:$0xff]
      %v426 = vld [vmem:[#allocation2 + $0x198] sm:$0xff]
      %v427 = vld [vmem:[#allocation2 + $0x1a0] sm:$0xff]
      %v428 = vld [vmem:[#allocation2 + $0x1a8] sm:$0xff]
      %v429 = vld [vmem:[#allocation2 + $0x1b0] sm:$0xff]
      %430 = vst.msk [vmem:[#allocation3] sm:$0xff] %vm258, %v375
      %431 = vst.msk [vmem:[#allocation3 + $0x8] sm:$0xff] %vm258, %v376
      %432 = vst.msk [vmem:[#allocation3 + $0x10] sm:$0xff] %vm258, %v377
      %433 = vst.msk [vmem:[#allocation3 + $0x18] sm:$0xff] %vm258, %v378
      %434 = vst.msk [vmem:[#allocation3 + $0x20] sm:$0xff] %vm258, %v379
      %435 = vst.msk [vmem:[#allocation3 + $0x28] sm:$0xff] %vm258, %v380
      %436 = vst.msk [vmem:[#allocation3 + $0x30] sm:$0xff] %vm258, %v381
      %437 = vst.msk [vmem:[#allocation3 + $0x38] sm:$0xff] %vm258, %v382
      %438 = vst.msk [vmem:[#allocation3 + $0x40] sm:$0xff] %vm258, %v383
      %439 = vst.msk [vmem:[#allocation3 + $0x48] sm:$0xff] %vm258, %v384
      %440 = vst.msk [vmem:[#allocation3 + $0x50] sm:$0xff] %vm258, %v385
      %441 = vst.msk [vmem:[#allocation3 + $0x58] sm:$0xff] %vm258, %v386
      %442 = vst.msk [vmem:[#allocation3 + $0x60] sm:$0xff] %vm258, %v387
      %443 = vst.msk [vmem:[#allocation3 + $0x68] sm:$0xff] %vm258, %v388
      %444 = vst.msk [vmem:[#allocation3 + $0x70] sm:$0xff] %vm258, %v389
      %445 = vst.msk [vmem:[#allocation3 + $0x78] sm:$0xff] %vm258, %v390
      %446 = vst.msk [vmem:[#allocation3 + $0x80] sm:$0xff] %vm258, %v391
      %447 = vst.msk [vmem:[#allocation3 + $0x88] sm:$0xff] %vm258, %v392
      %448 = vst.msk [vmem:[#allocation3 + $0x90] sm:$0xff] %vm258, %v393
      %449 = vst.msk [vmem:[#allocation3 + $0x98] sm:$0xff] %vm258, %v394
      %450 = vst.msk [vmem:[#allocation3 + $0xa0] sm:$0xff] %vm258, %v395
      %451 = vst.msk [vmem:[#allocation3 + $0xa8] sm:$0xff] %vm258, %v396
      %452 = vst.msk [vmem:[#allocation3 + $0xb0] sm:$0xff] %vm258, %v397
      %453 = vst.msk [vmem:[#allocation3 + $0xb8] sm:$0xff] %vm258, %v398
      %454 = vst.msk [vmem:[#allocation3 + $0xc0] sm:$0xff] %vm258, %v399
      %455 = vst.msk [vmem:[#allocation3 + $0xc8] sm:$0xff] %vm258, %v400
      %456 = vst.msk [vmem:[#allocation3 + $0xd0] sm:$0xff] %vm258, %v401
      %457 = vst.msk [vmem:[#allocation3 + $0xd8] sm:$0xff] %vm258, %v402
      %458 = vst.msk [vmem:[#allocation3 + $0xe0] sm:$0xff] %vm258, %v403
      %459 = vst.msk [vmem:[#allocation3 + $0xe8] sm:$0xff] %vm258, %v404
      %460 = vst.msk [vmem:[#allocation3 + $0xf0] sm:$0xff] %vm258, %v405
      %461 = vst.msk [vmem:[#allocation3 + $0xf8] sm:$0xff] %vm258, %v406
      %462 = vst.msk [vmem:[#allocation3 + $0x100] sm:$0xff] %vm258, %v407
      %463 = vst.msk [vmem:[#allocation3 + $0x108] sm:$0xff] %vm258, %v408
      %464 = vst.msk [vmem:[#allocation3 + $0x110] sm:$0xff] %vm258, %v409
      %465 = vst.msk [vmem:[#allocation3 + $0x118] sm:$0xff] %vm258, %v410
      %466 = vst.msk [vmem:[#allocation3 + $0x120] sm:$0xff] %vm258, %v411
      %467 = vst.msk [vmem:[#allocation3 + $0x128] sm:$0xff] %vm258, %v412
      %468 = vst.msk [vmem:[#allocation3 + $0x130] sm:$0xff] %vm258, %v413
      %469 = vst.msk [vmem:[#allocation3 + $0x138] sm:$0xff] %vm258, %v414
      %470 = vst.msk [vmem:[#allocation3 + $0x140] sm:$0xff] %vm258, %v415
      %471 = vst.msk [vmem:[#allocation3 + $0x148] sm:$0xff] %vm258, %v416
      %472 = vst.msk [vmem:[#allocation3 + $0x150] sm:$0xff] %vm258, %v417
      %473 = vst.msk [vmem:[#allocation3 + $0x158] sm:$0xff] %vm258, %v418
      %474 = vst.msk [vmem:[#allocation3 + $0x160] sm:$0xff] %vm258, %v419
      %475 = vst.msk [vmem:[#allocation3 + $0x168] sm:$0xff] %vm258, %v420
      %476 = vst.msk [vmem:[#allocation3 + $0x170] sm:$0xff] %vm258, %v421
      %477 = vst.msk [vmem:[#allocation3 + $0x178] sm:$0xff] %vm258, %v422
      %527 = vrot.lane.b32.xlu0 %v375, 4
      %v528 = vpop.permute.xlu0 %527
      %529 = vrot.lane.b32.xlu0 %v376, 4
      %v530 = vpop.permute.xlu0 %529
      %531 = vrot.lane.b32.xlu0 %v377, 4
      %v532 = vpop.permute.xlu0 %531
      %533 = vrot.lane.b32.xlu0 %v378, 4
      %v534 = vpop.permute.xlu0 %533
      %535 = vrot.lane.b32.xlu0 %v379, 4
      %v536 = vpop.permute.xlu0 %535
      %537 = vrot.lane.b32.xlu0 %v380, 4
      %v538 = vpop.permute.xlu0 %537
      %539 = vrot.lane.b32.xlu0 %v381, 4
      %v540 = vpop.permute.xlu0 %539
      %541 = vrot.lane.b32.xlu0 %v382, 4
      %v542 = vpop.permute.xlu0 %541
      %543 = vrot.lane.b32.xlu0 %v383, 4
      %v544 = vpop.permute.xlu0 %543
      %545 = vrot.lane.b32.xlu0 %v384, 4
      %v546 = vpop.permute.xlu0 %545
      %547 = vrot.lane.b32.xlu0 %v385, 4
      %v548 = vpop.permute.xlu0 %547
      %549 = vrot.lane.b32.xlu0 %v386, 4
      %v550 = vpop.permute.xlu0 %549
      %551 = vrot.lane.b32.xlu0 %v387, 4
      %v552 = vpop.permute.xlu0 %551
      %553 = vrot.lane.b32.xlu0 %v388, 4
      %v554 = vpop.permute.xlu0 %553
      %555 = vrot.lane.b32.xlu0 %v389, 4
      %v556 = vpop.permute.xlu0 %555
      %557 = vrot.lane.b32.xlu0 %v390, 4
      %v558 = vpop.permute.xlu0 %557
      %559 = vrot.lane.b32.xlu0 %v391, 4
      %v560 = vpop.permute.xlu0 %559
      %561 = vrot.lane.b32.xlu0 %v392, 4
      %v562 = vpop.permute.xlu0 %561
      %563 = vrot.lane.b32.xlu0 %v393, 4
      %v564 = vpop.permute.xlu0 %563
      %565 = vrot.lane.b32.xlu0 %v394, 4
      %v566 = vpop.permute.xlu0 %565
      %567 = vrot.lane.b32.xlu0 %v395, 4
      %v568 = vpop.permute.xlu0 %567
      %569 = vrot.lane.b32.xlu0 %v396, 4
      %v570 = vpop.permute.xlu0 %569
      %571 = vrot.lane.b32.xlu0 %v397, 4
      %v572 = vpop.permute.xlu0 %571
      %573 = vrot.lane.b32.xlu0 %v398, 4
      %v574 = vpop.permute.xlu0 %573
      %575 = vrot.lane.b32.xlu0 %v399, 4
      %v576 = vpop.permute.xlu0 %575
      %577 = vrot.lane.b32.xlu0 %v400, 4
      %v578 = vpop.permute.xlu0 %577
      %579 = vrot.lane.b32.xlu0 %v401, 4
      %v580 = vpop.permute.xlu0 %579
      %581 = vrot.lane.b32.xlu0 %v402, 4
      %v582 = vpop.permute.xlu0 %581
      %583 = vrot.lane.b32.xlu0 %v403, 4
      %v584 = vpop.permute.xlu0 %583
      %585 = vrot.lane.b32.xlu0 %v404, 4
      %v586 = vpop.permute.xlu0 %585
      %587 = vrot.lane.b32.xlu0 %v405, 4
      %v588 = vpop.permute.xlu0 %587
      %589 = vrot.lane.b32.xlu0 %v406, 4
      %v590 = vpop.permute.xlu0 %589
      %591 = vrot.lane.b32.xlu0 %v407, 4
      %v592 = vpop.permute.xlu0 %591
      %593 = vrot.lane.b32.xlu0 %v408, 4
      %v594 = vpop.permute.xlu0 %593
      %595 = vrot.lane.b32.xlu0 %v409, 4
      %v596 = vpop.permute.xlu0 %595
      %597 = vrot.lane.b32.xlu0 %v410, 4
      %v598 = vpop.permute.xlu0 %597
      %599 = vrot.lane.b32.xlu0 %v411, 4
      %v600 = vpop.permute.xlu0 %599
      %601 = vrot.lane.b32.xlu0 %v412, 4
      %v602 = vpop.permute.xlu0 %601
      %603 = vrot.lane.b32.xlu0 %v413, 4
      %v604 = vpop.permute.xlu0 %603
      %605 = vrot.lane.b32.xlu0 %v414, 4
      %v606 = vpop.permute.xlu0 %605
      %607 = vrot.lane.b32.xlu0 %v415, 4
      %v608 = vpop.permute.xlu0 %607
      %609 = vrot.lane.b32.xlu0 %v416, 4
      %v610 = vpop.permute.xlu0 %609
      %611 = vrot.lane.b32.xlu0 %v417, 4
      %v612 = vpop.permute.xlu0 %611
      %613 = vrot.lane.b32.xlu0 %v418, 4
      %v614 = vpop.permute.xlu0 %613
      %615 = vrot.lane.b32.xlu0 %v419, 4
      %v616 = vpop.permute.xlu0 %615
      %617 = vrot.lane.b32.xlu0 %v420, 4
      %v618 = vpop.permute.xlu0 %617
      %619 = vrot.lane.b32.xlu0 %v421, 4
      %v620 = vpop.permute.xlu0 %619
      %621 = vrot.lane.b32.xlu0 %v422, 4
      %v622 = vpop.permute.xlu0 %621
      %623 = vrot.lane.b32.xlu0 %v423, 4
      %v624 = vpop.permute.xlu0 %623
      %vm674 = vcmask 64545
      %675 = vst.msk [vmem:[#allocation3 - $0x1] sm:$0xfe] %vm674, %v528
      %vm676 = vcmask 64544
      %677 = vst.msk [vmem:[#allocation3 + $0x7] sm:$0xff] %vm676, %v530
      %678 = vst.msk [vmem:[#allocation3 + $0xf] sm:$0xff] %vm676, %v532
      %679 = vst.msk [vmem:[#allocation3 + $0x17] sm:$0xff] %vm676, %v534
      %680 = vst.msk [vmem:[#allocation3 + $0x1f] sm:$0xff] %vm676, %v536
      %681 = vst.msk [vmem:[#allocation3 + $0x27] sm:$0xff] %vm676, %v538
      %682 = vst.msk [vmem:[#allocation3 + $0x2f] sm:$0xff] %vm676, %v540
      %683 = vst.msk [vmem:[#allocation3 + $0x37] sm:$0xff] %vm676, %v542
      %684 = vst.msk [vmem:[#allocation3 + $0x3f] sm:$0xff] %vm676, %v544
      %685 = vst.msk [vmem:[#allocation3 + $0x47] sm:$0xff] %vm676, %v546
      %686 = vst.msk [vmem:[#allocation3 + $0x4f] sm:$0xff] %vm676, %v548
      %687 = vst.msk [vmem:[#allocation3 + $0x57] sm:$0xff] %vm676, %v550
      %688 = vst.msk [vmem:[#allocation3 + $0x5f] sm:$0xff] %vm676, %v552
      %689 = vst.msk [vmem:[#allocation3 + $0x67] sm:$0xff] %vm676, %v554
      %690 = vst.msk [vmem:[#allocation3 + $0x6f] sm:$0xff] %vm676, %v556
      %691 = vst.msk [vmem:[#allocation3 + $0x77] sm:$0xff] %vm676, %v558
      %692 = vst.msk [vmem:[#allocation3 + $0x7f] sm:$0xff] %vm676, %v560
      %693 = vst.msk [vmem:[#allocation3 + $0x87] sm:$0xff] %vm676, %v562
      %694 = vst.msk [vmem:[#allocation3 + $0x8f] sm:$0xff] %vm676, %v564
      %695 = vst.msk [vmem:[#allocation3 + $0x97] sm:$0xff] %vm676, %v566
      %696 = vst.msk [vmem:[#allocation3 + $0x9f] sm:$0xff] %vm676, %v568
      %697 = vst.msk [vmem:[#allocation3 + $0xa7] sm:$0xff] %vm676, %v570
      %698 = vst.msk [vmem:[#allocation3 + $0xaf] sm:$0xff] %vm676, %v572
      %699 = vst.msk [vmem:[#allocation3 + $0xb7] sm:$0xff] %vm676, %v574
      %700 = vst.msk [vmem:[#allocation3 + $0xbf] sm:$0xff] %vm676, %v576
      %701 = vst.msk [vmem:[#allocation3 + $0xc7] sm:$0xff] %vm676, %v578
      %702 = vst.msk [vmem:[#allocation3 + $0xcf] sm:$0xff] %vm676, %v580
      %703 = vst.msk [vmem:[#allocation3 + $0xd7] sm:$0xff] %vm676, %v582
      %704 = vst.msk [vmem:[#allocation3 + $0xdf] sm:$0xff] %vm676, %v584
      %705 = vst.msk [vmem:[#allocation3 + $0xe7] sm:$0xff] %vm676, %v586
      %706 = vst.msk [vmem:[#allocation3 + $0xef] sm:$0xff] %vm676, %v588
      %707 = vst.msk [vmem:[#allocation3 + $0xf7] sm:$0xff] %vm676, %v590
      %708 = vst.msk [vmem:[#allocation3 + $0xff] sm:$0xff] %vm676, %v592
      %709 = vst.msk [vmem:[#allocation3 + $0x107] sm:$0xff] %vm676, %v594
      %710 = vst.msk [vmem:[#allocation3 + $0x10f] sm:$0xff] %vm676, %v596
      %711 = vst.msk [vmem:[#allocation3 + $0x117] sm:$0xff] %vm676, %v598
      %712 = vst.msk [vmem:[#allocation3 + $0x11f] sm:$0xff] %vm676, %v600
      %713 = vst.msk [vmem:[#allocation3 + $0x127] sm:$0xff] %vm676, %v602
      %714 = vst.msk [vmem:[#allocation3 + $0x12f] sm:$0xff] %vm676, %v604
      %715 = vst.msk [vmem:[#allocation3 + $0x137] sm:$0xff] %vm676, %v606
      %716 = vst.msk [vmem:[#allocation3 + $0x13f] sm:$0xff] %vm676, %v608
      %717 = vst.msk [vmem:[#allocation3 + $0x147] sm:$0xff] %vm676, %v610
      %718 = vst.msk [vmem:[#allocation3 + $0x14f] sm:$0xff] %vm676, %v612
      %719 = vst.msk [vmem:[#allocation3 + $0x157] sm:$0xff] %vm676, %v614
      %720 = vst.msk [vmem:[#allocation3 + $0x15f] sm:$0xff] %vm676, %v616
      %721 = vst.msk [vmem:[#allocation3 + $0x167] sm:$0xff] %vm676, %v618
      %722 = vst.msk [vmem:[#allocation3 + $0x16f] sm:$0xff] %vm676, %v620
      %723 = vst.msk [vmem:[#allocation3 + $0x177] sm:$0xff] %vm676, %v622
      %vm724 = vcmask 57376
      %725 = vst.msk [vmem:[#allocation3 + $0x17f] sm:$0x1] %vm724, %v624
      %726 = vrot.lane.b32.xlu0 %v375, 8
      %v727 = vpop.permute.xlu0 %726
      %728 = vrot.lane.b32.xlu0 %v376, 8
      %v729 = vpop.permute.xlu0 %728
      %730 = vrot.lane.b32.xlu0 %v377, 8
      %v731 = vpop.permute.xlu0 %730
      %732 = vrot.lane.b32.xlu0 %v378, 8
      %v733 = vpop.permute.xlu0 %732
      %734 = vrot.lane.b32.xlu0 %v379, 8
      %v735 = vpop.permute.xlu0 %734
      %736 = vrot.lane.b32.xlu0 %v380, 8
      %v737 = vpop.permute.xlu0 %736
      %738 = vrot.lane.b32.xlu0 %v381, 8
      %v739 = vpop.permute.xlu0 %738
      %740 = vrot.lane.b32.xlu0 %v382, 8
      %v741 = vpop.permute.xlu0 %740
      %742 = vrot.lane.b32.xlu0 %v383, 8
      %v743 = vpop.permute.xlu0 %742
      %744 = vrot.lane.b32.xlu0 %v384, 8
      %v745 = vpop.permute.xlu0 %744
      %746 = vrot.lane.b32.xlu0 %v385, 8
      %v747 = vpop.permute.xlu0 %746
      %748 = vrot.lane.b32.xlu0 %v386, 8
      %v749 = vpop.permute.xlu0 %748
      %750 = vrot.lane.b32.xlu0 %v387, 8
      %v751 = vpop.permute.xlu0 %750
      %752 = vrot.lane.b32.xlu0 %v388, 8
      %v753 = vpop.permute.xlu0 %752
      %754 = vrot.lane.b32.xlu0 %v389, 8
      %v755 = vpop.permute.xlu0 %754
      %756 = vrot.lane.b32.xlu0 %v390, 8
      %v757 = vpop.permute.xlu0 %756
      %758 = vrot.lane.b32.xlu0 %v391, 8
      %v759 = vpop.permute.xlu0 %758
      %760 = vrot.lane.b32.xlu0 %v392, 8
      %v761 = vpop.permute.xlu0 %760
      %762 = vrot.lane.b32.xlu0 %v393, 8
      %v763 = vpop.permute.xlu0 %762
      %764 = vrot.lane.b32.xlu0 %v394, 8
      %v765 = vpop.permute.xlu0 %764
      %766 = vrot.lane.b32.xlu0 %v395, 8
      %v767 = vpop.permute.xlu0 %766
      %768 = vrot.lane.b32.xlu0 %v396, 8
      %v769 = vpop.permute.xlu0 %768
      %770 = vrot.lane.b32.xlu0 %v397, 8
      %v771 = vpop.permute.xlu0 %770
      %772 = vrot.lane.b32.xlu0 %v398, 8
      %v773 = vpop.permute.xlu0 %772
      %774 = vrot.lane.b32.xlu0 %v399, 8
      %v775 = vpop.permute.xlu0 %774
      %776 = vrot.lane.b32.xlu0 %v400, 8
      %v777 = vpop.permute.xlu0 %776
      %778 = vrot.lane.b32.xlu0 %v401, 8
      %v779 = vpop.permute.xlu0 %778
      %780 = vrot.lane.b32.xlu0 %v402, 8
      %v781 = vpop.permute.xlu0 %780
      %782 = vrot.lane.b32.xlu0 %v403, 8
      %v783 = vpop.permute.xlu0 %782
      %784 = vrot.lane.b32.xlu0 %v404, 8
      %v785 = vpop.permute.xlu0 %784
      %786 = vrot.lane.b32.xlu0 %v405, 8
      %v787 = vpop.permute.xlu0 %786
      %788 = vrot.lane.b32.xlu0 %v406, 8
      %v789 = vpop.permute.xlu0 %788
      %790 = vrot.lane.b32.xlu0 %v407, 8
      %v791 = vpop.permute.xlu0 %790
      %792 = vrot.lane.b32.xlu0 %v408, 8
      %v793 = vpop.permute.xlu0 %792
      %794 = vrot.lane.b32.xlu0 %v409, 8
      %v795 = vpop.permute.xlu0 %794
      %796 = vrot.lane.b32.xlu0 %v410, 8
      %v797 = vpop.permute.xlu0 %796
      %798 = vrot.lane.b32.xlu0 %v411, 8
      %v799 = vpop.permute.xlu0 %798
      %800 = vrot.lane.b32.xlu0 %v412, 8
      %v801 = vpop.permute.xlu0 %800
      %802 = vrot.lane.b32.xlu0 %v413, 8
      %v803 = vpop.permute.xlu0 %802
      %804 = vrot.lane.b32.xlu0 %v414, 8
      %v805 = vpop.permute.xlu0 %804
      %806 = vrot.lane.b32.xlu0 %v415, 8
      %v807 = vpop.permute.xlu0 %806
      %808 = vrot.lane.b32.xlu0 %v416, 8
      %v809 = vpop.permute.xlu0 %808
      %810 = vrot.lane.b32.xlu0 %v417, 8
      %v811 = vpop.permute.xlu0 %810
      %812 = vrot.lane.b32.xlu0 %v418, 8
      %v813 = vpop.permute.xlu0 %812
      %814 = vrot.lane.b32.xlu0 %v419, 8
      %v815 = vpop.permute.xlu0 %814
      %816 = vrot.lane.b32.xlu0 %v420, 8
      %v817 = vpop.permute.xlu0 %816
      %818 = vrot.lane.b32.xlu0 %v421, 8
      %v819 = vpop.permute.xlu0 %818
      %820 = vrot.lane.b32.xlu0 %v422, 8
      %v821 = vpop.permute.xlu0 %820
      %822 = vrot.lane.b32.xlu0 %v423, 8
      %v823 = vpop.permute.xlu0 %822
      %vm873 = vcmask 97346
      %874 = vst.msk [vmem:[#allocation3 - $0x2] sm:$0xfc] %vm873, %v727
      %vm875 = vcmask 97344
      %876 = vst.msk [vmem:[#allocation3 + $0x6] sm:$0xff] %vm875, %v729
      %877 = vst.msk [vmem:[#allocation3 + $0xe] sm:$0xff] %vm875, %v731
      %878 = vst.msk [vmem:[#allocation3 + $0x16] sm:$0xff] %vm875, %v733
      %879 = vst.msk [vmem:[#allocation3 + $0x1e] sm:$0xff] %vm875, %v735
      %880 = vst.msk [vmem:[#allocation3 + $0x26] sm:$0xff] %vm875, %v737
      %881 = vst.msk [vmem:[#allocation3 + $0x2e] sm:$0xff] %vm875, %v739
      %882 = vst.msk [vmem:[#allocation3 + $0x36] sm:$0xff] %vm875, %v741
      %883 = vst.msk [vmem:[#allocation3 + $0x3e] sm:$0xff] %vm875, %v743
      %884 = vst.msk [vmem:[#allocation3 + $0x46] sm:$0xff] %vm875, %v745
      %885 = vst.msk [vmem:[#allocation3 + $0x4e] sm:$0xff] %vm875, %v747
      %886 = vst.msk [vmem:[#allocation3 + $0x56] sm:$0xff] %vm875, %v749
      %887 = vst.msk [vmem:[#allocation3 + $0x5e] sm:$0xff] %vm875, %v751
      %888 = vst.msk [vmem:[#allocation3 + $0x66] sm:$0xff] %vm875, %v753
      %889 = vst.msk [vmem:[#allocation3 + $0x6e] sm:$0xff] %vm875, %v755
      %890 = vst.msk [vmem:[#allocation3 + $0x76] sm:$0xff] %vm875, %v757
      %891 = vst.msk [vmem:[#allocation3 + $0x7e] sm:$0xff] %vm875, %v759
      %892 = vst.msk [vmem:[#allocation3 + $0x86] sm:$0xff] %vm875, %v761
      %893 = vst.msk [vmem:[#allocation3 + $0x8e] sm:$0xff] %vm875, %v763
      %894 = vst.msk [vmem:[#allocation3 + $0x96] sm:$0xff] %vm875, %v765
      %895 = vst.msk [vmem:[#allocation3 + $0x9e] sm:$0xff] %vm875, %v767
      %896 = vst.msk [vmem:[#allocation3 + $0xa6] sm:$0xff] %vm875, %v769
      %897 = vst.msk [vmem:[#allocation3 + $0xae] sm:$0xff] %vm875, %v771
      %898 = vst.msk [vmem:[#allocation3 + $0xb6] sm:$0xff] %vm875, %v773
      %899 = vst.msk [vmem:[#allocation3 + $0xbe] sm:$0xff] %vm875, %v775
      %900 = vst.msk [vmem:[#allocation3 + $0xc6] sm:$0xff] %vm875, %v777
      %901 = vst.msk [vmem:[#allocation3 + $0xce] sm:$0xff] %vm875, %v779
      %902 = vst.msk [vmem:[#allocation3 + $0xd6] sm:$0xff] %vm875, %v781
      %903 = vst.msk [vmem:[#allocation3 + $0xde] sm:$0xff] %vm875, %v783
      %904 = vst.msk [vmem:[#allocation3 + $0xe6] sm:$0xff] %vm875, %v785
      %905 = vst.msk [vmem:[#allocation3 + $0xee] sm:$0xff] %vm875, %v787
      %906 = vst.msk [vmem:[#allocation3 + $0xf6] sm:$0xff] %vm875, %v789
      %907 = vst.msk [vmem:[#allocation3 + $0xfe] sm:$0xff] %vm875, %v791
      %908 = vst.msk [vmem:[#allocation3 + $0x106] sm:$0xff] %vm875, %v793
      %909 = vst.msk [vmem:[#allocation3 + $0x10e] sm:$0xff] %vm875, %v795
      %910 = vst.msk [vmem:[#allocation3 + $0x116] sm:$0xff] %vm875, %v797
      %911 = vst.msk [vmem:[#allocation3 + $0x11e] sm:$0xff] %vm875, %v799
      %912 = vst.msk [vmem:[#allocation3 + $0x126] sm:$0xff] %vm875, %v801
      %913 = vst.msk [vmem:[#allocation3 + $0x12e] sm:$0xff] %vm875, %v803
      %914 = vst.msk [vmem:[#allocation3 + $0x136] sm:$0xff] %vm875, %v805
      %915 = vst.msk [vmem:[#allocation3 + $0x13e] sm:$0xff] %vm875, %v807
      %916 = vst.msk [vmem:[#allocation3 + $0x146] sm:$0xff] %vm875, %v809
      %917 = vst.msk [vmem:[#allocation3 + $0x14e] sm:$0xff] %vm875, %v811
      %918 = vst.msk [vmem:[#allocation3 + $0x156] sm:$0xff] %vm875, %v813
      %919 = vst.msk [vmem:[#allocation3 + $0x15e] sm:$0xff] %vm875, %v815
      %920 = vst.msk [vmem:[#allocation3 + $0x166] sm:$0xff] %vm875, %v817
      %921 = vst.msk [vmem:[#allocation3 + $0x16e] sm:$0xff] %vm875, %v819
      %922 = vst.msk [vmem:[#allocation3 + $0x176] sm:$0xff] %vm875, %v821
      %vm923 = vcmask 91200
      %924 = vst.msk [vmem:[#allocation3 + $0x17e] sm:$0x3] %vm923, %v823
      %927 = vrot.lane.b32.xlu0 %v378, 12
      %v928 = vpop.permute.xlu0 %927
      %929 = vrot.lane.b32.xlu0 %v379, 12
      %v930 = vpop.permute.xlu0 %929
      %931 = vrot.lane.b32.xlu0 %v380, 12
      %v932 = vpop.permute.xlu0 %931
      %933 = vrot.lane.b32.xlu0 %v381, 12
      %v934 = vpop.permute.xlu0 %933
      %935 = vrot.lane.b32.xlu0 %v382, 12
      %v936 = vpop.permute.xlu0 %935
      %937 = vrot.lane.b32.xlu0 %v383, 12
      %v938 = vpop.permute.xlu0 %937
      %939 = vrot.lane.b32.xlu0 %v384, 12
      %v940 = vpop.permute.xlu0 %939
      %941 = vrot.lane.b32.xlu0 %v385, 12
      %v942 = vpop.permute.xlu0 %941
      %943 = vrot.lane.b32.xlu0 %v386, 12
      %v944 = vpop.permute.xlu0 %943
      %945 = vrot.lane.b32.xlu0 %v387, 12
      %v946 = vpop.permute.xlu0 %945
      %947 = vrot.lane.b32.xlu0 %v388, 12
      %v948 = vpop.permute.xlu0 %947
      %949 = vrot.lane.b32.xlu0 %v389, 12
      %v950 = vpop.permute.xlu0 %949
      %951 = vrot.lane.b32.xlu0 %v390, 12
      %v952 = vpop.permute.xlu0 %951
      %953 = vrot.lane.b32.xlu0 %v391, 12
      %v954 = vpop.permute.xlu0 %953
      %955 = vrot.lane.b32.xlu0 %v392, 12
      %v956 = vpop.permute.xlu0 %955
      %957 = vrot.lane.b32.xlu0 %v393, 12
      %v958 = vpop.permute.xlu0 %957
      %959 = vrot.lane.b32.xlu0 %v394, 12
      %v960 = vpop.permute.xlu0 %959
      %961 = vrot.lane.b32.xlu0 %v395, 12
      %v962 = vpop.permute.xlu0 %961
      %963 = vrot.lane.b32.xlu0 %v396, 12
      %v964 = vpop.permute.xlu0 %963
      %965 = vrot.lane.b32.xlu0 %v397, 12
      %v966 = vpop.permute.xlu0 %965
      %967 = vrot.lane.b32.xlu0 %v398, 12
      %v968 = vpop.permute.xlu0 %967
      %969 = vrot.lane.b32.xlu0 %v399, 12
      %v970 = vpop.permute.xlu0 %969
      %971 = vrot.lane.b32.xlu0 %v400, 12
      %v972 = vpop.permute.xlu0 %971
      %973 = vrot.lane.b32.xlu0 %v401, 12
      %v974 = vpop.permute.xlu0 %973
      %975 = vrot.lane.b32.xlu0 %v402, 12
      %v976 = vpop.permute.xlu0 %975
      %977 = vrot.lane.b32.xlu0 %v403, 12
      %v978 = vpop.permute.xlu0 %977
      %979 = vrot.lane.b32.xlu0 %v404, 12
      %v980 = vpop.permute.xlu0 %979
      %981 = vrot.lane.b32.xlu0 %v405, 12
      %v982 = vpop.permute.xlu0 %981
      %983 = vrot.lane.b32.xlu0 %v406, 12
      %v984 = vpop.permute.xlu0 %983
      %985 = vrot.lane.b32.xlu0 %v407, 12
      %v986 = vpop.permute.xlu0 %985
      %987 = vrot.lane.b32.xlu0 %v408, 12
      %v988 = vpop.permute.xlu0 %987
      %989 = vrot.lane.b32.xlu0 %v409, 12
      %v990 = vpop.permute.xlu0 %989
      %991 = vrot.lane.b32.xlu0 %v410, 12
      %v992 = vpop.permute.xlu0 %991
      %993 = vrot.lane.b32.xlu0 %v411, 12
      %v994 = vpop.permute.xlu0 %993
      %995 = vrot.lane.b32.xlu0 %v412, 12
      %v996 = vpop.permute.xlu0 %995
      %997 = vrot.lane.b32.xlu0 %v413, 12
      %v998 = vpop.permute.xlu0 %997
      %999 = vrot.lane.b32.xlu0 %v414, 12
      %v1000 = vpop.permute.xlu0 %999
      %1001 = vrot.lane.b32.xlu0 %v415, 12
      %v1002 = vpop.permute.xlu0 %1001
      %1003 = vrot.lane.b32.xlu0 %v416, 12
      %v1004 = vpop.permute.xlu0 %1003
      %1005 = vrot.lane.b32.xlu0 %v417, 12
      %v1006 = vpop.permute.xlu0 %1005
      %1007 = vrot.lane.b32.xlu0 %v418, 12
      %v1008 = vpop.permute.xlu0 %1007
      %1009 = vrot.lane.b32.xlu0 %v419, 12
      %v1010 = vpop.permute.xlu0 %1009
      %1011 = vrot.lane.b32.xlu0 %v420, 12
      %v1012 = vpop.permute.xlu0 %1011
      %1013 = vrot.lane.b32.xlu0 %v421, 12
      %v1014 = vpop.permute.xlu0 %1013
      %1015 = vrot.lane.b32.xlu0 %v422, 12
      %v1016 = vpop.permute.xlu0 %1015
      %1017 = vrot.lane.b32.xlu0 %v423, 12
      %v1018 = vpop.permute.xlu0 %1017
      %1019 = vrot.lane.b32.xlu0 %v424, 12
      %v1020 = vpop.permute.xlu0 %1019
      %1021 = vrot.lane.b32.xlu0 %v425, 12
      %v1022 = vpop.permute.xlu0 %1021
      %vm1071 = vcmask 130144
      %1072 = vst.msk [vmem:[#allocation3] sm:$0xff] %vm1071, %v928
      %1073 = vst.msk [vmem:[#allocation3 + $0x8] sm:$0xff] %vm1071, %v930
      %1074 = vst.msk [vmem:[#allocation3 + $0x10] sm:$0xff] %vm1071, %v932
      %1075 = vst.msk [vmem:[#allocation3 + $0x18] sm:$0xff] %vm1071, %v934
      %1076 = vst.msk [vmem:[#allocation3 + $0x20] sm:$0xff] %vm1071, %v936
      %1077 = vst.msk [vmem:[#allocation3 + $0x28] sm:$0xff] %vm1071, %v938
      %1078 = vst.msk [vmem:[#allocation3 + $0x30] sm:$0xff] %vm1071, %v940
      %1079 = vst.msk [vmem:[#allocation3 + $0x38] sm:$0xff] %vm1071, %v942
      %1080 = vst.msk [vmem:[#allocation3 + $0x40] sm:$0xff] %vm1071, %v944
      %1081 = vst.msk [vmem:[#allocation3 + $0x48] sm:$0xff] %vm1071, %v946
      %1082 = vst.msk [vmem:[#allocation3 + $0x50] sm:$0xff] %vm1071, %v948
      %1083 = vst.msk [vmem:[#allocation3 + $0x58] sm:$0xff] %vm1071, %v950
      %1084 = vst.msk [vmem:[#allocation3 + $0x60] sm:$0xff] %vm1071, %v952
      %1085 = vst.msk [vmem:[#allocation3 + $0x68] sm:$0xff] %vm1071, %v954
      %1086 = vst.msk [vmem:[#allocation3 + $0x70] sm:$0xff] %vm1071, %v956
      %1087 = vst.msk [vmem:[#allocation3 + $0x78] sm:$0xff] %vm1071, %v958
      %1088 = vst.msk [vmem:[#allocation3 + $0x80] sm:$0xff] %vm1071, %v960
      %1089 = vst.msk [vmem:[#allocation3 + $0x88] sm:$0xff] %vm1071, %v962
      %1090 = vst.msk [vmem:[#allocation3 + $0x90] sm:$0xff] %vm1071, %v964
      %1091 = vst.msk [vmem:[#allocation3 + $0x98] sm:$0xff] %vm1071, %v966
      %1092 = vst.msk [vmem:[#allocation3 + $0xa0] sm:$0xff] %vm1071, %v968
      %1093 = vst.msk [vmem:[#allocation3 + $0xa8] sm:$0xff] %vm1071, %v970
      %1094 = vst.msk [vmem:[#allocation3 + $0xb0] sm:$0xff] %vm1071, %v972
      %1095 = vst.msk [vmem:[#allocation3 + $0xb8] sm:$0xff] %vm1071, %v974
      %1096 = vst.msk [vmem:[#allocation3 + $0xc0] sm:$0xff] %vm1071, %v976
      %1097 = vst.msk [vmem:[#allocation3 + $0xc8] sm:$0xff] %vm1071, %v978
      %1098 = vst.msk [vmem:[#allocation3 + $0xd0] sm:$0xff] %vm1071, %v980
      %1099 = vst.msk [vmem:[#allocation3 + $0xd8] sm:$0xff] %vm1071, %v982
      %1100 = vst.msk [vmem:[#allocation3 + $0xe0] sm:$0xff] %vm1071, %v984
      %1101 = vst.msk [vmem:[#allocation3 + $0xe8] sm:$0xff] %vm1071, %v986
      %1102 = vst.msk [vmem:[#allocation3 + $0xf0] sm:$0xff] %vm1071, %v988
      %1103 = vst.msk [vmem:[#allocation3 + $0xf8] sm:$0xff] %vm1071, %v990
      %1104 = vst.msk [vmem:[#allocation3 + $0x100] sm:$0xff] %vm1071, %v992
      %1105 = vst.msk [vmem:[#allocation3 + $0x108] sm:$0xff] %vm1071, %v994
      %1106 = vst.msk [vmem:[#allocation3 + $0x110] sm:$0xff] %vm1071, %v996
      %1107 = vst.msk [vmem:[#allocation3 + $0x118] sm:$0xff] %vm1071, %v998
      %1108 = vst.msk [vmem:[#allocation3 + $0x120] sm:$0xff] %vm1071, %v1000
      %1109 = vst.msk [vmem:[#allocation3 + $0x128] sm:$0xff] %vm1071, %v1002
      %1110 = vst.msk [vmem:[#allocation3 + $0x130] sm:$0xff] %vm1071, %v1004
      %1111 = vst.msk [vmem:[#allocation3 + $0x138] sm:$0xff] %vm1071, %v1006
      %1112 = vst.msk [vmem:[#allocation3 + $0x140] sm:$0xff] %vm1071, %v1008
      %1113 = vst.msk [vmem:[#allocation3 + $0x148] sm:$0xff] %vm1071, %v1010
      %1114 = vst.msk [vmem:[#allocation3 + $0x150] sm:$0xff] %vm1071, %v1012
      %1115 = vst.msk [vmem:[#allocation3 + $0x158] sm:$0xff] %vm1071, %v1014
      %1116 = vst.msk [vmem:[#allocation3 + $0x160] sm:$0xff] %vm1071, %v1016
      %1117 = vst.msk [vmem:[#allocation3 + $0x168] sm:$0xff] %vm1071, %v1018
      %1118 = vst.msk [vmem:[#allocation3 + $0x170] sm:$0xff] %vm1071, %v1020
      %1119 = vst.msk [vmem:[#allocation3 + $0x178] sm:$0xff] %vm1071, %v1022
      %1121 = vrot.lane.b32.xlu0 %v378, 16
      %v1122 = vpop.permute.xlu0 %1121
      %1123 = vrot.lane.b32.xlu0 %v379, 16
      %v1124 = vpop.permute.xlu0 %1123
      %1125 = vrot.lane.b32.xlu0 %v380, 16
      %v1126 = vpop.permute.xlu0 %1125
      %1127 = vrot.lane.b32.xlu0 %v381, 16
      %v1128 = vpop.permute.xlu0 %1127
      %1129 = vrot.lane.b32.xlu0 %v382, 16
      %v1130 = vpop.permute.xlu0 %1129
      %1131 = vrot.lane.b32.xlu0 %v383, 16
      %v1132 = vpop.permute.xlu0 %1131
      %1133 = vrot.lane.b32.xlu0 %v384, 16
      %v1134 = vpop.permute.xlu0 %1133
      %1135 = vrot.lane.b32.xlu0 %v385, 16
      %v1136 = vpop.permute.xlu0 %1135
      %1137 = vrot.lane.b32.xlu0 %v386, 16
      %v1138 = vpop.permute.xlu0 %1137
      %1139 = vrot.lane.b32.xlu0 %v387, 16
      %v1140 = vpop.permute.xlu0 %1139
      %1141 = vrot.lane.b32.xlu0 %v388, 16
      %v1142 = vpop.permute.xlu0 %1141
      %1143 = vrot.lane.b32.xlu0 %v389, 16
      %v1144 = vpop.permute.xlu0 %1143
      %1145 = vrot.lane.b32.xlu0 %v390, 16
      %v1146 = vpop.permute.xlu0 %1145
      %1147 = vrot.lane.b32.xlu0 %v391, 16
      %v1148 = vpop.permute.xlu0 %1147
      %1149 = vrot.lane.b32.xlu0 %v392, 16
      %v1150 = vpop.permute.xlu0 %1149
      %1151 = vrot.lane.b32.xlu0 %v393, 16
      %v1152 = vpop.permute.xlu0 %1151
      %1153 = vrot.lane.b32.xlu0 %v394, 16
      %v1154 = vpop.permute.xlu0 %1153
      %1155 = vrot.lane.b32.xlu0 %v395, 16
      %v1156 = vpop.permute.xlu0 %1155
      %1157 = vrot.lane.b32.xlu0 %v396, 16
      %v1158 = vpop.permute.xlu0 %1157
      %1159 = vrot.lane.b32.xlu0 %v397, 16
      %v1160 = vpop.permute.xlu0 %1159
      %1161 = vrot.lane.b32.xlu0 %v398, 16
      %v1162 = vpop.permute.xlu0 %1161
      %1163 = vrot.lane.b32.xlu0 %v399, 16
      %v1164 = vpop.permute.xlu0 %1163
      %1165 = vrot.lane.b32.xlu0 %v400, 16
      %v1166 = vpop.permute.xlu0 %1165
      %1167 = vrot.lane.b32.xlu0 %v401, 16
      %v1168 = vpop.permute.xlu0 %1167
      %1169 = vrot.lane.b32.xlu0 %v402, 16
      %v1170 = vpop.permute.xlu0 %1169
      %1171 = vrot.lane.b32.xlu0 %v403, 16
      %v1172 = vpop.permute.xlu0 %1171
      %1173 = vrot.lane.b32.xlu0 %v404, 16
      %v1174 = vpop.permute.xlu0 %1173
      %1175 = vrot.lane.b32.xlu0 %v405, 16
      %v1176 = vpop.permute.xlu0 %1175
      %1177 = vrot.lane.b32.xlu0 %v406, 16
      %v1178 = vpop.permute.xlu0 %1177
      %1179 = vrot.lane.b32.xlu0 %v407, 16
      %v1180 = vpop.permute.xlu0 %1179
      %1181 = vrot.lane.b32.xlu0 %v408, 16
      %v1182 = vpop.permute.xlu0 %1181
      %1183 = vrot.lane.b32.xlu0 %v409, 16
      %v1184 = vpop.permute.xlu0 %1183
      %1185 = vrot.lane.b32.xlu0 %v410, 16
      %v1186 = vpop.permute.xlu0 %1185
      %1187 = vrot.lane.b32.xlu0 %v411, 16
      %v1188 = vpop.permute.xlu0 %1187
      %1189 = vrot.lane.b32.xlu0 %v412, 16
      %v1190 = vpop.permute.xlu0 %1189
      %1191 = vrot.lane.b32.xlu0 %v413, 16
      %v1192 = vpop.permute.xlu0 %1191
      %1193 = vrot.lane.b32.xlu0 %v414, 16
      %v1194 = vpop.permute.xlu0 %1193
      %1195 = vrot.lane.b32.xlu0 %v415, 16
      %v1196 = vpop.permute.xlu0 %1195
      %1197 = vrot.lane.b32.xlu0 %v416, 16
      %v1198 = vpop.permute.xlu0 %1197
      %1199 = vrot.lane.b32.xlu0 %v417, 16
      %v1200 = vpop.permute.xlu0 %1199
      %1201 = vrot.lane.b32.xlu0 %v418, 16
      %v1202 = vpop.permute.xlu0 %1201
      %1203 = vrot.lane.b32.xlu0 %v419, 16
      %v1204 = vpop.permute.xlu0 %1203
      %1205 = vrot.lane.b32.xlu0 %v420, 16
      %v1206 = vpop.permute.xlu0 %1205
      %1207 = vrot.lane.b32.xlu0 %v421, 16
      %v1208 = vpop.permute.xlu0 %1207
      %1209 = vrot.lane.b32.xlu0 %v422, 16
      %v1210 = vpop.permute.xlu0 %1209
      %1211 = vrot.lane.b32.xlu0 %v423, 16
      %v1212 = vpop.permute.xlu0 %1211
      %1213 = vrot.lane.b32.xlu0 %v424, 16
      %v1214 = vpop.permute.xlu0 %1213
      %1215 = vrot.lane.b32.xlu0 %v425, 16
      %v1216 = vpop.permute.xlu0 %1215
      %1217 = vrot.lane.b32.xlu0 %v426, 16
      %v1218 = vpop.permute.xlu0 %1217
      %vm1268 = vcmask 162945
      %1269 = vst.msk [vmem:[#allocation3 - $0x1] sm:$0xfe] %vm1268, %v1122
      %vm1270 = vcmask 162944
      %1271 = vst.msk [vmem:[#allocation3 + $0x7] sm:$0xff] %vm1270, %v1124
      %1272 = vst.msk [vmem:[#allocation3 + $0xf] sm:$0xff] %vm1270, %v1126
      %1273 = vst.msk [vmem:[#allocation3 + $0x17] sm:$0xff] %vm1270, %v1128
      %1274 = vst.msk [vmem:[#allocation3 + $0x1f] sm:$0xff] %vm1270, %v1130
      %1275 = vst.msk [vmem:[#allocation3 + $0x27] sm:$0xff] %vm1270, %v1132
      %1276 = vst.msk [vmem:[#allocation3 + $0x2f] sm:$0xff] %vm1270, %v1134
      %1277 = vst.msk [vmem:[#allocation3 + $0x37] sm:$0xff] %vm1270, %v1136
      %1278 = vst.msk [vmem:[#allocation3 + $0x3f] sm:$0xff] %vm1270, %v1138
      %1279 = vst.msk [vmem:[#allocation3 + $0x47] sm:$0xff] %vm1270, %v1140
      %1280 = vst.msk [vmem:[#allocation3 + $0x4f] sm:$0xff] %vm1270, %v1142
      %1281 = vst.msk [vmem:[#allocation3 + $0x57] sm:$0xff] %vm1270, %v1144
      %1282 = vst.msk [vmem:[#allocation3 + $0x5f] sm:$0xff] %vm1270, %v1146
      %1283 = vst.msk [vmem:[#allocation3 + $0x67] sm:$0xff] %vm1270, %v1148
      %1284 = vst.msk [vmem:[#allocation3 + $0x6f] sm:$0xff] %vm1270, %v1150
      %1285 = vst.msk [vmem:[#allocation3 + $0x77] sm:$0xff] %vm1270, %v1152
      %1286 = vst.msk [vmem:[#allocation3 + $0x7f] sm:$0xff] %vm1270, %v1154
      %1287 = vst.msk [vmem:[#allocation3 + $0x87] sm:$0xff] %vm1270, %v1156
      %1288 = vst.msk [vmem:[#allocation3 + $0x8f] sm:$0xff] %vm1270, %v1158
      %1289 = vst.msk [vmem:[#allocation3 + $0x97] sm:$0xff] %vm1270, %v1160
      %1290 = vst.msk [vmem:[#allocation3 + $0x9f] sm:$0xff] %vm1270, %v1162
      %1291 = vst.msk [vmem:[#allocation3 + $0xa7] sm:$0xff] %vm1270, %v1164
      %1292 = vst.msk [vmem:[#allocation3 + $0xaf] sm:$0xff] %vm1270, %v1166
      %1293 = vst.msk [vmem:[#allocation3 + $0xb7] sm:$0xff] %vm1270, %v1168
      %1294 = vst.msk [vmem:[#allocation3 + $0xbf] sm:$0xff] %vm1270, %v1170
      %1295 = vst.msk [vmem:[#allocation3 + $0xc7] sm:$0xff] %vm1270, %v1172
      %1296 = vst.msk [vmem:[#allocation3 + $0xcf] sm:$0xff] %vm1270, %v1174
      %1297 = vst.msk [vmem:[#allocation3 + $0xd7] sm:$0xff] %vm1270, %v1176
      %1298 = vst.msk [vmem:[#allocation3 + $0xdf] sm:$0xff] %vm1270, %v1178
      %1299 = vst.msk [vmem:[#allocation3 + $0xe7] sm:$0xff] %vm1270, %v1180
      %1300 = vst.msk [vmem:[#allocation3 + $0xef] sm:$0xff] %vm1270, %v1182
      %1301 = vst.msk [vmem:[#allocation3 + $0xf7] sm:$0xff] %vm1270, %v1184
      %1302 = vst.msk [vmem:[#allocation3 + $0xff] sm:$0xff] %vm1270, %v1186
      %1303 = vst.msk [vmem:[#allocation3 + $0x107] sm:$0xff] %vm1270, %v1188
      %1304 = vst.msk [vmem:[#allocation3 + $0x10f] sm:$0xff] %vm1270, %v1190
      %1305 = vst.msk [vmem:[#allocation3 + $0x117] sm:$0xff] %vm1270, %v1192
      %1306 = vst.msk [vmem:[#allocation3 + $0x11f] sm:$0xff] %vm1270, %v1194
      %1307 = vst.msk [vmem:[#allocation3 + $0x127] sm:$0xff] %vm1270, %v1196
      %1308 = vst.msk [vmem:[#allocation3 + $0x12f] sm:$0xff] %vm1270, %v1198
      %1309 = vst.msk [vmem:[#allocation3 + $0x137] sm:$0xff] %vm1270, %v1200
      %1310 = vst.msk [vmem:[#allocation3 + $0x13f] sm:$0xff] %vm1270, %v1202
      %1311 = vst.msk [vmem:[#allocation3 + $0x147] sm:$0xff] %vm1270, %v1204
      %1312 = vst.msk [vmem:[#allocation3 + $0x14f] sm:$0xff] %vm1270, %v1206
      %1313 = vst.msk [vmem:[#allocation3 + $0x157] sm:$0xff] %vm1270, %v1208
      %1314 = vst.msk [vmem:[#allocation3 + $0x15f] sm:$0xff] %vm1270, %v1210
      %1315 = vst.msk [vmem:[#allocation3 + $0x167] sm:$0xff] %vm1270, %v1212
      %1316 = vst.msk [vmem:[#allocation3 + $0x16f] sm:$0xff] %vm1270, %v1214
      %1317 = vst.msk [vmem:[#allocation3 + $0x177] sm:$0xff] %vm1270, %v1216
      %vm1318 = vcmask 155776
      %1319 = vst.msk [vmem:[#allocation3 + $0x17f] sm:$0x1] %vm1318, %v1218
      %1320 = vrot.lane.b32.xlu0 %v378, 20
      %v1321 = vpop.permute.xlu0 %1320
      %1322 = vrot.lane.b32.xlu0 %v379, 20
      %v1323 = vpop.permute.xlu0 %1322
      %1324 = vrot.lane.b32.xlu0 %v380, 20
      %v1325 = vpop.permute.xlu0 %1324
      %1326 = vrot.lane.b32.xlu0 %v381, 20
      %v1327 = vpop.permute.xlu0 %1326
      %1328 = vrot.lane.b32.xlu0 %v382, 20
      %v1329 = vpop.permute.xlu0 %1328
      %1330 = vrot.lane.b32.xlu0 %v383, 20
      %v1331 = vpop.permute.xlu0 %1330
      %1332 = vrot.lane.b32.xlu0 %v384, 20
      %v1333 = vpop.permute.xlu0 %1332
      %1334 = vrot.lane.b32.xlu0 %v385, 20
      %v1335 = vpop.permute.xlu0 %1334
      %1336 = vrot.lane.b32.xlu0 %v386, 20
      %v1337 = vpop.permute.xlu0 %1336
      %1338 = vrot.lane.b32.xlu0 %v387, 20
      %v1339 = vpop.permute.xlu0 %1338
      %1340 = vrot.lane.b32.xlu0 %v388, 20
      %v1341 = vpop.permute.xlu0 %1340
      %1342 = vrot.lane.b32.xlu0 %v389, 20
      %v1343 = vpop.permute.xlu0 %1342
      %1344 = vrot.lane.b32.xlu0 %v390, 20
      %v1345 = vpop.permute.xlu0 %1344
      %1346 = vrot.lane.b32.xlu0 %v391, 20
      %v1347 = vpop.permute.xlu0 %1346
      %1348 = vrot.lane.b32.xlu0 %v392, 20
      %v1349 = vpop.permute.xlu0 %1348
      %1350 = vrot.lane.b32.xlu0 %v393, 20
      %v1351 = vpop.permute.xlu0 %1350
      %1352 = vrot.lane.b32.xlu0 %v394, 20
      %v1353 = vpop.permute.xlu0 %1352
      %1354 = vrot.lane.b32.xlu0 %v395, 20
      %v1355 = vpop.permute.xlu0 %1354
      %1356 = vrot.lane.b32.xlu0 %v396, 20
      %v1357 = vpop.permute.xlu0 %1356
      %1358 = vrot.lane.b32.xlu0 %v397, 20
      %v1359 = vpop.permute.xlu0 %1358
      %1360 = vrot.lane.b32.xlu0 %v398, 20
      %v1361 = vpop.permute.xlu0 %1360
      %1362 = vrot.lane.b32.xlu0 %v399, 20
      %v1363 = vpop.permute.xlu0 %1362
      %1364 = vrot.lane.b32.xlu0 %v400, 20
      %v1365 = vpop.permute.xlu0 %1364
      %1366 = vrot.lane.b32.xlu0 %v401, 20
      %v1367 = vpop.permute.xlu0 %1366
      %1368 = vrot.lane.b32.xlu0 %v402, 20
      %v1369 = vpop.permute.xlu0 %1368
      %1370 = vrot.lane.b32.xlu0 %v403, 20
      %v1371 = vpop.permute.xlu0 %1370
      %1372 = vrot.lane.b32.xlu0 %v404, 20
      %v1373 = vpop.permute.xlu0 %1372
      %1374 = vrot.lane.b32.xlu0 %v405, 20
      %v1375 = vpop.permute.xlu0 %1374
      %1376 = vrot.lane.b32.xlu0 %v406, 20
      %v1377 = vpop.permute.xlu0 %1376
      %1378 = vrot.lane.b32.xlu0 %v407, 20
      %v1379 = vpop.permute.xlu0 %1378
      %1380 = vrot.lane.b32.xlu0 %v408, 20
      %v1381 = vpop.permute.xlu0 %1380
      %1382 = vrot.lane.b32.xlu0 %v409, 20
      %v1383 = vpop.permute.xlu0 %1382
      %1384 = vrot.lane.b32.xlu0 %v410, 20
      %v1385 = vpop.permute.xlu0 %1384
      %1386 = vrot.lane.b32.xlu0 %v411, 20
      %v1387 = vpop.permute.xlu0 %1386
      %1388 = vrot.lane.b32.xlu0 %v412, 20
      %v1389 = vpop.permute.xlu0 %1388
      %1390 = vrot.lane.b32.xlu0 %v413, 20
      %v1391 = vpop.permute.xlu0 %1390
      %1392 = vrot.lane.b32.xlu0 %v414, 20
      %v1393 = vpop.permute.xlu0 %1392
      %1394 = vrot.lane.b32.xlu0 %v415, 20
      %v1395 = vpop.permute.xlu0 %1394
      %1396 = vrot.lane.b32.xlu0 %v416, 20
      %v1397 = vpop.permute.xlu0 %1396
      %1398 = vrot.lane.b32.xlu0 %v417, 20
      %v1399 = vpop.permute.xlu0 %1398
      %1400 = vrot.lane.b32.xlu0 %v418, 20
      %v1401 = vpop.permute.xlu0 %1400
      %1402 = vrot.lane.b32.xlu0 %v419, 20
      %v1403 = vpop.permute.xlu0 %1402
      %1404 = vrot.lane.b32.xlu0 %v420, 20
      %v1405 = vpop.permute.xlu0 %1404
      %1406 = vrot.lane.b32.xlu0 %v421, 20
      %v1407 = vpop.permute.xlu0 %1406
      %1408 = vrot.lane.b32.xlu0 %v422, 20
      %v1409 = vpop.permute.xlu0 %1408
      %1410 = vrot.lane.b32.xlu0 %v423, 20
      %v1411 = vpop.permute.xlu0 %1410
      %1412 = vrot.lane.b32.xlu0 %v424, 20
      %v1413 = vpop.permute.xlu0 %1412
      %1414 = vrot.lane.b32.xlu0 %v425, 20
      %v1415 = vpop.permute.xlu0 %1414
      %1416 = vrot.lane.b32.xlu0 %v426, 20
      %v1417 = vpop.permute.xlu0 %1416
      %vm1467 = vcmask 195746
      %1468 = vst.msk [vmem:[#allocation3 - $0x2] sm:$0xfc] %vm1467, %v1321
      %vm1469 = vcmask 195744
      %1470 = vst.msk [vmem:[#allocation3 + $0x6] sm:$0xff] %vm1469, %v1323
      %1471 = vst.msk [vmem:[#allocation3 + $0xe] sm:$0xff] %vm1469, %v1325
      %1472 = vst.msk [vmem:[#allocation3 + $0x16] sm:$0xff] %vm1469, %v1327
      %1473 = vst.msk [vmem:[#allocation3 + $0x1e] sm:$0xff] %vm1469, %v1329
      %1474 = vst.msk [vmem:[#allocation3 + $0x26] sm:$0xff] %vm1469, %v1331
      %1475 = vst.msk [vmem:[#allocation3 + $0x2e] sm:$0xff] %vm1469, %v1333
      %1476 = vst.msk [vmem:[#allocation3 + $0x36] sm:$0xff] %vm1469, %v1335
      %1477 = vst.msk [vmem:[#allocation3 + $0x3e] sm:$0xff] %vm1469, %v1337
      %1478 = vst.msk [vmem:[#allocation3 + $0x46] sm:$0xff] %vm1469, %v1339
      %1479 = vst.msk [vmem:[#allocation3 + $0x4e] sm:$0xff] %vm1469, %v1341
      %1480 = vst.msk [vmem:[#allocation3 + $0x56] sm:$0xff] %vm1469, %v1343
      %1481 = vst.msk [vmem:[#allocation3 + $0x5e] sm:$0xff] %vm1469, %v1345
      %1482 = vst.msk [vmem:[#allocation3 + $0x66] sm:$0xff] %vm1469, %v1347
      %1483 = vst.msk [vmem:[#allocation3 + $0x6e] sm:$0xff] %vm1469, %v1349
      %1484 = vst.msk [vmem:[#allocation3 + $0x76] sm:$0xff] %vm1469, %v1351
      %1485 = vst.msk [vmem:[#allocation3 + $0x7e] sm:$0xff] %vm1469, %v1353
      %1486 = vst.msk [vmem:[#allocation3 + $0x86] sm:$0xff] %vm1469, %v1355
      %1487 = vst.msk [vmem:[#allocation3 + $0x8e] sm:$0xff] %vm1469, %v1357
      %1488 = vst.msk [vmem:[#allocation3 + $0x96] sm:$0xff] %vm1469, %v1359
      %1489 = vst.msk [vmem:[#allocation3 + $0x9e] sm:$0xff] %vm1469, %v1361
      %1490 = vst.msk [vmem:[#allocation3 + $0xa6] sm:$0xff] %vm1469, %v1363
      %1491 = vst.msk [vmem:[#allocation3 + $0xae] sm:$0xff] %vm1469, %v1365
      %1492 = vst.msk [vmem:[#allocation3 + $0xb6] sm:$0xff] %vm1469, %v1367
      %1493 = vst.msk [vmem:[#allocation3 + $0xbe] sm:$0xff] %vm1469, %v1369
      %1494 = vst.msk [vmem:[#allocation3 + $0xc6] sm:$0xff] %vm1469, %v1371
      %1495 = vst.msk [vmem:[#allocation3 + $0xce] sm:$0xff] %vm1469, %v1373
      %1496 = vst.msk [vmem:[#allocation3 + $0xd6] sm:$0xff] %vm1469, %v1375
      %1497 = vst.msk [vmem:[#allocation3 + $0xde] sm:$0xff] %vm1469, %v1377
      %1498 = vst.msk [vmem:[#allocation3 + $0xe6] sm:$0xff] %vm1469, %v1379
      %1499 = vst.msk [vmem:[#allocation3 + $0xee] sm:$0xff] %vm1469, %v1381
      %1500 = vst.msk [vmem:[#allocation3 + $0xf6] sm:$0xff] %vm1469, %v1383
      %1501 = vst.msk [vmem:[#allocation3 + $0xfe] sm:$0xff] %vm1469, %v1385
      %1502 = vst.msk [vmem:[#allocation3 + $0x106] sm:$0xff] %vm1469, %v1387
      %1503 = vst.msk [vmem:[#allocation3 + $0x10e] sm:$0xff] %vm1469, %v1389
      %1504 = vst.msk [vmem:[#allocation3 + $0x116] sm:$0xff] %vm1469, %v1391
      %1505 = vst.msk [vmem:[#allocation3 + $0x11e] sm:$0xff] %vm1469, %v1393
      %1506 = vst.msk [vmem:[#allocation3 + $0x126] sm:$0xff] %vm1469, %v1395
      %1507 = vst.msk [vmem:[#allocation3 + $0x12e] sm:$0xff] %vm1469, %v1397
      %1508 = vst.msk [vmem:[#allocation3 + $0x136] sm:$0xff] %vm1469, %v1399
      %1509 = vst.msk [vmem:[#allocation3 + $0x13e] sm:$0xff] %vm1469, %v1401
      %1510 = vst.msk [vmem:[#allocation3 + $0x146] sm:$0xff] %vm1469, %v1403
      %1511 = vst.msk [vmem:[#allocation3 + $0x14e] sm:$0xff] %vm1469, %v1405
      %1512 = vst.msk [vmem:[#allocation3 + $0x156] sm:$0xff] %vm1469, %v1407
      %1513 = vst.msk [vmem:[#allocation3 + $0x15e] sm:$0xff] %vm1469, %v1409
      %1514 = vst.msk [vmem:[#allocation3 + $0x166] sm:$0xff] %vm1469, %v1411
      %1515 = vst.msk [vmem:[#allocation3 + $0x16e] sm:$0xff] %vm1469, %v1413
      %1516 = vst.msk [vmem:[#allocation3 + $0x176] sm:$0xff] %vm1469, %v1415
      %vm1517 = vcmask 189600
      %1518 = vst.msk [vmem:[#allocation3 + $0x17e] sm:$0x3] %vm1517, %v1417
      %1521 = vrot.lane.b32.xlu0 %v381, 24
      %v1522 = vpop.permute.xlu0 %1521
      %1523 = vrot.lane.b32.xlu0 %v382, 24
      %v1524 = vpop.permute.xlu0 %1523
      %1525 = vrot.lane.b32.xlu0 %v383, 24
      %v1526 = vpop.permute.xlu0 %1525
      %1527 = vrot.lane.b32.xlu0 %v384, 24
      %v1528 = vpop.permute.xlu0 %1527
      %1529 = vrot.lane.b32.xlu0 %v385, 24
      %v1530 = vpop.permute.xlu0 %1529
      %1531 = vrot.lane.b32.xlu0 %v386, 24
      %v1532 = vpop.permute.xlu0 %1531
      %1533 = vrot.lane.b32.xlu0 %v387, 24
      %v1534 = vpop.permute.xlu0 %1533
      %1535 = vrot.lane.b32.xlu0 %v388, 24
      %v1536 = vpop.permute.xlu0 %1535
      %1537 = vrot.lane.b32.xlu0 %v389, 24
      %v1538 = vpop.permute.xlu0 %1537
      %1539 = vrot.lane.b32.xlu0 %v390, 24
      %v1540 = vpop.permute.xlu0 %1539
      %1541 = vrot.lane.b32.xlu0 %v391, 24
      %v1542 = vpop.permute.xlu0 %1541
      %1543 = vrot.lane.b32.xlu0 %v392, 24
      %v1544 = vpop.permute.xlu0 %1543
      %1545 = vrot.lane.b32.xlu0 %v393, 24
      %v1546 = vpop.permute.xlu0 %1545
      %1547 = vrot.lane.b32.xlu0 %v394, 24
      %v1548 = vpop.permute.xlu0 %1547
      %1549 = vrot.lane.b32.xlu0 %v395, 24
      %v1550 = vpop.permute.xlu0 %1549
      %1551 = vrot.lane.b32.xlu0 %v396, 24
      %v1552 = vpop.permute.xlu0 %1551
      %1553 = vrot.lane.b32.xlu0 %v397, 24
      %v1554 = vpop.permute.xlu0 %1553
      %1555 = vrot.lane.b32.xlu0 %v398, 24
      %v1556 = vpop.permute.xlu0 %1555
      %1557 = vrot.lane.b32.xlu0 %v399, 24
      %v1558 = vpop.permute.xlu0 %1557
      %1559 = vrot.lane.b32.xlu0 %v400, 24
      %v1560 = vpop.permute.xlu0 %1559
      %1561 = vrot.lane.b32.xlu0 %v401, 24
      %v1562 = vpop.permute.xlu0 %1561
      %1563 = vrot.lane.b32.xlu0 %v402, 24
      %v1564 = vpop.permute.xlu0 %1563
      %1565 = vrot.lane.b32.xlu0 %v403, 24
      %v1566 = vpop.permute.xlu0 %1565
      %1567 = vrot.lane.b32.xlu0 %v404, 24
      %v1568 = vpop.permute.xlu0 %1567
      %1569 = vrot.lane.b32.xlu0 %v405, 24
      %v1570 = vpop.permute.xlu0 %1569
      %1571 = vrot.lane.b32.xlu0 %v406, 24
      %v1572 = vpop.permute.xlu0 %1571
      %1573 = vrot.lane.b32.xlu0 %v407, 24
      %v1574 = vpop.permute.xlu0 %1573
      %1575 = vrot.lane.b32.xlu0 %v408, 24
      %v1576 = vpop.permute.xlu0 %1575
      %1577 = vrot.lane.b32.xlu0 %v409, 24
      %v1578 = vpop.permute.xlu0 %1577
      %1579 = vrot.lane.b32.xlu0 %v410, 24
      %v1580 = vpop.permute.xlu0 %1579
      %1581 = vrot.lane.b32.xlu0 %v411, 24
      %v1582 = vpop.permute.xlu0 %1581
      %1583 = vrot.lane.b32.xlu0 %v412, 24
      %v1584 = vpop.permute.xlu0 %1583
      %1585 = vrot.lane.b32.xlu0 %v413, 24
      %v1586 = vpop.permute.xlu0 %1585
      %1587 = vrot.lane.b32.xlu0 %v414, 24
      %v1588 = vpop.permute.xlu0 %1587
      %1589 = vrot.lane.b32.xlu0 %v415, 24
      %v1590 = vpop.permute.xlu0 %1589
      %1591 = vrot.lane.b32.xlu0 %v416, 24
      %v1592 = vpop.permute.xlu0 %1591
      %1593 = vrot.lane.b32.xlu0 %v417, 24
      %v1594 = vpop.permute.xlu0 %1593
      %1595 = vrot.lane.b32.xlu0 %v418, 24
      %v1596 = vpop.permute.xlu0 %1595
      %1597 = vrot.lane.b32.xlu0 %v419, 24
      %v1598 = vpop.permute.xlu0 %1597
      %1599 = vrot.lane.b32.xlu0 %v420, 24
      %v1600 = vpop.permute.xlu0 %1599
      %1601 = vrot.lane.b32.xlu0 %v421, 24
      %v1602 = vpop.permute.xlu0 %1601
      %1603 = vrot.lane.b32.xlu0 %v422, 24
      %v1604 = vpop.permute.xlu0 %1603
      %1605 = vrot.lane.b32.xlu0 %v423, 24
      %v1606 = vpop.permute.xlu0 %1605
      %1607 = vrot.lane.b32.xlu0 %v424, 24
      %v1608 = vpop.permute.xlu0 %1607
      %1609 = vrot.lane.b32.xlu0 %v425, 24
      %v1610 = vpop.permute.xlu0 %1609
      %1611 = vrot.lane.b32.xlu0 %v426, 24
      %v1612 = vpop.permute.xlu0 %1611
      %1613 = vrot.lane.b32.xlu0 %v427, 24
      %v1614 = vpop.permute.xlu0 %1613
      %1615 = vrot.lane.b32.xlu0 %v428, 24
      %v1616 = vpop.permute.xlu0 %1615
      %vm1665 = vcmask 228544
      %1666 = vst.msk [vmem:[#allocation3] sm:$0xff] %vm1665, %v1522
      %1667 = vst.msk [vmem:[#allocation3 + $0x8] sm:$0xff] %vm1665, %v1524
      %1668 = vst.msk [vmem:[#allocation3 + $0x10] sm:$0xff] %vm1665, %v1526
      %1669 = vst.msk [vmem:[#allocation3 + $0x18] sm:$0xff] %vm1665, %v1528
      %1670 = vst.msk [vmem:[#allocation3 + $0x20] sm:$0xff] %vm1665, %v1530
      %1671 = vst.msk [vmem:[#allocation3 + $0x28] sm:$0xff] %vm1665, %v1532
      %1672 = vst.msk [vmem:[#allocation3 + $0x30] sm:$0xff] %vm1665, %v1534
      %1673 = vst.msk [vmem:[#allocation3 + $0x38] sm:$0xff] %vm1665, %v1536
      %1674 = vst.msk [vmem:[#allocation3 + $0x40] sm:$0xff] %vm1665, %v1538
      %1675 = vst.msk [vmem:[#allocation3 + $0x48] sm:$0xff] %vm1665, %v1540
      %1676 = vst.msk [vmem:[#allocation3 + $0x50] sm:$0xff] %vm1665, %v1542
      %1677 = vst.msk [vmem:[#allocation3 + $0x58] sm:$0xff] %vm1665, %v1544
      %1678 = vst.msk [vmem:[#allocation3 + $0x60] sm:$0xff] %vm1665, %v1546
      %1679 = vst.msk [vmem:[#allocation3 + $0x68] sm:$0xff] %vm1665, %v1548
      %1680 = vst.msk [vmem:[#allocation3 + $0x70] sm:$0xff] %vm1665, %v1550
      %1681 = vst.msk [vmem:[#allocation3 + $0x78] sm:$0xff] %vm1665, %v1552
      %1682 = vst.msk [vmem:[#allocation3 + $0x80] sm:$0xff] %vm1665, %v1554
      %1683 = vst.msk [vmem:[#allocation3 + $0x88] sm:$0xff] %vm1665, %v1556
      %1684 = vst.msk [vmem:[#allocation3 + $0x90] sm:$0xff] %vm1665, %v1558
      %1685 = vst.msk [vmem:[#allocation3 + $0x98] sm:$0xff] %vm1665, %v1560
      %1686 = vst.msk [vmem:[#allocation3 + $0xa0] sm:$0xff] %vm1665, %v1562
      %1687 = vst.msk [vmem:[#allocation3 + $0xa8] sm:$0xff] %vm1665, %v1564
      %1688 = vst.msk [vmem:[#allocation3 + $0xb0] sm:$0xff] %vm1665, %v1566
      %1689 = vst.msk [vmem:[#allocation3 + $0xb8] sm:$0xff] %vm1665, %v1568
      %1690 = vst.msk [vmem:[#allocation3 + $0xc0] sm:$0xff] %vm1665, %v1570
      %1691 = vst.msk [vmem:[#allocation3 + $0xc8] sm:$0xff] %vm1665, %v1572
      %1692 = vst.msk [vmem:[#allocation3 + $0xd0] sm:$0xff] %vm1665, %v1574
      %1693 = vst.msk [vmem:[#allocation3 + $0xd8] sm:$0xff] %vm1665, %v1576
      %1694 = vst.msk [vmem:[#allocation3 + $0xe0] sm:$0xff] %vm1665, %v1578
      %1695 = vst.msk [vmem:[#allocation3 + $0xe8] sm:$0xff] %vm1665, %v1580
      %1696 = vst.msk [vmem:[#allocation3 + $0xf0] sm:$0xff] %vm1665, %v1582
      %1697 = vst.msk [vmem:[#allocation3 + $0xf8] sm:$0xff] %vm1665, %v1584
      %1698 = vst.msk [vmem:[#allocation3 + $0x100] sm:$0xff] %vm1665, %v1586
      %1699 = vst.msk [vmem:[#allocation3 + $0x108] sm:$0xff] %vm1665, %v1588
      %1700 = vst.msk [vmem:[#allocation3 + $0x110] sm:$0xff] %vm1665, %v1590
      %1701 = vst.msk [vmem:[#allocation3 + $0x118] sm:$0xff] %vm1665, %v1592
      %1702 = vst.msk [vmem:[#allocation3 + $0x120] sm:$0xff] %vm1665, %v1594
      %1703 = vst.msk [vmem:[#allocation3 + $0x128] sm:$0xff] %vm1665, %v1596
      %1704 = vst.msk [vmem:[#allocation3 + $0x130] sm:$0xff] %vm1665, %v1598
      %1705 = vst.msk [vmem:[#allocation3 + $0x138] sm:$0xff] %vm1665, %v1600
      %1706 = vst.msk [vmem:[#allocation3 + $0x140] sm:$0xff] %vm1665, %v1602
      %1707 = vst.msk [vmem:[#allocation3 + $0x148] sm:$0xff] %vm1665, %v1604
      %1708 = vst.msk [vmem:[#allocation3 + $0x150] sm:$0xff] %vm1665, %v1606
      %1709 = vst.msk [vmem:[#allocation3 + $0x158] sm:$0xff] %vm1665, %v1608
      %1710 = vst.msk [vmem:[#allocation3 + $0x160] sm:$0xff] %vm1665, %v1610
      %1711 = vst.msk [vmem:[#allocation3 + $0x168] sm:$0xff] %vm1665, %v1612
      %1712 = vst.msk [vmem:[#allocation3 + $0x170] sm:$0xff] %vm1665, %v1614
      %1713 = vst.msk [vmem:[#allocation3 + $0x178] sm:$0xff] %vm1665, %v1616
      %1715 = vrot.lane.b32.xlu0 %v381, 28
      %v1716 = vpop.permute.xlu0 %1715
      %1717 = vrot.lane.b32.xlu0 %v382, 28
      %v1718 = vpop.permute.xlu0 %1717
      %1719 = vrot.lane.b32.xlu0 %v383, 28
      %v1720 = vpop.permute.xlu0 %1719
      %1721 = vrot.lane.b32.xlu0 %v384, 28
      %v1722 = vpop.permute.xlu0 %1721
      %1723 = vrot.lane.b32.xlu0 %v385, 28
      %v1724 = vpop.permute.xlu0 %1723
      %1725 = vrot.lane.b32.xlu0 %v386, 28
      %v1726 = vpop.permute.xlu0 %1725
      %1727 = vrot.lane.b32.xlu0 %v387, 28
      %v1728 = vpop.permute.xlu0 %1727
      %1729 = vrot.lane.b32.xlu0 %v388, 28
      %v1730 = vpop.permute.xlu0 %1729
      %1731 = vrot.lane.b32.xlu0 %v389, 28
      %v1732 = vpop.permute.xlu0 %1731
      %1733 = vrot.lane.b32.xlu0 %v390, 28
      %v1734 = vpop.permute.xlu0 %1733
      %1735 = vrot.lane.b32.xlu0 %v391, 28
      %v1736 = vpop.permute.xlu0 %1735
      %1737 = vrot.lane.b32.xlu0 %v392, 28
      %v1738 = vpop.permute.xlu0 %1737
      %1739 = vrot.lane.b32.xlu0 %v393, 28
      %v1740 = vpop.permute.xlu0 %1739
      %1741 = vrot.lane.b32.xlu0 %v394, 28
      %v1742 = vpop.permute.xlu0 %1741
      %1743 = vrot.lane.b32.xlu0 %v395, 28
      %v1744 = vpop.permute.xlu0 %1743
      %1745 = vrot.lane.b32.xlu0 %v396, 28
      %v1746 = vpop.permute.xlu0 %1745
      %1747 = vrot.lane.b32.xlu0 %v397, 28
      %v1748 = vpop.permute.xlu0 %1747
      %1749 = vrot.lane.b32.xlu0 %v398, 28
      %v1750 = vpop.permute.xlu0 %1749
      %1751 = vrot.lane.b32.xlu0 %v399, 28
      %v1752 = vpop.permute.xlu0 %1751
      %1753 = vrot.lane.b32.xlu0 %v400, 28
      %v1754 = vpop.permute.xlu0 %1753
      %1755 = vrot.lane.b32.xlu0 %v401, 28
      %v1756 = vpop.permute.xlu0 %1755
      %1757 = vrot.lane.b32.xlu0 %v402, 28
      %v1758 = vpop.permute.xlu0 %1757
      %1759 = vrot.lane.b32.xlu0 %v403, 28
      %v1760 = vpop.permute.xlu0 %1759
      %1761 = vrot.lane.b32.xlu0 %v404, 28
      %v1762 = vpop.permute.xlu0 %1761
      %1763 = vrot.lane.b32.xlu0 %v405, 28
      %v1764 = vpop.permute.xlu0 %1763
      %1765 = vrot.lane.b32.xlu0 %v406, 28
      %v1766 = vpop.permute.xlu0 %1765
      %1767 = vrot.lane.b32.xlu0 %v407, 28
      %v1768 = vpop.permute.xlu0 %1767
      %1769 = vrot.lane.b32.xlu0 %v408, 28
      %v1770 = vpop.permute.xlu0 %1769
      %1771 = vrot.lane.b32.xlu0 %v409, 28
      %v1772 = vpop.permute.xlu0 %1771
      %1773 = vrot.lane.b32.xlu0 %v410, 28
      %v1774 = vpop.permute.xlu0 %1773
      %1775 = vrot.lane.b32.xlu0 %v411, 28
      %v1776 = vpop.permute.xlu0 %1775
      %1777 = vrot.lane.b32.xlu0 %v412, 28
      %v1778 = vpop.permute.xlu0 %1777
      %1779 = vrot.lane.b32.xlu0 %v413, 28
      %v1780 = vpop.permute.xlu0 %1779
      %1781 = vrot.lane.b32.xlu0 %v414, 28
      %v1782 = vpop.permute.xlu0 %1781
      %1783 = vrot.lane.b32.xlu0 %v415, 28
      %v1784 = vpop.permute.xlu0 %1783
      %1785 = vrot.lane.b32.xlu0 %v416, 28
      %v1786 = vpop.permute.xlu0 %1785
      %1787 = vrot.lane.b32.xlu0 %v417, 28
      %v1788 = vpop.permute.xlu0 %1787
      %1789 = vrot.lane.b32.xlu0 %v418, 28
      %v1790 = vpop.permute.xlu0 %1789
      %1791 = vrot.lane.b32.xlu0 %v419, 28
      %v1792 = vpop.permute.xlu0 %1791
      %1793 = vrot.lane.b32.xlu0 %v420, 28
      %v1794 = vpop.permute.xlu0 %1793
      %1795 = vrot.lane.b32.xlu0 %v421, 28
      %v1796 = vpop.permute.xlu0 %1795
      %1797 = vrot.lane.b32.xlu0 %v422, 28
      %v1798 = vpop.permute.xlu0 %1797
      %1799 = vrot.lane.b32.xlu0 %v423, 28
      %v1800 = vpop.permute.xlu0 %1799
      %1801 = vrot.lane.b32.xlu0 %v424, 28
      %v1802 = vpop.permute.xlu0 %1801
      %1803 = vrot.lane.b32.xlu0 %v425, 28
      %v1804 = vpop.permute.xlu0 %1803
      %1805 = vrot.lane.b32.xlu0 %v426, 28
      %v1806 = vpop.permute.xlu0 %1805
      %1807 = vrot.lane.b32.xlu0 %v427, 28
      %v1808 = vpop.permute.xlu0 %1807
      %1809 = vrot.lane.b32.xlu0 %v428, 28
      %v1810 = vpop.permute.xlu0 %1809
      %1811 = vrot.lane.b32.xlu0 %v429, 28
      %v1812 = vpop.permute.xlu0 %1811
      %vm1862 = vcmask 261345
      %1863 = vst.msk [vmem:[#allocation3 - $0x1] sm:$0xfe] %vm1862, %v1716
      %vm1864 = vcmask 261344
      %1865 = vst.msk [vmem:[#allocation3 + $0x7] sm:$0xff] %vm1864, %v1718
      %1866 = vst.msk [vmem:[#allocation3 + $0xf] sm:$0xff] %vm1864, %v1720
      %1867 = vst.msk [vmem:[#allocation3 + $0x17] sm:$0xff] %vm1864, %v1722
      %1868 = vst.msk [vmem:[#allocation3 + $0x1f] sm:$0xff] %vm1864, %v1724
      %1869 = vst.msk [vmem:[#allocation3 + $0x27] sm:$0xff] %vm1864, %v1726
      %1870 = vst.msk [vmem:[#allocation3 + $0x2f] sm:$0xff] %vm1864, %v1728
      %1871 = vst.msk [vmem:[#allocation3 + $0x37] sm:$0xff] %vm1864, %v1730
      %1872 = vst.msk [vmem:[#allocation3 + $0x3f] sm:$0xff] %vm1864, %v1732
      %1873 = vst.msk [vmem:[#allocation3 + $0x47] sm:$0xff] %vm1864, %v1734
      %1874 = vst.msk [vmem:[#allocation3 + $0x4f] sm:$0xff] %vm1864, %v1736
      %1875 = vst.msk [vmem:[#allocation3 + $0x57] sm:$0xff] %vm1864, %v1738
      %1876 = vst.msk [vmem:[#allocation3 + $0x5f] sm:$0xff] %vm1864, %v1740
      %1877 = vst.msk [vmem:[#allocation3 + $0x67] sm:$0xff] %vm1864, %v1742
      %1878 = vst.msk [vmem:[#allocation3 + $0x6f] sm:$0xff] %vm1864, %v1744
      %1879 = vst.msk [vmem:[#allocation3 + $0x77] sm:$0xff] %vm1864, %v1746
      %1880 = vst.msk [vmem:[#allocation3 + $0x7f] sm:$0xff] %vm1864, %v1748
      %1881 = vst.msk [vmem:[#allocation3 + $0x87] sm:$0xff] %vm1864, %v1750
      %1882 = vst.msk [vmem:[#allocation3 + $0x8f] sm:$0xff] %vm1864, %v1752
      %1883 = vst.msk [vmem:[#allocation3 + $0x97] sm:$0xff] %vm1864, %v1754
      %1884 = vst.msk [vmem:[#allocation3 + $0x9f] sm:$0xff] %vm1864, %v1756
      %1885 = vst.msk [vmem:[#allocation3 + $0xa7] sm:$0xff] %vm1864, %v1758
      %1886 = vst.msk [vmem:[#allocation3 + $0xaf] sm:$0xff] %vm1864, %v1760
      %1887 = vst.msk [vmem:[#allocation3 + $0xb7] sm:$0xff] %vm1864, %v1762
      %1888 = vst.msk [vmem:[#allocation3 + $0xbf] sm:$0xff] %vm1864, %v1764
      %1889 = vst.msk [vmem:[#allocation3 + $0xc7] sm:$0xff] %vm1864, %v1766
      %1890 = vst.msk [vmem:[#allocation3 + $0xcf] sm:$0xff] %vm1864, %v1768
      %1891 = vst.msk [vmem:[#allocation3 + $0xd7] sm:$0xff] %vm1864, %v1770
      %1892 = vst.msk [vmem:[#allocation3 + $0xdf] sm:$0xff] %vm1864, %v1772
      %1893 = vst.msk [vmem:[#allocation3 + $0xe7] sm:$0xff] %vm1864, %v1774
      %1894 = vst.msk [vmem:[#allocation3 + $0xef] sm:$0xff] %vm1864, %v1776
      %1895 = vst.msk [vmem:[#allocation3 + $0xf7] sm:$0xff] %vm1864, %v1778
      %1896 = vst.msk [vmem:[#allocation3 + $0xff] sm:$0xff] %vm1864, %v1780
      %1897 = vst.msk [vmem:[#allocation3 + $0x107] sm:$0xff] %vm1864, %v1782
      %1898 = vst.msk [vmem:[#allocation3 + $0x10f] sm:$0xff] %vm1864, %v1784
      %1899 = vst.msk [vmem:[#allocation3 + $0x117] sm:$0xff] %vm1864, %v1786
      %1900 = vst.msk [vmem:[#allocation3 + $0x11f] sm:$0xff] %vm1864, %v1788
      %1901 = vst.msk [vmem:[#allocation3 + $0x127] sm:$0xff] %vm1864, %v1790
      %1902 = vst.msk [vmem:[#allocation3 + $0x12f] sm:$0xff] %vm1864, %v1792
      %1903 = vst.msk [vmem:[#allocation3 + $0x137] sm:$0xff] %vm1864, %v1794
      %1904 = vst.msk [vmem:[#allocation3 + $0x13f] sm:$0xff] %vm1864, %v1796
      %1905 = vst.msk [vmem:[#allocation3 + $0x147] sm:$0xff] %vm1864, %v1798
      %1906 = vst.msk [vmem:[#allocation3 + $0x14f] sm:$0xff] %vm1864, %v1800
      %1907 = vst.msk [vmem:[#allocation3 + $0x157] sm:$0xff] %vm1864, %v1802
      %1908 = vst.msk [vmem:[#allocation3 + $0x15f] sm:$0xff] %vm1864, %v1804
      %1909 = vst.msk [vmem:[#allocation3 + $0x167] sm:$0xff] %vm1864, %v1806
      %1910 = vst.msk [vmem:[#allocation3 + $0x16f] sm:$0xff] %vm1864, %v1808
      %1911 = vst.msk [vmem:[#allocation3 + $0x177] sm:$0xff] %vm1864, %v1810
      %vm1912 = vcmask 254176
      %1913 = vst.msk [vmem:[#allocation3 + $0x17f] sm:$0x1] %vm1912, %v1812
      %1914 = vrot.lane.b32.xlu0 %v381, 32
      %v1915 = vpop.permute.xlu0 %1914
      %1916 = vrot.lane.b32.xlu0 %v382, 32
      %v1917 = vpop.permute.xlu0 %1916
      %1918 = vrot.lane.b32.xlu0 %v383, 32
      %v1919 = vpop.permute.xlu0 %1918
      %1920 = vrot.lane.b32.xlu0 %v384, 32
      %v1921 = vpop.permute.xlu0 %1920
      %1922 = vrot.lane.b32.xlu0 %v385, 32
      %v1923 = vpop.permute.xlu0 %1922
      %1924 = vrot.lane.b32.xlu0 %v386, 32
      %v1925 = vpop.permute.xlu0 %1924
      %1926 = vrot.lane.b32.xlu0 %v387, 32
      %v1927 = vpop.permute.xlu0 %1926
      %1928 = vrot.lane.b32.xlu0 %v388, 32
      %v1929 = vpop.permute.xlu0 %1928
      %1930 = vrot.lane.b32.xlu0 %v389, 32
      %v1931 = vpop.permute.xlu0 %1930
      %1932 = vrot.lane.b32.xlu0 %v390, 32
      %v1933 = vpop.permute.xlu0 %1932
      %1934 = vrot.lane.b32.xlu0 %v391, 32
      %v1935 = vpop.permute.xlu0 %1934
      %1936 = vrot.lane.b32.xlu0 %v392, 32
      %v1937 = vpop.permute.xlu0 %1936
      %1938 = vrot.lane.b32.xlu0 %v393, 32
      %v1939 = vpop.permute.xlu0 %1938
      %1940 = vrot.lane.b32.xlu0 %v394, 32
      %v1941 = vpop.permute.xlu0 %1940
      %1942 = vrot.lane.b32.xlu0 %v395, 32
      %v1943 = vpop.permute.xlu0 %1942
      %1944 = vrot.lane.b32.xlu0 %v396, 32
      %v1945 = vpop.permute.xlu0 %1944
      %1946 = vrot.lane.b32.xlu0 %v397, 32
      %v1947 = vpop.permute.xlu0 %1946
      %1948 = vrot.lane.b32.xlu0 %v398, 32
      %v1949 = vpop.permute.xlu0 %1948
      %1950 = vrot.lane.b32.xlu0 %v399, 32
      %v1951 = vpop.permute.xlu0 %1950
      %1952 = vrot.lane.b32.xlu0 %v400, 32
      %v1953 = vpop.permute.xlu0 %1952
      %1954 = vrot.lane.b32.xlu0 %v401, 32
      %v1955 = vpop.permute.xlu0 %1954
      %1956 = vrot.lane.b32.xlu0 %v402, 32
      %v1957 = vpop.permute.xlu0 %1956
      %1958 = vrot.lane.b32.xlu0 %v403, 32
      %v1959 = vpop.permute.xlu0 %1958
      %1960 = vrot.lane.b32.xlu0 %v404, 32
      %v1961 = vpop.permute.xlu0 %1960
      %1962 = vrot.lane.b32.xlu0 %v405, 32
      %v1963 = vpop.permute.xlu0 %1962
      %1964 = vrot.lane.b32.xlu0 %v406, 32
      %v1965 = vpop.permute.xlu0 %1964
      %1966 = vrot.lane.b32.xlu0 %v407, 32
      %v1967 = vpop.permute.xlu0 %1966
      %1968 = vrot.lane.b32.xlu0 %v408, 32
      %v1969 = vpop.permute.xlu0 %1968
      %1970 = vrot.lane.b32.xlu0 %v409, 32
      %v1971 = vpop.permute.xlu0 %1970
      %1972 = vrot.lane.b32.xlu0 %v410, 32
      %v1973 = vpop.permute.xlu0 %1972
      %1974 = vrot.lane.b32.xlu0 %v411, 32
      %v1975 = vpop.permute.xlu0 %1974
      %1976 = vrot.lane.b32.xlu0 %v412, 32
      %v1977 = vpop.permute.xlu0 %1976
      %1978 = vrot.lane.b32.xlu0 %v413, 32
      %v1979 = vpop.permute.xlu0 %1978
      %1980 = vrot.lane.b32.xlu0 %v414, 32
      %v1981 = vpop.permute.xlu0 %1980
      %1982 = vrot.lane.b32.xlu0 %v415, 32
      %v1983 = vpop.permute.xlu0 %1982
      %1984 = vrot.lane.b32.xlu0 %v416, 32
      %v1985 = vpop.permute.xlu0 %1984
      %1986 = vrot.lane.b32.xlu0 %v417, 32
      %v1987 = vpop.permute.xlu0 %1986
      %1988 = vrot.lane.b32.xlu0 %v418, 32
      %v1989 = vpop.permute.xlu0 %1988
      %1990 = vrot.lane.b32.xlu0 %v419, 32
      %v1991 = vpop.permute.xlu0 %1990
      %1992 = vrot.lane.b32.xlu0 %v420, 32
      %v1993 = vpop.permute.xlu0 %1992
      %1994 = vrot.lane.b32.xlu0 %v421, 32
      %v1995 = vpop.permute.xlu0 %1994
      %1996 = vrot.lane.b32.xlu0 %v422, 32
      %v1997 = vpop.permute.xlu0 %1996
      %1998 = vrot.lane.b32.xlu0 %v423, 32
      %v1999 = vpop.permute.xlu0 %1998
      %2000 = vrot.lane.b32.xlu0 %v424, 32
      %v2001 = vpop.permute.xlu0 %2000
      %2002 = vrot.lane.b32.xlu0 %v425, 32
      %v2003 = vpop.permute.xlu0 %2002
      %2004 = vrot.lane.b32.xlu0 %v426, 32
      %v2005 = vpop.permute.xlu0 %2004
      %2006 = vrot.lane.b32.xlu0 %v427, 32
      %v2007 = vpop.permute.xlu0 %2006
      %2008 = vrot.lane.b32.xlu0 %v428, 32
      %v2009 = vpop.permute.xlu0 %2008
      %2010 = vrot.lane.b32.xlu0 %v429, 32
      %v2011 = vpop.permute.xlu0 %2010
      %vm2061 = vcmask 294146
      %2062 = vst.msk [vmem:[#allocation3 - $0x2] sm:$0xfc] %vm2061, %v1915
      %vm2063 = vcmask 294144
      %2064 = vst.msk [vmem:[#allocation3 + $0x6] sm:$0xff] %vm2063, %v1917
      %2065 = vst.msk [vmem:[#allocation3 + $0xe] sm:$0xff] %vm2063, %v1919
      %2066 = vst.msk [vmem:[#allocation3 + $0x16] sm:$0xff] %vm2063, %v1921
      %2067 = vst.msk [vmem:[#allocation3 + $0x1e] sm:$0xff] %vm2063, %v1923
      %2068 = vst.msk [vmem:[#allocation3 + $0x26] sm:$0xff] %vm2063, %v1925
      %2069 = vst.msk [vmem:[#allocation3 + $0x2e] sm:$0xff] %vm2063, %v1927
      %2070 = vst.msk [vmem:[#allocation3 + $0x36] sm:$0xff] %vm2063, %v1929
      %2071 = vst.msk [vmem:[#allocation3 + $0x3e] sm:$0xff] %vm2063, %v1931
      %2072 = vst.msk [vmem:[#allocation3 + $0x46] sm:$0xff] %vm2063, %v1933
      %2073 = vst.msk [vmem:[#allocation3 + $0x4e] sm:$0xff] %vm2063, %v1935
      %2074 = vst.msk [vmem:[#allocation3 + $0x56] sm:$0xff] %vm2063, %v1937
      %2075 = vst.msk [vmem:[#allocation3 + $0x5e] sm:$0xff] %vm2063, %v1939
      %2076 = vst.msk [vmem:[#allocation3 + $0x66] sm:$0xff] %vm2063, %v1941
      %2077 = vst.msk [vmem:[#allocation3 + $0x6e] sm:$0xff] %vm2063, %v1943
      %2078 = vst.msk [vmem:[#allocation3 + $0x76] sm:$0xff] %vm2063, %v1945
      %2079 = vst.msk [vmem:[#allocation3 + $0x7e] sm:$0xff] %vm2063, %v1947
      %2080 = vst.msk [vmem:[#allocation3 + $0x86] sm:$0xff] %vm2063, %v1949
      %2081 = vst.msk [vmem:[#allocation3 + $0x8e] sm:$0xff] %vm2063, %v1951
      %2082 = vst.msk [vmem:[#allocation3 + $0x96] sm:$0xff] %vm2063, %v1953
      %2083 = vst.msk [vmem:[#allocation3 + $0x9e] sm:$0xff] %vm2063, %v1955
      %2084 = vst.msk [vmem:[#allocation3 + $0xa6] sm:$0xff] %vm2063, %v1957
      %2085 = vst.msk [vmem:[#allocation3 + $0xae] sm:$0xff] %vm2063, %v1959
      %2086 = vst.msk [vmem:[#allocation3 + $0xb6] sm:$0xff] %vm2063, %v1961
      %2087 = vst.msk [vmem:[#allocation3 + $0xbe] sm:$0xff] %vm2063, %v1963
      %2088 = vst.msk [vmem:[#allocation3 + $0xc6] sm:$0xff] %vm2063, %v1965
      %2089 = vst.msk [vmem:[#allocation3 + $0xce] sm:$0xff] %vm2063, %v1967
      %2090 = vst.msk [vmem:[#allocation3 + $0xd6] sm:$0xff] %vm2063, %v1969
      %2091 = vst.msk [vmem:[#allocation3 + $0xde] sm:$0xff] %vm2063, %v1971
      %2092 = vst.msk [vmem:[#allocation3 + $0xe6] sm:$0xff] %vm2063, %v1973
      %2093 = vst.msk [vmem:[#allocation3 + $0xee] sm:$0xff] %vm2063, %v1975
      %2094 = vst.msk [vmem:[#allocation3 + $0xf6] sm:$0xff] %vm2063, %v1977
      %2095 = vst.msk [vmem:[#allocation3 + $0xfe] sm:$0xff] %vm2063, %v1979
      %2096 = vst.msk [vmem:[#allocation3 + $0x106] sm:$0xff] %vm2063, %v1981
      %2097 = vst.msk [vmem:[#allocation3 + $0x10e] sm:$0xff] %vm2063, %v1983
      %2098 = vst.msk [vmem:[#allocation3 + $0x116] sm:$0xff] %vm2063, %v1985
      %2099 = vst.msk [vmem:[#allocation3 + $0x11e] sm:$0xff] %vm2063, %v1987
      %2100 = vst.msk [vmem:[#allocation3 + $0x126] sm:$0xff] %vm2063, %v1989
      %2101 = vst.msk [vmem:[#allocation3 + $0x12e] sm:$0xff] %vm2063, %v1991
      %2102 = vst.msk [vmem:[#allocation3 + $0x136] sm:$0xff] %vm2063, %v1993
      %2103 = vst.msk [vmem:[#allocation3 + $0x13e] sm:$0xff] %vm2063, %v1995
      %2104 = vst.msk [vmem:[#allocation3 + $0x146] sm:$0xff] %vm2063, %v1997
      %2105 = vst.msk [vmem:[#allocation3 + $0x14e] sm:$0xff] %vm2063, %v1999
      %2106 = vst.msk [vmem:[#allocation3 + $0x156] sm:$0xff] %vm2063, %v2001
      %2107 = vst.msk [vmem:[#allocation3 + $0x15e] sm:$0xff] %vm2063, %v2003
      %2108 = vst.msk [vmem:[#allocation3 + $0x166] sm:$0xff] %vm2063, %v2005
      %2109 = vst.msk [vmem:[#allocation3 + $0x16e] sm:$0xff] %vm2063, %v2007
      %2110 = vst.msk [vmem:[#allocation3 + $0x176] sm:$0xff] %vm2063, %v2009
      %vm2111 = vcmask 288000
      %2112 = vst.msk [vmem:[#allocation3 + $0x17e] sm:$0x3] %vm2111, %v2011
      %v2113 = vld [vmem:[#allocation3] sm:$0xff]
      %v2114 = vld [vmem:[#allocation3 + $0x8] sm:$0xff]
      %v2115 = vld [vmem:[#allocation3 + $0x10] sm:$0xff]
      %v2116 = vld [vmem:[#allocation3 + $0x18] sm:$0xff]
      %v2117 = vld [vmem:[#allocation3 + $0x20] sm:$0xff]
      %v2118 = vld [vmem:[#allocation3 + $0x28] sm:$0xff]
      %v2119 = vld [vmem:[#allocation3 + $0x30] sm:$0xff]
      %v2120 = vld [vmem:[#allocation3 + $0x38] sm:$0xff]
      %v2121 = vld [vmem:[#allocation3 + $0x40] sm:$0xff]
      %v2122 = vld [vmem:[#allocation3 + $0x48] sm:$0xff]
      %v2123 = vld [vmem:[#allocation3 + $0x50] sm:$0xff]
      %v2124 = vld [vmem:[#allocation3 + $0x58] sm:$0xff]
      %v2125 = vld [vmem:[#allocation3 + $0x60] sm:$0xff]
      %v2126 = vld [vmem:[#allocation3 + $0x68] sm:$0xff]
      %v2127 = vld [vmem:[#allocation3 + $0x70] sm:$0xff]
      %v2128 = vld [vmem:[#allocation3 + $0x78] sm:$0xff]
      %v2129 = vld [vmem:[#allocation3 + $0x80] sm:$0xff]
      %v2130 = vld [vmem:[#allocation3 + $0x88] sm:$0xff]
      %v2131 = vld [vmem:[#allocation3 + $0x90] sm:$0xff]
      %v2132 = vld [vmem:[#allocation3 + $0x98] sm:$0xff]
      %v2133 = vld [vmem:[#allocation3 + $0xa0] sm:$0xff]
      %v2134 = vld [vmem:[#allocation3 + $0xa8] sm:$0xff]
      %v2135 = vld [vmem:[#allocation3 + $0xb0] sm:$0xff]
      %v2136 = vld [vmem:[#allocation3 + $0xb8] sm:$0xff]
      %v2137 = vld [vmem:[#allocation3 + $0xc0] sm:$0xff]
      %v2138 = vld [vmem:[#allocation3 + $0xc8] sm:$0xff]
      %v2139 = vld [vmem:[#allocation3 + $0xd0] sm:$0xff]
      %v2140 = vld [vmem:[#allocation3 + $0xd8] sm:$0xff]
      %v2141 = vld [vmem:[#allocation3 + $0xe0] sm:$0xff]
      %v2142 = vld [vmem:[#allocation3 + $0xe8] sm:$0xff]
      %v2143 = vld [vmem:[#allocation3 + $0xf0] sm:$0xff]
      %v2144 = vld [vmem:[#allocation3 + $0xf8] sm:$0xff]
      %v2145 = vld [vmem:[#allocation3 + $0x100] sm:$0xff]
      %v2146 = vld [vmem:[#allocation3 + $0x108] sm:$0xff]
      %v2147 = vld [vmem:[#allocation3 + $0x110] sm:$0xff]
      %v2148 = vld [vmem:[#allocation3 + $0x118] sm:$0xff]
      %v2149 = vld [vmem:[#allocation3 + $0x120] sm:$0xff]
      %v2150 = vld [vmem:[#allocation3 + $0x128] sm:$0xff]
      %v2151 = vld [vmem:[#allocation3 + $0x130] sm:$0xff]
      %v2152 = vld [vmem:[#allocation3 + $0x138] sm:$0xff]
      %v2153 = vld [vmem:[#allocation3 + $0x140] sm:$0xff]
      %v2154 = vld [vmem:[#allocation3 + $0x148] sm:$0xff]
      %v2155 = vld [vmem:[#allocation3 + $0x150] sm:$0xff]
      %v2156 = vld [vmem:[#allocation3 + $0x158] sm:$0xff]
      %v2157 = vld [vmem:[#allocation3 + $0x160] sm:$0xff]
      %v2158 = vld [vmem:[#allocation3 + $0x168] sm:$0xff]
      %v2159 = vld [vmem:[#allocation3 + $0x170] sm:$0xff]
      %v2160 = vld [vmem:[#allocation3 + $0x178] sm:$0xff]
      %v2162 = vlaneseq
      %v2163 = vshrl.u32 %v2162, 7
      %v2164 = vsub.s32 0, %v2163
      %v2165 = vrot.slane %v291, %v2164
      %vm2167 = vcmask 293888
      %v2169 = vsel %vm2167, %v2113, 0
      %v2172 = vsel %vm2167, %v2114, 0
      %v2175 = vsel %vm2167, %v2115, 0
      %v2178 = vsel %vm2167, %v2116, 0
      %v2181 = vsel %vm2167, %v2117, 0
      %v2184 = vsel %vm2167, %v2118, 0
      %v2187 = vsel %vm2167, %v2119, 0
      %v2190 = vsel %vm2167, %v2120, 0
      %v2193 = vsel %vm2167, %v2121, 0
      %v2196 = vsel %vm2167, %v2122, 0
      %v2199 = vsel %vm2167, %v2123, 0
      %v2202 = vsel %vm2167, %v2124, 0
      %v2205 = vsel %vm2167, %v2125, 0
      %v2208 = vsel %vm2167, %v2126, 0
      %v2211 = vsel %vm2167, %v2127, 0
      %v2214 = vsel %vm2167, %v2128, 0
      %v2217 = vsel %vm2167, %v2129, 0
      %v2220 = vsel %vm2167, %v2130, 0
      %v2223 = vsel %vm2167, %v2131, 0
      %v2226 = vsel %vm2167, %v2132, 0
      %v2229 = vsel %vm2167, %v2133, 0
      %v2232 = vsel %vm2167, %v2134, 0
      %v2235 = vsel %vm2167, %v2135, 0
      %v2238 = vsel %vm2167, %v2136, 0
      %v2241 = vsel %vm2167, %v2137, 0
      %v2244 = vsel %vm2167, %v2138, 0
      %v2247 = vsel %vm2167, %v2139, 0
      %v2250 = vsel %vm2167, %v2140, 0
      %v2253 = vsel %vm2167, %v2141, 0
      %v2256 = vsel %vm2167, %v2142, 0
      %v2259 = vsel %vm2167, %v2143, 0
      %v2262 = vsel %vm2167, %v2144, 0
      %v2265 = vsel %vm2167, %v2145, 0
      %v2268 = vsel %vm2167, %v2146, 0
      %v2271 = vsel %vm2167, %v2147, 0
      %v2274 = vsel %vm2167, %v2148, 0
      %v2277 = vsel %vm2167, %v2149, 0
      %v2280 = vsel %vm2167, %v2150, 0
      %v2283 = vsel %vm2167, %v2151, 0
      %v2286 = vsel %vm2167, %v2152, 0
      %v2289 = vsel %vm2167, %v2153, 0
      %v2292 = vsel %vm2167, %v2154, 0
      %v2295 = vsel %vm2167, %v2155, 0
      %v2298 = vsel %vm2167, %v2156, 0
      %v2301 = vsel %vm2167, %v2157, 0
      %v2304 = vsel %vm2167, %v2158, 0
      %v2307 = vsel %vm2167, %v2159, 0
      %v2310 = vsel %vm2167, %v2160, 0
      %vm2312 = vcmask 1043456
      %v2314 = vsel %vm2312, %v285, 0
      %2316 = vmatprep.subr.mxu0 0.0
      %2317 = vmatpush1.msra.mxu0 %v281
      %2318 = vmatprep.subr.mxu0 0.0
      %2319 = vmatpush1.msra.mxu0 %v282
      %2320 = vmatprep.subr.mxu0 0.0
      %2321 = vmatpush1.msra.mxu0 %v283
      %2322 = vmatprep.subr.mxu0 0.0
      %2323 = vmatpush1.msra.mxu0 %v284
      %2324 = vmatprep.subr.mxu0 0.0
      %2325 = vmatpush1.msra.mxu0 %v2314
      %2326 = vmatprep.subr.mxu0 0.0
      %2327 = vmatpush1.msra.mxu0 0.0
      %2328 = vmatprep.subr.mxu0 0.0
      %2329 = vmatpush1.msra.mxu0 0.0
      %2330 = vmatprep.subr.mxu0 0.0
      %2331 = vmatpush1.msra.mxu0 0.0
      %2332 = vmatprep.subr.mxu0 0.0
      %2333 = vmatpush1.msra.mxu0 0.0
      %2334 = vmatprep.subr.mxu0 0.0
      %2335 = vmatpush1.msra.mxu0 0.0
      %2336 = vmatprep.subr.mxu0 0.0
      %2337 = vmatpush1.msra.mxu0 0.0
      %2338 = vmatprep.subr.mxu0 0.0
      %2339 = vmatpush1.msra.mxu0 0.0
      %2340 = vmatprep.subr.mxu0 0.0
      %2341 = vmatpush1.msra.mxu0 0.0
      %2342 = vmatprep.subr.mxu0 0.0
      %2343 = vmatpush1.msra.mxu0 0.0
      %2344 = vmatprep.subr.mxu0 0.0
      %2345 = vmatpush1.msra.mxu0 0.0
      %2346 = vmatprep.subr.mxu0 0.0
      %2347 = vmatpush1.msra.mxu0 0.0
      %2348 = vmatprep.subr.mxu0 0.0
      %2349 = vmatpush1.msra.mxu0 0.0
      %2350 = vmatprep.subr.mxu0 0.0
      %2351 = vmatpush1.msra.mxu0 0.0
      %2352 = vmatprep.subr.mxu0 0.0
      %2353 = vmatpush1.msra.mxu0 0.0
      %2354 = vmatprep.subr.mxu0 0.0
      %2355 = vmatpush1.msra.mxu0 0.0
      %2356 = vmatprep.subr.mxu0 0.0
      %2357 = vmatpush1.msra.mxu0 0.0
      %2358 = vmatprep.subr.mxu0 0.0
      %2359 = vmatpush1.msra.mxu0 0.0
      %2360 = vmatprep.subr.mxu0 0.0
      %2361 = vmatpush1.msra.mxu0 0.0
      %2362 = vmatprep.subr.mxu0 0.0
      %2363 = vmatpush1.msra.mxu0 0.0
      %2364 = vmatprep.subr.mxu0 0.0
      %2365 = vmatpush1.msra.mxu0 0.0
      %2366 = vmatprep.subr.mxu0 0.0
      %2367 = vmatpush1.msra.mxu0 0.0
      %2368 = vmatprep.subr.mxu0 0.0
      %2369 = vmatpush1.msra.mxu0 0.0
      %2370 = vmatprep.subr.mxu0 0.0
      %2371 = vmatpush1.msra.mxu0 0.0
      %2372 = vmatprep.subr.mxu0 0.0
      %2373 = vmatpush1.msra.mxu0 0.0
      %2374 = vmatprep.subr.mxu0 0.0
      %2375 = vmatpush1.msra.mxu0 0.0
      %2376 = vmatprep.subr.mxu0 0.0
      %2377 = vmatpush1.msra.mxu0 0.0
      %2378 = vmatprep.subr.mxu0 0.0
      %2379 = vmatpush1.msra.mxu0 0.0
      %2380 = vmatprep.mubr.f32.mxu0 0.0
      %2381 = vmatmul.mubr.f32.gmra.mrb[0].mxu0 %v2169
      %v2382 = vpop.f32.mrb[0].mxu0
      %v2383 = vadd.f32 %v2165, %v2382
      %v2384 = vpop.f32.mrb[0].mxu0
      %2385 = vmatprep.mubr.f32.mxu0 0.0
      %2386 = vmatmul.mubr.f32.gmra.mrb[0].mxu0 %v2172
      %v2387 = vpop.f32.mrb[0].mxu0
      %v2388 = vadd.f32 %v2165, %v2387
      %v2389 = vpop.f32.mrb[0].mxu0
      %2390 = vmatprep.mubr.f32.mxu0 0.0
      %2391 = vmatmul.mubr.f32.gmra.mrb[0].mxu0 %v2175
      %v2392 = vpop.f32.mrb[0].mxu0
      %v2393 = vpop.f32.mrb[0].mxu0
      %2394 = vmatprep.mubr.f32.mxu0 0.0
      %2395 = vmatmul.mubr.f32.gmra.mrb[0].mxu0 %v2178
      %v2396 = vpop.f32.mrb[0].mxu0
      %v2397 = vadd.f32 %v2165, %v2396
      %v2398 = vpop.f32.mrb[0].mxu0
      %2399 = vmatprep.mubr.f32.mxu0 0.0
      %2400 = vmatmul.mubr.f32.gmra.mrb[0].mxu0 %v2181
      %v2401 = vpop.f32.mrb[0].mxu0
      %v2402 = vadd.f32 %v2165, %v2401
      %v2403 = vpop.f32.mrb[0].mxu0
      %2404 = vmatprep.mubr.f32.mxu0 0.0
      %2405 = vmatmul.mubr.f32.gmra.mrb[0].mxu0 %v2184
      %v2406 = vpop.f32.mrb[0].mxu0
      %v2407 = vpop.f32.mrb[0].mxu0
      %2408 = vmatprep.mubr.f32.mxu0 0.0
      %2409 = vmatmul.mubr.f32.gmra.mrb[0].mxu0 %v2187
      %v2410 = vpop.f32.mrb[0].mxu0
      %v2411 = vadd.f32 %v2165, %v2410
      %v2412 = vpop.f32.mrb[0].mxu0
      %2413 = vmatprep.mubr.f32.mxu0 0.0
      %2414 = vmatmul.mubr.f32.gmra.mrb[0].mxu0 %v2190
      %v2415 = vpop.f32.mrb[0].mxu0
      %v2416 = vadd.f32 %v2165, %v2415
      %v2417 = vpop.f32.mrb[0].mxu0
      %2418 = vmatprep.mubr.f32.mxu0 0.0
      %2419 = vmatmul.mubr.f32.gmra.mrb[0].mxu0 %v2193
      %v2420 = vpop.f32.mrb[0].mxu0
      %v2421 = vpop.f32.mrb[0].mxu0
      %2422 = vmatprep.mubr.f32.mxu0 0.0
      %2423 = vmatmul.mubr.f32.gmra.mrb[0].mxu0 %v2196
      %v2424 = vpop.f32.mrb[0].mxu0
      %v2425 = vadd.f32 %v2165, %v2424
      %v2426 = vpop.f32.mrb[0].mxu0
      %2427 = vmatprep.mubr.f32.mxu0 0.0
      %2428 = vmatmul.mubr.f32.gmra.mrb[0].mxu0 %v2199
      %v2429 = vpop.f32.mrb[0].mxu0
      %v2430 = vadd.f32 %v2165, %v2429
      %v2431 = vpop.f32.mrb[0].mxu0
      %2432 = vmatprep.mubr.f32.mxu0 0.0
      %2433 = vmatmul.mubr.f32.gmra.mrb[0].mxu0 %v2202
      %v2434 = vpop.f32.mrb[0].mxu0
      %v2435 = vpop.f32.mrb[0].mxu0
      %2436 = vmatprep.mubr.f32.mxu0 0.0
      %2437 = vmatmul.mubr.f32.gmra.mrb[0].mxu0 %v2205
      %v2438 = vpop.f32.mrb[0].mxu0
      %v2439 = vadd.f32 %v2165, %v2438
      %v2440 = vpop.f32.mrb[0].mxu0
      %2441 = vmatprep.mubr.f32.mxu0 0.0
      %2442 = vmatmul.mubr.f32.gmra.mrb[0].mxu0 %v2208
      %v2443 = vpop.f32.mrb[0].mxu0
      %v2444 = vadd.f32 %v2165, %v2443
      %v2445 = vpop.f32.mrb[0].mxu0
      %2446 = vmatprep.mubr.f32.mxu0 0.0
      %2447 = vmatmul.mubr.f32.gmra.mrb[0].mxu0 %v2211
      %v2448 = vpop.f32.mrb[0].mxu0
      %v2449 = vpop.f32.mrb[0].mxu0
      %2450 = vmatprep.mubr.f32.mxu0 0.0
      %2451 = vmatmul.mubr.f32.gmra.mrb[0].mxu0 %v2214
      %v2452 = vpop.f32.mrb[0].mxu0
      %v2453 = vadd.f32 %v2165, %v2452
      %v2454 = vpop.f32.mrb[0].mxu0
      %2455 = vmatprep.mubr.f32.mxu0 0.0
      %2456 = vmatmul.mubr.f32.gmra.mrb[0].mxu0 %v2217
      %v2457 = vpop.f32.mrb[0].mxu0
      %v2458 = vadd.f32 %v2165, %v2457
      %v2459 = vpop.f32.mrb[0].mxu0
      %2460 = vmatprep.mubr.f32.mxu0 0.0
      %2461 = vmatmul.mubr.f32.gmra.mrb[0].mxu0 %v2220
      %v2462 = vpop.f32.mrb[0].mxu0
      %v2463 = vpop.f32.mrb[0].mxu0
      %2464 = vmatprep.mubr.f32.mxu0 0.0
      %2465 = vmatmul.mubr.f32.gmra.mrb[0].mxu0 %v2223
      %v2466 = vpop.f32.mrb[0].mxu0
      %v2467 = vadd.f32 %v2165, %v2466
      %v2468 = vpop.f32.mrb[0].mxu0
      %2469 = vmatprep.mubr.f32.mxu0 0.0
      %2470 = vmatmul.mubr.f32.gmra.mrb[0].mxu0 %v2226
      %v2471 = vpop.f32.mrb[0].mxu0
      %v2472 = vadd.f32 %v2165, %v2471
      %v2473 = vpop.f32.mrb[0].mxu0
      %2474 = vmatprep.mubr.f32.mxu0 0.0
      %2475 = vmatmul.mubr.f32.gmra.mrb[0].mxu0 %v2229
      %v2476 = vpop.f32.mrb[0].mxu0
      %v2477 = vpop.f32.mrb[0].mxu0
      %2478 = vmatprep.mubr.f32.mxu0 0.0
      %2479 = vmatmul.mubr.f32.gmra.mrb[0].mxu0 %v2232
      %v2480 = vpop.f32.mrb[0].mxu0
      %v2481 = vadd.f32 %v2165, %v2480
      %v2482 = vpop.f32.mrb[0].mxu0
      %2483 = vmatprep.mubr.f32.mxu0 0.0
      %2484 = vmatmul.mubr.f32.gmra.mrb[0].mxu0 %v2235
      %v2485 = vpop.f32.mrb[0].mxu0
      %v2486 = vadd.f32 %v2165, %v2485
      %v2487 = vpop.f32.mrb[0].mxu0
      %2488 = vmatprep.mubr.f32.mxu0 0.0
      %2489 = vmatmul.mubr.f32.gmra.mrb[0].mxu0 %v2238
      %v2490 = vpop.f32.mrb[0].mxu0
      %v2491 = vpop.f32.mrb[0].mxu0
      %2492 = vmatprep.mubr.f32.mxu0 0.0
      %2493 = vmatmul.mubr.f32.gmra.mrb[0].mxu0 %v2241
      %v2494 = vpop.f32.mrb[0].mxu0
      %v2495 = vadd.f32 %v2165, %v2494
      %v2496 = vpop.f32.mrb[0].mxu0
      %2497 = vmatprep.mubr.f32.mxu0 0.0
      %2498 = vmatmul.mubr.f32.gmra.mrb[0].mxu0 %v2244
      %v2499 = vpop.f32.mrb[0].mxu0
      %v2500 = vadd.f32 %v2165, %v2499
      %v2501 = vpop.f32.mrb[0].mxu0
      %2502 = vmatprep.mubr.f32.mxu0 0.0
      %2503 = vmatmul.mubr.f32.gmra.mrb[0].mxu0 %v2247
      %v2504 = vpop.f32.mrb[0].mxu0
      %v2505 = vpop.f32.mrb[0].mxu0
      %2506 = vmatprep.mubr.f32.mxu0 0.0
      %2507 = vmatmul.mubr.f32.gmra.mrb[0].mxu0 %v2250
      %v2508 = vpop.f32.mrb[0].mxu0
      %v2509 = vadd.f32 %v2165, %v2508
      %v2510 = vpop.f32.mrb[0].mxu0
      %2511 = vmatprep.mubr.f32.mxu0 0.0
      %2512 = vmatmul.mubr.f32.gmra.mrb[0].mxu0 %v2253
      %v2513 = vpop.f32.mrb[0].mxu0
      %v2514 = vadd.f32 %v2165, %v2513
      %v2515 = vpop.f32.mrb[0].mxu0
      %2516 = vmatprep.mubr.f32.mxu0 0.0
      %2517 = vmatmul.mubr.f32.gmra.mrb[0].mxu0 %v2256
      %v2518 = vpop.f32.mrb[0].mxu0
      %v2519 = vpop.f32.mrb[0].mxu0
      %2520 = vmatprep.mubr.f32.mxu0 0.0
      %2521 = vmatmul.mubr.f32.gmra.mrb[0].mxu0 %v2259
      %v2522 = vpop.f32.mrb[0].mxu0
      %v2523 = vadd.f32 %v2165, %v2522
      %v2524 = vpop.f32.mrb[0].mxu0
      %2525 = vmatprep.mubr.f32.mxu0 0.0
      %2526 = vmatmul.mubr.f32.gmra.mrb[0].mxu0 %v2262
      %v2527 = vpop.f32.mrb[0].mxu0
      %v2528 = vadd.f32 %v2165, %v2527
      %v2529 = vpop.f32.mrb[0].mxu0
      %2530 = vmatprep.mubr.f32.mxu0 0.0
      %2531 = vmatmul.mubr.f32.gmra.mrb[0].mxu0 %v2265
      %v2532 = vpop.f32.mrb[0].mxu0
      %v2533 = vpop.f32.mrb[0].mxu0
      %2534 = vmatprep.mubr.f32.mxu0 0.0
      %2535 = vmatmul.mubr.f32.gmra.mrb[0].mxu0 %v2268
      %v2536 = vpop.f32.mrb[0].mxu0
      %v2537 = vadd.f32 %v2165, %v2536
      %v2538 = vpop.f32.mrb[0].mxu0
      %2539 = vmatprep.mubr.f32.mxu0 0.0
      %2540 = vmatmul.mubr.f32.gmra.mrb[0].mxu0 %v2271
      %v2541 = vpop.f32.mrb[0].mxu0
      %v2542 = vadd.f32 %v2165, %v2541
      %v2543 = vpop.f32.mrb[0].mxu0
      %2544 = vmatprep.mubr.f32.mxu0 0.0
      %2545 = vmatmul.mubr.f32.gmra.mrb[0].mxu0 %v2274
      %v2546 = vpop.f32.mrb[0].mxu0
      %v2547 = vpop.f32.mrb[0].mxu0
      %2548 = vmatprep.mubr.f32.mxu0 0.0
      %2549 = vmatmul.mubr.f32.gmra.mrb[0].mxu0 %v2277
      %v2550 = vpop.f32.mrb[0].mxu0
      %v2551 = vadd.f32 %v2165, %v2550
      %v2552 = vpop.f32.mrb[0].mxu0
      %2553 = vmatprep.mubr.f32.mxu0 0.0
      %2554 = vmatmul.mubr.f32.gmra.mrb[0].mxu0 %v2280
      %v2555 = vpop.f32.mrb[0].mxu0
      %v2556 = vadd.f32 %v2165, %v2555
      %v2557 = vpop.f32.mrb[0].mxu0
      %2558 = vmatprep.mubr.f32.mxu0 0.0
      %2559 = vmatmul.mubr.f32.gmra.mrb[0].mxu0 %v2283
      %v2560 = vpop.f32.mrb[0].mxu0
      %v2561 = vpop.f32.mrb[0].mxu0
      %2562 = vmatprep.mubr.f32.mxu0 0.0
      %2563 = vmatmul.mubr.f32.gmra.mrb[0].mxu0 %v2286
      %v2564 = vpop.f32.mrb[0].mxu0
      %v2565 = vadd.f32 %v2165, %v2564
      %v2566 = vpop.f32.mrb[0].mxu0
      %2567 = vmatprep.mubr.f32.mxu0 0.0
      %2568 = vmatmul.mubr.f32.gmra.mrb[0].mxu0 %v2289
      %v2569 = vpop.f32.mrb[0].mxu0
      %v2570 = vadd.f32 %v2165, %v2569
      %v2571 = vpop.f32.mrb[0].mxu0
      %2572 = vmatprep.mubr.f32.mxu0 0.0
      %2573 = vmatmul.mubr.f32.gmra.mrb[0].mxu0 %v2292
      %v2574 = vpop.f32.mrb[0].mxu0
      %v2575 = vpop.f32.mrb[0].mxu0
      %2576 = vmatprep.mubr.f32.mxu0 0.0
      %2577 = vmatmul.mubr.f32.gmra.mrb[0].mxu0 %v2295
      %v2578 = vpop.f32.mrb[0].mxu0
      %v2579 = vadd.f32 %v2165, %v2578
      %v2580 = vpop.f32.mrb[0].mxu0
      %2581 = vmatprep.mubr.f32.mxu0 0.0
      %2582 = vmatmul.mubr.f32.gmra.mrb[0].mxu0 %v2298
      %v2583 = vpop.f32.mrb[0].mxu0
      %v2584 = vadd.f32 %v2165, %v2583
      %v2585 = vpop.f32.mrb[0].mxu0
      %2586 = vmatprep.mubr.f32.mxu0 0.0
      %2587 = vmatmul.mubr.f32.gmra.mrb[0].mxu0 %v2301
      %v2588 = vpop.f32.mrb[0].mxu0
      %v2589 = vpop.f32.mrb[0].mxu0
      %2590 = vmatprep.mubr.f32.mxu0 0.0
      %2591 = vmatmul.mubr.f32.gmra.mrb[0].mxu0 %v2304
      %v2592 = vpop.f32.mrb[0].mxu0
      %v2593 = vadd.f32 %v2165, %v2592
      %v2594 = vpop.f32.mrb[0].mxu0
      %2595 = vmatprep.mubr.f32.mxu0 0.0
      %2596 = vmatmul.mubr.f32.gmra.mrb[0].mxu0 %v2307
      %v2597 = vpop.f32.mrb[0].mxu0
      %v2598 = vadd.f32 %v2165, %v2597
      %v2599 = vpop.f32.mrb[0].mxu0
      %2600 = vmatprep.mubr.f32.mxu0 0.0
      %2601 = vmatmul.mubr.f32.gmra.mrb[0].mxu0 %v2310
      %v2602 = vpop.f32.mrb[0].mxu0
      %v2603 = vpop.f32.mrb[0].mxu0
      %2604 = vdwg.mxu0
      %v2605 = vmax.f32 %v2383, 0.0
      %v2606 = vmax.f32 %v2388, 0.0
      %v2607 = vmax.f32 %v2397, 0.0
      %v2608 = vmax.f32 %v2402, 0.0
      %v2609 = vmax.f32 %v2411, 0.0
      %v2610 = vmax.f32 %v2416, 0.0
      %v2611 = vmax.f32 %v2425, 0.0
      %v2612 = vmax.f32 %v2430, 0.0
      %v2613 = vmax.f32 %v2439, 0.0
      %v2614 = vmax.f32 %v2444, 0.0
      %v2615 = vmax.f32 %v2453, 0.0
      %v2616 = vmax.f32 %v2458, 0.0
      %v2617 = vmax.f32 %v2467, 0.0
      %v2618 = vmax.f32 %v2472, 0.0
      %v2619 = vmax.f32 %v2481, 0.0
      %v2620 = vmax.f32 %v2486, 0.0
      %v2621 = vmax.f32 %v2495, 0.0
      %v2622 = vmax.f32 %v2500, 0.0
      %v2623 = vmax.f32 %v2509, 0.0
      %v2624 = vmax.f32 %v2514, 0.0
      %v2625 = vmax.f32 %v2523, 0.0
      %v2626 = vmax.f32 %v2528, 0.0
      %v2627 = vmax.f32 %v2537, 0.0
      %v2628 = vmax.f32 %v2542, 0.0
      %v2629 = vmax.f32 %v2551, 0.0
      %v2630 = vmax.f32 %v2556, 0.0
      %v2631 = vmax.f32 %v2565, 0.0
      %v2632 = vmax.f32 %v2570, 0.0
      %v2633 = vmax.f32 %v2579, 0.0
      %v2634 = vmax.f32 %v2584, 0.0
      %v2635 = vmax.f32 %v2593, 0.0
      %v2636 = vmax.f32 %v2598, 0.0
      %2637 = vst.msk [vmem:[%s293 + $0x1] sm:$0xff] %vm258, %v2605
      %2638 = vst.msk [vmem:[%s293 + $0x9] sm:$0xff] %vm258, %v2606
      %2639 = vst.msk [vmem:[%s293 + $0x19] sm:$0xff] %vm258, %v2607
      %2640 = vst.msk [vmem:[%s293 + $0x21] sm:$0xff] %vm258, %v2608
      %2641 = vst.msk [vmem:[%s293 + $0x31] sm:$0xff] %vm258, %v2609
      %2642 = vst.msk [vmem:[%s293 + $0x39] sm:$0xff] %vm258, %v2610
      %2643 = vst.msk [vmem:[%s293 + $0x49] sm:$0xff] %vm258, %v2611
      %2644 = vst.msk [vmem:[%s293 + $0x51] sm:$0xff] %vm258, %v2612
      %2645 = vst.msk [vmem:[%s293 + $0x61] sm:$0xff] %vm258, %v2613
      %2646 = vst.msk [vmem:[%s293 + $0x69] sm:$0xff] %vm258, %v2614
      %2647 = vst.msk [vmem:[%s293 + $0x79] sm:$0xff] %vm258, %v2615
      %2648 = vst.msk [vmem:[%s293 + $0x81] sm:$0xff] %vm258, %v2616
      %2649 = vst.msk [vmem:[%s293 + $0x91] sm:$0xff] %vm258, %v2617
      %2650 = vst.msk [vmem:[%s293 + $0x99] sm:$0xff] %vm258, %v2618
      %2651 = vst.msk [vmem:[%s293 + $0xa9] sm:$0xff] %vm258, %v2619
      %2652 = vst.msk [vmem:[%s293 + $0xb1] sm:$0xff] %vm258, %v2620
      %2653 = vst.msk [vmem:[%s293 + $0xc1] sm:$0xff] %vm258, %v2621
      %2654 = vst.msk [vmem:[%s293 + $0xc9] sm:$0xff] %vm258, %v2622
      %2655 = vst.msk [vmem:[%s293 + $0xd9] sm:$0xff] %vm258, %v2623
      %2656 = vst.msk [vmem:[%s293 + $0xe1] sm:$0xff] %vm258, %v2624
      %2657 = vst.msk [vmem:[%s293 + $0xf1] sm:$0xff] %vm258, %v2625
      %2658 = vst.msk [vmem:[%s293 + $0xf9] sm:$0xff] %vm258, %v2626
      %2659 = vst.msk [vmem:[%s293 + $0x109] sm:$0xff] %vm258, %v2627
      %2660 = vst.msk [vmem:[%s293 + $0x111] sm:$0xff] %vm258, %v2628
      %2661 = vst.msk [vmem:[%s293 + $0x121] sm:$0xff] %vm258, %v2629
      %2662 = vst.msk [vmem:[%s293 + $0x129] sm:$0xff] %vm258, %v2630
      %2663 = vst.msk [vmem:[%s293 + $0x139] sm:$0xff] %vm258, %v2631
      %2664 = vst.msk [vmem:[%s293 + $0x141] sm:$0xff] %vm258, %v2632
      %2665 = vst.msk [vmem:[%s293 + $0x151] sm:$0xff] %vm258, %v2633
      %2666 = vst.msk [vmem:[%s293 + $0x159] sm:$0xff] %vm258, %v2634
      %2667 = vst.msk [vmem:[%s293 + $0x169] sm:$0xff] %vm258, %v2635
      %2668 = vst.msk [vmem:[%s293 + $0x171] sm:$0xff] %vm258, %v2636
      %2669 = vst.msk [vmem:[%s293 - $0x1] sm:$0x2] %vm326, %v2605
      %2670 = vst.msk [vmem:[%s293 + $0x17] sm:$0x2] %vm326, %v2607
      %2671 = vst.msk [vmem:[%s293 + $0x2f] sm:$0x2] %vm326, %v2609
      %2672 = vst.msk [vmem:[%s293 + $0x47] sm:$0x2] %vm326, %v2611
      %2673 = vst.msk [vmem:[%s293 + $0x5f] sm:$0x2] %vm326, %v2613
      %2674 = vst.msk [vmem:[%s293 + $0x77] sm:$0x2] %vm326, %v2615
      %2675 = vst.msk [vmem:[%s293 + $0x8f] sm:$0x2] %vm326, %v2617
      %2676 = vst.msk [vmem:[%s293 + $0xa7] sm:$0x2] %vm326, %v2619
      %2677 = vst.msk [vmem:[%s293 + $0xbf] sm:$0x2] %vm326, %v2621
      %2678 = vst.msk [vmem:[%s293 + $0xd7] sm:$0x2] %vm326, %v2623
      %2679 = vst.msk [vmem:[%s293 + $0xef] sm:$0x2] %vm326, %v2625
      %2680 = vst.msk [vmem:[%s293 + $0x107] sm:$0x2] %vm326, %v2627
      %2681 = vst.msk [vmem:[%s293 + $0x11f] sm:$0x2] %vm326, %v2629
      %2682 = vst.msk [vmem:[%s293 + $0x137] sm:$0x2] %vm326, %v2631
      %2683 = vst.msk [vmem:[%s293 + $0x14f] sm:$0x2] %vm326, %v2633
      %2684 = vst.msk [vmem:[%s293 + $0x167] sm:$0x2] %vm326, %v2635
      %2685 = vst.msk [vmem:[%s293 + $0xb] sm:$0x40] %vm343, %v2606
      %2686 = vst.msk [vmem:[%s293 + $0x23] sm:$0x40] %vm343, %v2608
      %2687 = vst.msk [vmem:[%s293 + $0x3b] sm:$0x40] %vm343, %v2610
      %2688 = vst.msk [vmem:[%s293 + $0x53] sm:$0x40] %vm343, %v2612
      %2689 = vst.msk [vmem:[%s293 + $0x6b] sm:$0x40] %vm343, %v2614
      %2690 = vst.msk [vmem:[%s293 + $0x83] sm:$0x40] %vm343, %v2616
      %2691 = vst.msk [vmem:[%s293 + $0x9b] sm:$0x40] %vm343, %v2618
      %2692 = vst.msk [vmem:[%s293 + $0xb3] sm:$0x40] %vm343, %v2620
      %2693 = vst.msk [vmem:[%s293 + $0xcb] sm:$0x40] %vm343, %v2622
      %2694 = vst.msk [vmem:[%s293 + $0xe3] sm:$0x40] %vm343, %v2624
      %2695 = vst.msk [vmem:[%s293 + $0xfb] sm:$0x40] %vm343, %v2626
      %2696 = vst.msk [vmem:[%s293 + $0x113] sm:$0x40] %vm343, %v2628
      %2697 = vst.msk [vmem:[%s293 + $0x12b] sm:$0x40] %vm343, %v2630
      %2698 = vst.msk [vmem:[%s293 + $0x143] sm:$0x40] %vm343, %v2632
      %2699 = vst.msk [vmem:[%s293 + $0x15b] sm:$0x40] %vm343, %v2634
      %2700 = vst.msk [vmem:[%s293 + $0x173] sm:$0x40] %vm343, %v2636
      %v2701 = vld [vmem:[%s360] sm:$0xff]
      %v2702 = vld [vmem:[%s360 + $0x8] sm:$0xff]
      %v2703 = vld [vmem:[%s360 + $0x10] sm:$0xff]
      %2704 = vst.msk [vmem:[#allocation2] sm:$0xff] %vm258, %v2701
      %2705 = vst.msk [vmem:[#allocation2 + $0x8] sm:$0xff] %vm258, %v2702
      %2706 = vst.msk [vmem:[#allocation2 + $0x10] sm:$0xff] %vm258, %v2703
      %v2707 = vld [vmem:[%s367] sm:$0xff]
      %v2708 = vld [vmem:[%s367 + $0x8] sm:$0xff]
      %v2709 = vld [vmem:[%s367 + $0x10] sm:$0xff]
      %2710 = vst.msk [vmem:[%s371] sm:$0xff] %vm258, %v2707
      %2711 = vst.msk [vmem:[%s371 + $0x8] sm:$0xff] %vm258, %v2708
      %2712 = vst.msk [vmem:[%s371 + $0x10] sm:$0xff] %vm258, %v2709
      %v2713 = vld [vmem:[#allocation2] sm:$0xff]
      %v2714 = vld [vmem:[#allocation2 + $0x8] sm:$0xff]
      %v2715 = vld [vmem:[#allocation2 + $0x10] sm:$0xff]
      %v2716 = vld [vmem:[#allocation2 + $0x18] sm:$0xff]
      %v2717 = vld [vmem:[#allocation2 + $0x20] sm:$0xff]
      %v2718 = vld [vmem:[#allocation2 + $0x28] sm:$0xff]
      %v2719 = vld [vmem:[#allocation2 + $0x30] sm:$0xff]
      %v2720 = vld [vmem:[#allocation2 + $0x38] sm:$0xff]
      %v2721 = vld [vmem:[#allocation2 + $0x40] sm:$0xff]
      %v2722 = vld [vmem:[#allocation2 + $0x48] sm:$0xff]
      %v2723 = vld [vmem:[#allocation2 + $0x50] sm:$0xff]
      %v2724 = vld [vmem:[#allocation2 + $0x58] sm:$0xff]
      %v2725 = vld [vmem:[#allocation2 + $0x60] sm:$0xff]
      %v2726 = vld [vmem:[#allocation2 + $0x68] sm:$0xff]
      %v2727 = vld [vmem:[#allocation2 + $0x70] sm:$0xff]
      %v2728 = vld [vmem:[#allocation2 + $0x78] sm:$0xff]
      %v2729 = vld [vmem:[#allocation2 + $0x80] sm:$0xff]
      %v2730 = vld [vmem:[#allocation2 + $0x88] sm:$0xff]
      %v2731 = vld [vmem:[#allocation2 + $0x90] sm:$0xff]
      %v2732 = vld [vmem:[#allocation2 + $0x98] sm:$0xff]
      %v2733 = vld [vmem:[#allocation2 + $0xa0] sm:$0xff]
      %v2734 = vld [vmem:[#allocation2 + $0xa8] sm:$0xff]
      %v2735 = vld [vmem:[#allocation2 + $0xb0] sm:$0xff]
      %v2736 = vld [vmem:[#allocation2 + $0xb8] sm:$0xff]
      %v2737 = vld [vmem:[#allocation2 + $0xc0] sm:$0xff]
      %v2738 = vld [vmem:[#allocation2 + $0xc8] sm:$0xff]
      %v2739 = vld [vmem:[#allocation2 + $0xd0] sm:$0xff]
      %v2740 = vld [vmem:[#allocation2 + $0xd8] sm:$0xff]
      %v2741 = vld [vmem:[#allocation2 + $0xe0] sm:$0xff]
      %v2742 = vld [vmem:[#allocation2 + $0xe8] sm:$0xff]
      %v2743 = vld [vmem:[#allocation2 + $0xf0] sm:$0xff]
      %v2744 = vld [vmem:[#allocation2 + $0xf8] sm:$0xff]
      %v2745 = vld [vmem:[#allocation2 + $0x100] sm:$0xff]
      %v2746 = vld [vmem:[#allocation2 + $0x108] sm:$0xff]
      %v2747 = vld [vmem:[#allocation2 + $0x110] sm:$0xff]
      %v2748 = vld [vmem:[#allocation2 + $0x118] sm:$0xff]
      %v2749 = vld [vmem:[#allocation2 + $0x120] sm:$0xff]
      %v2750 = vld [vmem:[#allocation2 + $0x128] sm:$0xff]
      %v2751 = vld [vmem:[#allocation2 + $0x130] sm:$0xff]
      %v2752 = vld [vmem:[#allocation2 + $0x138] sm:$0xff]
      %v2753 = vld [vmem:[#allocation2 + $0x140] sm:$0xff]
      %v2754 = vld [vmem:[#allocation2 + $0x148] sm:$0xff]
      %v2755 = vld [vmem:[#allocation2 + $0x150] sm:$0xff]
      %v2756 = vld [vmem:[#allocation2 + $0x158] sm:$0xff]
      %v2757 = vld [vmem:[#allocation2 + $0x160] sm:$0xff]
      %v2758 = vld [vmem:[#allocation2 + $0x168] sm:$0xff]
      %v2759 = vld [vmem:[#allocation2 + $0x170] sm:$0xff]
      %v2760 = vld [vmem:[#allocation2 + $0x178] sm:$0xff]
      %v2761 = vld [vmem:[#allocation2 + $0x180] sm:$0xff]
      %v2762 = vld [vmem:[#allocation2 + $0x188] sm:$0xff]
      %v2763 = vld [vmem:[#allocation2 + $0x190] sm:$0xff]
      %v2764 = vld [vmem:[#allocation2 + $0x198] sm:$0xff]
      %v2765 = vld [vmem:[#allocation2 + $0x1a0] sm:$0xff]
      %v2766 = vld [vmem:[#allocation2 + $0x1a8] sm:$0xff]
      %v2767 = vld [vmem:[#allocation2 + $0x1b0] sm:$0xff]
      %2768 = vst.msk [vmem:[#allocation3] sm:$0xff] %vm258, %v2713
      %2769 = vst.msk [vmem:[#allocation3 + $0x8] sm:$0xff] %vm258, %v2714
      %2770 = vst.msk [vmem:[#allocation3 + $0x10] sm:$0xff] %vm258, %v2715
      %2771 = vst.msk [vmem:[#allocation3 + $0x18] sm:$0xff] %vm258, %v2716
      %2772 = vst.msk [vmem:[#allocation3 + $0x20] sm:$0xff] %vm258, %v2717
      %2773 = vst.msk [vmem:[#allocation3 + $0x28] sm:$0xff] %vm258, %v2718
      %2774 = vst.msk [vmem:[#allocation3 + $0x30] sm:$0xff] %vm258, %v2719
      %2775 = vst.msk [vmem:[#allocation3 + $0x38] sm:$0xff] %vm258, %v2720
      %2776 = vst.msk [vmem:[#allocation3 + $0x40] sm:$0xff] %vm258, %v2721
      %2777 = vst.msk [vmem:[#allocation3 + $0x48] sm:$0xff] %vm258, %v2722
      %2778 = vst.msk [vmem:[#allocation3 + $0x50] sm:$0xff] %vm258, %v2723
      %2779 = vst.msk [vmem:[#allocation3 + $0x58] sm:$0xff] %vm258, %v2724
      %2780 = vst.msk [vmem:[#allocation3 + $0x60] sm:$0xff] %vm258, %v2725
      %2781 = vst.msk [vmem:[#allocation3 + $0x68] sm:$0xff] %vm258, %v2726
      %2782 = vst.msk [vmem:[#allocation3 + $0x70] sm:$0xff] %vm258, %v2727
      %2783 = vst.msk [vmem:[#allocation3 + $0x78] sm:$0xff] %vm258, %v2728
      %2784 = vst.msk [vmem:[#allocation3 + $0x80] sm:$0xff] %vm258, %v2729
      %2785 = vst.msk [vmem:[#allocation3 + $0x88] sm:$0xff] %vm258, %v2730
      %2786 = vst.msk [vmem:[#allocation3 + $0x90] sm:$0xff] %vm258, %v2731
      %2787 = vst.msk [vmem:[#allocation3 + $0x98] sm:$0xff] %vm258, %v2732
      %2788 = vst.msk [vmem:[#allocation3 + $0xa0] sm:$0xff] %vm258, %v2733
      %2789 = vst.msk [vmem:[#allocation3 + $0xa8] sm:$0xff] %vm258, %v2734
      %2790 = vst.msk [vmem:[#allocation3 + $0xb0] sm:$0xff] %vm258, %v2735
      %2791 = vst.msk [vmem:[#allocation3 + $0xb8] sm:$0xff] %vm258, %v2736
      %2792 = vst.msk [vmem:[#allocation3 + $0xc0] sm:$0xff] %vm258, %v2737
      %2793 = vst.msk [vmem:[#allocation3 + $0xc8] sm:$0xff] %vm258, %v2738
      %2794 = vst.msk [vmem:[#allocation3 + $0xd0] sm:$0xff] %vm258, %v2739
      %2795 = vst.msk [vmem:[#allocation3 + $0xd8] sm:$0xff] %vm258, %v2740
      %2796 = vst.msk [vmem:[#allocation3 + $0xe0] sm:$0xff] %vm258, %v2741
      %2797 = vst.msk [vmem:[#allocation3 + $0xe8] sm:$0xff] %vm258, %v2742
      %2798 = vst.msk [vmem:[#allocation3 + $0xf0] sm:$0xff] %vm258, %v2743
      %2799 = vst.msk [vmem:[#allocation3 + $0xf8] sm:$0xff] %vm258, %v2744
      %2800 = vst.msk [vmem:[#allocation3 + $0x100] sm:$0xff] %vm258, %v2745
      %2801 = vst.msk [vmem:[#allocation3 + $0x108] sm:$0xff] %vm258, %v2746
      %2802 = vst.msk [vmem:[#allocation3 + $0x110] sm:$0xff] %vm258, %v2747
      %2803 = vst.msk [vmem:[#allocation3 + $0x118] sm:$0xff] %vm258, %v2748
      %2804 = vst.msk [vmem:[#allocation3 + $0x120] sm:$0xff] %vm258, %v2749
      %2805 = vst.msk [vmem:[#allocation3 + $0x128] sm:$0xff] %vm258, %v2750
      %2806 = vst.msk [vmem:[#allocation3 + $0x130] sm:$0xff] %vm258, %v2751
      %2807 = vst.msk [vmem:[#allocation3 + $0x138] sm:$0xff] %vm258, %v2752
      %2808 = vst.msk [vmem:[#allocation3 + $0x140] sm:$0xff] %vm258, %v2753
      %2809 = vst.msk [vmem:[#allocation3 + $0x148] sm:$0xff] %vm258, %v2754
      %2810 = vst.msk [vmem:[#allocation3 + $0x150] sm:$0xff] %vm258, %v2755
      %2811 = vst.msk [vmem:[#allocation3 + $0x158] sm:$0xff] %vm258, %v2756
      %2812 = vst.msk [vmem:[#allocation3 + $0x160] sm:$0xff] %vm258, %v2757
      %2813 = vst.msk [vmem:[#allocation3 + $0x168] sm:$0xff] %vm258, %v2758
      %2814 = vst.msk [vmem:[#allocation3 + $0x170] sm:$0xff] %vm258, %v2759
      %2815 = vst.msk [vmem:[#allocation3 + $0x178] sm:$0xff] %vm258, %v2760
      %2865 = vrot.lane.b32.xlu0 %v2713, 4
      %v2866 = vpop.permute.xlu0 %2865
      %2867 = vrot.lane.b32.xlu0 %v2714, 4
      %v2868 = vpop.permute.xlu0 %2867
      %2869 = vrot.lane.b32.xlu0 %v2715, 4
      %v2870 = vpop.permute.xlu0 %2869
      %2871 = vrot.lane.b32.xlu0 %v2716, 4
      %v2872 = vpop.permute.xlu0 %2871
      %2873 = vrot.lane.b32.xlu0 %v2717, 4
      %v2874 = vpop.permute.xlu0 %2873
      %2875 = vrot.lane.b32.xlu0 %v2718, 4
      %v2876 = vpop.permute.xlu0 %2875
      %2877 = vrot.lane.b32.xlu0 %v2719, 4
      %v2878 = vpop.permute.xlu0 %2877
      %2879 = vrot.lane.b32.xlu0 %v2720, 4
      %v2880 = vpop.permute.xlu0 %2879
      %2881 = vrot.lane.b32.xlu0 %v2721, 4
      %v2882 = vpop.permute.xlu0 %2881
      %2883 = vrot.lane.b32.xlu0 %v2722, 4
      %v2884 = vpop.permute.xlu0 %2883
      %2885 = vrot.lane.b32.xlu0 %v2723, 4
      %v2886 = vpop.permute.xlu0 %2885
      %2887 = vrot.lane.b32.xlu0 %v2724, 4
      %v2888 = vpop.permute.xlu0 %2887
      %2889 = vrot.lane.b32.xlu0 %v2725, 4
      %v2890 = vpop.permute.xlu0 %2889
      %2891 = vrot.lane.b32.xlu0 %v2726, 4
      %v2892 = vpop.permute.xlu0 %2891
      %2893 = vrot.lane.b32.xlu0 %v2727, 4
      %v2894 = vpop.permute.xlu0 %2893
      %2895 = vrot.lane.b32.xlu0 %v2728, 4
      %v2896 = vpop.permute.xlu0 %2895
      %2897 = vrot.lane.b32.xlu0 %v2729, 4
      %v2898 = vpop.permute.xlu0 %2897
      %2899 = vrot.lane.b32.xlu0 %v2730, 4
      %v2900 = vpop.permute.xlu0 %2899
      %2901 = vrot.lane.b32.xlu0 %v2731, 4
      %v2902 = vpop.permute.xlu0 %2901
      %2903 = vrot.lane.b32.xlu0 %v2732, 4
      %v2904 = vpop.permute.xlu0 %2903
      %2905 = vrot.lane.b32.xlu0 %v2733, 4
      %v2906 = vpop.permute.xlu0 %2905
      %2907 = vrot.lane.b32.xlu0 %v2734, 4
      %v2908 = vpop.permute.xlu0 %2907
      %2909 = vrot.lane.b32.xlu0 %v2735, 4
      %v2910 = vpop.permute.xlu0 %2909
      %2911 = vrot.lane.b32.xlu0 %v2736, 4
      %v2912 = vpop.permute.xlu0 %2911
      %2913 = vrot.lane.b32.xlu0 %v2737, 4
      %v2914 = vpop.permute.xlu0 %2913
      %2915 = vrot.lane.b32.xlu0 %v2738, 4
      %v2916 = vpop.permute.xlu0 %2915
      %2917 = vrot.lane.b32.xlu0 %v2739, 4
      %v2918 = vpop.permute.xlu0 %2917
      %2919 = vrot.lane.b32.xlu0 %v2740, 4
      %v2920 = vpop.permute.xlu0 %2919
      %2921 = vrot.lane.b32.xlu0 %v2741, 4
      %v2922 = vpop.permute.xlu0 %2921
      %2923 = vrot.lane.b32.xlu0 %v2742, 4
      %v2924 = vpop.permute.xlu0 %2923
      %2925 = vrot.lane.b32.xlu0 %v2743, 4
      %v2926 = vpop.permute.xlu0 %2925
      %2927 = vrot.lane.b32.xlu0 %v2744, 4
      %v2928 = vpop.permute.xlu0 %2927
      %2929 = vrot.lane.b32.xlu0 %v2745, 4
      %v2930 = vpop.permute.xlu0 %2929
      %2931 = vrot.lane.b32.xlu0 %v2746, 4
      %v2932 = vpop.permute.xlu0 %2931
      %2933 = vrot.lane.b32.xlu0 %v2747, 4
      %v2934 = vpop.permute.xlu0 %2933
      %2935 = vrot.lane.b32.xlu0 %v2748, 4
      %v2936 = vpop.permute.xlu0 %2935
      %2937 = vrot.lane.b32.xlu0 %v2749, 4
      %v2938 = vpop.permute.xlu0 %2937
      %2939 = vrot.lane.b32.xlu0 %v2750, 4
      %v2940 = vpop.permute.xlu0 %2939
      %2941 = vrot.lane.b32.xlu0 %v2751, 4
      %v2942 = vpop.permute.xlu0 %2941
      %2943 = vrot.lane.b32.xlu0 %v2752, 4
      %v2944 = vpop.permute.xlu0 %2943
      %2945 = vrot.lane.b32.xlu0 %v2753, 4
      %v2946 = vpop.permute.xlu0 %2945
      %2947 = vrot.lane.b32.xlu0 %v2754, 4
      %v2948 = vpop.permute.xlu0 %2947
      %2949 = vrot.lane.b32.xlu0 %v2755, 4
      %v2950 = vpop.permute.xlu0 %2949
      %2951 = vrot.lane.b32.xlu0 %v2756, 4
      %v2952 = vpop.permute.xlu0 %2951
      %2953 = vrot.lane.b32.xlu0 %v2757, 4
      %v2954 = vpop.permute.xlu0 %2953
      %2955 = vrot.lane.b32.xlu0 %v2758, 4
      %v2956 = vpop.permute.xlu0 %2955
      %2957 = vrot.lane.b32.xlu0 %v2759, 4
      %v2958 = vpop.permute.xlu0 %2957
      %2959 = vrot.lane.b32.xlu0 %v2760, 4
      %v2960 = vpop.permute.xlu0 %2959
      %2961 = vrot.lane.b32.xlu0 %v2761, 4
      %v2962 = vpop.permute.xlu0 %2961
      %3012 = vst.msk [vmem:[#allocation3 - $0x1] sm:$0xfe] %vm674, %v2866
      %3013 = vst.msk [vmem:[#allocation3 + $0x7] sm:$0xff] %vm676, %v2868
      %3014 = vst.msk [vmem:[#allocation3 + $0xf] sm:$0xff] %vm676, %v2870
      %3015 = vst.msk [vmem:[#allocation3 + $0x17] sm:$0xff] %vm676, %v2872
      %3016 = vst.msk [vmem:[#allocation3 + $0x1f] sm:$0xff] %vm676, %v2874
      %3017 = vst.msk [vmem:[#allocation3 + $0x27] sm:$0xff] %vm676, %v2876
      %3018 = vst.msk [vmem:[#allocation3 + $0x2f] sm:$0xff] %vm676, %v2878
      %3019 = vst.msk [vmem:[#allocation3 + $0x37] sm:$0xff] %vm676, %v2880
      %3020 = vst.msk [vmem:[#allocation3 + $0x3f] sm:$0xff] %vm676, %v2882
      %3021 = vst.msk [vmem:[#allocation3 + $0x47] sm:$0xff] %vm676, %v2884
      %3022 = vst.msk [vmem:[#allocation3 + $0x4f] sm:$0xff] %vm676, %v2886
      %3023 = vst.msk [vmem:[#allocation3 + $0x57] sm:$0xff] %vm676, %v2888
      %3024 = vst.msk [vmem:[#allocation3 + $0x5f] sm:$0xff] %vm676, %v2890
      %3025 = vst.msk [vmem:[#allocation3 + $0x67] sm:$0xff] %vm676, %v2892
      %3026 = vst.msk [vmem:[#allocation3 + $0x6f] sm:$0xff] %vm676, %v2894
      %3027 = vst.msk [vmem:[#allocation3 + $0x77] sm:$0xff] %vm676, %v2896
      %3028 = vst.msk [vmem:[#allocation3 + $0x7f] sm:$0xff] %vm676, %v2898
      %3029 = vst.msk [vmem:[#allocation3 + $0x87] sm:$0xff] %vm676, %v2900
      %3030 = vst.msk [vmem:[#allocation3 + $0x8f] sm:$0xff] %vm676, %v2902
      %3031 = vst.msk [vmem:[#allocation3 + $0x97] sm:$0xff] %vm676, %v2904
      %3032 = vst.msk [vmem:[#allocation3 + $0x9f] sm:$0xff] %vm676, %v2906
      %3033 = vst.msk [vmem:[#allocation3 + $0xa7] sm:$0xff] %vm676, %v2908
      %3034 = vst.msk [vmem:[#allocation3 + $0xaf] sm:$0xff] %vm676, %v2910
      %3035 = vst.msk [vmem:[#allocation3 + $0xb7] sm:$0xff] %vm676, %v2912
      %3036 = vst.msk [vmem:[#allocation3 + $0xbf] sm:$0xff] %vm676, %v2914
      %3037 = vst.msk [vmem:[#allocation3 + $0xc7] sm:$0xff] %vm676, %v2916
      %3038 = vst.msk [vmem:[#allocation3 + $0xcf] sm:$0xff] %vm676, %v2918
      %3039 = vst.msk [vmem:[#allocation3 + $0xd7] sm:$0xff] %vm676, %v2920
      %3040 = vst.msk [vmem:[#allocation3 + $0xdf] sm:$0xff] %vm676, %v2922
      %3041 = vst.msk [vmem:[#allocation3 + $0xe7] sm:$0xff] %vm676, %v2924
      %3042 = vst.msk [vmem:[#allocation3 + $0xef] sm:$0xff] %vm676, %v2926
      %3043 = vst.msk [vmem:[#allocation3 + $0xf7] sm:$0xff] %vm676, %v2928
      %3044 = vst.msk [vmem:[#allocation3 + $0xff] sm:$0xff] %vm676, %v2930
      %3045 = vst.msk [vmem:[#allocation3 + $0x107] sm:$0xff] %vm676, %v2932
      %3046 = vst.msk [vmem:[#allocation3 + $0x10f] sm:$0xff] %vm676, %v2934
      %3047 = vst.msk [vmem:[#allocation3 + $0x117] sm:$0xff] %vm676, %v2936
      %3048 = vst.msk [vmem:[#allocation3 + $0x11f] sm:$0xff] %vm676, %v2938
      %3049 = vst.msk [vmem:[#allocation3 + $0x127] sm:$0xff] %vm676, %v2940
      %3050 = vst.msk [vmem:[#allocation3 + $0x12f] sm:$0xff] %vm676, %v2942
      %3051 = vst.msk [vmem:[#allocation3 + $0x137] sm:$0xff] %vm676, %v2944
      %3052 = vst.msk [vmem:[#allocation3 + $0x13f] sm:$0xff] %vm676, %v2946
      %3053 = vst.msk [vmem:[#allocation3 + $0x147] sm:$0xff] %vm676, %v2948
      %3054 = vst.msk [vmem:[#allocation3 + $0x14f] sm:$0xff] %vm676, %v2950
      %3055 = vst.msk [vmem:[#allocation3 + $0x157] sm:$0xff] %vm676, %v2952
      %3056 = vst.msk [vmem:[#allocation3 + $0x15f] sm:$0xff] %vm676, %v2954
      %3057 = vst.msk [vmem:[#allocation3 + $0x167] sm:$0xff] %vm676, %v2956
      %3058 = vst.msk [vmem:[#allocation3 + $0x16f] sm:$0xff] %vm676, %v2958
      %3059 = vst.msk [vmem:[#allocation3 + $0x177] sm:$0xff] %vm676, %v2960
      %3060 = vst.msk [vmem:[#allocation3 + $0x17f] sm:$0x1] %vm724, %v2962
      %3061 = vrot.lane.b32.xlu0 %v2713, 8
      %v3062 = vpop.permute.xlu0 %3061
      %3063 = vrot.lane.b32.xlu0 %v2714, 8
      %v3064 = vpop.permute.xlu0 %3063
      %3065 = vrot.lane.b32.xlu0 %v2715, 8
      %v3066 = vpop.permute.xlu0 %3065
      %3067 = vrot.lane.b32.xlu0 %v2716, 8
      %v3068 = vpop.permute.xlu0 %3067
      %3069 = vrot.lane.b32.xlu0 %v2717, 8
      %v3070 = vpop.permute.xlu0 %3069
      %3071 = vrot.lane.b32.xlu0 %v2718, 8
      %v3072 = vpop.permute.xlu0 %3071
      %3073 = vrot.lane.b32.xlu0 %v2719, 8
      %v3074 = vpop.permute.xlu0 %3073
      %3075 = vrot.lane.b32.xlu0 %v2720, 8
      %v3076 = vpop.permute.xlu0 %3075
      %3077 = vrot.lane.b32.xlu0 %v2721, 8
      %v3078 = vpop.permute.xlu0 %3077
      %3079 = vrot.lane.b32.xlu0 %v2722, 8
      %v3080 = vpop.permute.xlu0 %3079
      %3081 = vrot.lane.b32.xlu0 %v2723, 8
      %v3082 = vpop.permute.xlu0 %3081
      %3083 = vrot.lane.b32.xlu0 %v2724, 8
      %v3084 = vpop.permute.xlu0 %3083
      %3085 = vrot.lane.b32.xlu0 %v2725, 8
      %v3086 = vpop.permute.xlu0 %3085
      %3087 = vrot.lane.b32.xlu0 %v2726, 8
      %v3088 = vpop.permute.xlu0 %3087
      %3089 = vrot.lane.b32.xlu0 %v2727, 8
      %v3090 = vpop.permute.xlu0 %3089
      %3091 = vrot.lane.b32.xlu0 %v2728, 8
      %v3092 = vpop.permute.xlu0 %3091
      %3093 = vrot.lane.b32.xlu0 %v2729, 8
      %v3094 = vpop.permute.xlu0 %3093
      %3095 = vrot.lane.b32.xlu0 %v2730, 8
      %v3096 = vpop.permute.xlu0 %3095
      %3097 = vrot.lane.b32.xlu0 %v2731, 8
      %v3098 = vpop.permute.xlu0 %3097
      %3099 = vrot.lane.b32.xlu0 %v2732, 8
      %v3100 = vpop.permute.xlu0 %3099
      %3101 = vrot.lane.b32.xlu0 %v2733, 8
      %v3102 = vpop.permute.xlu0 %3101
      %3103 = vrot.lane.b32.xlu0 %v2734, 8
      %v3104 = vpop.permute.xlu0 %3103
      %3105 = vrot.lane.b32.xlu0 %v2735, 8
      %v3106 = vpop.permute.xlu0 %3105
      %3107 = vrot.lane.b32.xlu0 %v2736, 8
      %v3108 = vpop.permute.xlu0 %3107
      %3109 = vrot.lane.b32.xlu0 %v2737, 8
      %v3110 = vpop.permute.xlu0 %3109
      %3111 = vrot.lane.b32.xlu0 %v2738, 8
      %v3112 = vpop.permute.xlu0 %3111
      %3113 = vrot.lane.b32.xlu0 %v2739, 8
      %v3114 = vpop.permute.xlu0 %3113
      %3115 = vrot.lane.b32.xlu0 %v2740, 8
      %v3116 = vpop.permute.xlu0 %3115
      %3117 = vrot.lane.b32.xlu0 %v2741, 8
      %v3118 = vpop.permute.xlu0 %3117
      %3119 = vrot.lane.b32.xlu0 %v2742, 8
      %v3120 = vpop.permute.xlu0 %3119
      %3121 = vrot.lane.b32.xlu0 %v2743, 8
      %v3122 = vpop.permute.xlu0 %3121
      %3123 = vrot.lane.b32.xlu0 %v2744, 8
      %v3124 = vpop.permute.xlu0 %3123
      %3125 = vrot.lane.b32.xlu0 %v2745, 8
      %v3126 = vpop.permute.xlu0 %3125
      %3127 = vrot.lane.b32.xlu0 %v2746, 8
      %v3128 = vpop.permute.xlu0 %3127
      %3129 = vrot.lane.b32.xlu0 %v2747, 8
      %v3130 = vpop.permute.xlu0 %3129
      %3131 = vrot.lane.b32.xlu0 %v2748, 8
      %v3132 = vpop.permute.xlu0 %3131
      %3133 = vrot.lane.b32.xlu0 %v2749, 8
      %v3134 = vpop.permute.xlu0 %3133
      %3135 = vrot.lane.b32.xlu0 %v2750, 8
      %v3136 = vpop.permute.xlu0 %3135
      %3137 = vrot.lane.b32.xlu0 %v2751, 8
      %v3138 = vpop.permute.xlu0 %3137
      %3139 = vrot.lane.b32.xlu0 %v2752, 8
      %v3140 = vpop.permute.xlu0 %3139
      %3141 = vrot.lane.b32.xlu0 %v2753, 8
      %v3142 = vpop.permute.xlu0 %3141
      %3143 = vrot.lane.b32.xlu0 %v2754, 8
      %v3144 = vpop.permute.xlu0 %3143
      %3145 = vrot.lane.b32.xlu0 %v2755, 8
      %v3146 = vpop.permute.xlu0 %3145
      %3147 = vrot.lane.b32.xlu0 %v2756, 8
      %v3148 = vpop.permute.xlu0 %3147
      %3149 = vrot.lane.b32.xlu0 %v2757, 8
      %v3150 = vpop.permute.xlu0 %3149
      %3151 = vrot.lane.b32.xlu0 %v2758, 8
      %v3152 = vpop.permute.xlu0 %3151
      %3153 = vrot.lane.b32.xlu0 %v2759, 8
      %v3154 = vpop.permute.xlu0 %3153
      %3155 = vrot.lane.b32.xlu0 %v2760, 8
      %v3156 = vpop.permute.xlu0 %3155
      %3157 = vrot.lane.b32.xlu0 %v2761, 8
      %v3158 = vpop.permute.xlu0 %3157
      %3208 = vst.msk [vmem:[#allocation3 - $0x2] sm:$0xfc] %vm873, %v3062
      %3209 = vst.msk [vmem:[#allocation3 + $0x6] sm:$0xff] %vm875, %v3064
      %3210 = vst.msk [vmem:[#allocation3 + $0xe] sm:$0xff] %vm875, %v3066
      %3211 = vst.msk [vmem:[#allocation3 + $0x16] sm:$0xff] %vm875, %v3068
      %3212 = vst.msk [vmem:[#allocation3 + $0x1e] sm:$0xff] %vm875, %v3070
      %3213 = vst.msk [vmem:[#allocation3 + $0x26] sm:$0xff] %vm875, %v3072
      %3214 = vst.msk [vmem:[#allocation3 + $0x2e] sm:$0xff] %vm875, %v3074
      %3215 = vst.msk [vmem:[#allocation3 + $0x36] sm:$0xff] %vm875, %v3076
      %3216 = vst.msk [vmem:[#allocation3 + $0x3e] sm:$0xff] %vm875, %v3078
      %3217 = vst.msk [vmem:[#allocation3 + $0x46] sm:$0xff] %vm875, %v3080
      %3218 = vst.msk [vmem:[#allocation3 + $0x4e] sm:$0xff] %vm875, %v3082
      %3219 = vst.msk [vmem:[#allocation3 + $0x56] sm:$0xff] %vm875, %v3084
      %3220 = vst.msk [vmem:[#allocation3 + $0x5e] sm:$0xff] %vm875, %v3086
      %3221 = vst.msk [vmem:[#allocation3 + $0x66] sm:$0xff] %vm875, %v3088
      %3222 = vst.msk [vmem:[#allocation3 + $0x6e] sm:$0xff] %vm875, %v3090
      %3223 = vst.msk [vmem:[#allocation3 + $0x76] sm:$0xff] %vm875, %v3092
      %3224 = vst.msk [vmem:[#allocation3 + $0x7e] sm:$0xff] %vm875, %v3094
      %3225 = vst.msk [vmem:[#allocation3 + $0x86] sm:$0xff] %vm875, %v3096
      %3226 = vst.msk [vmem:[#allocation3 + $0x8e] sm:$0xff] %vm875, %v3098
      %3227 = vst.msk [vmem:[#allocation3 + $0x96] sm:$0xff] %vm875, %v3100
      %3228 = vst.msk [vmem:[#allocation3 + $0x9e] sm:$0xff] %vm875, %v3102
      %3229 = vst.msk [vmem:[#allocation3 + $0xa6] sm:$0xff] %vm875, %v3104
      %3230 = vst.msk [vmem:[#allocation3 + $0xae] sm:$0xff] %vm875, %v3106
      %3231 = vst.msk [vmem:[#allocation3 + $0xb6] sm:$0xff] %vm875, %v3108
      %3232 = vst.msk [vmem:[#allocation3 + $0xbe] sm:$0xff] %vm875, %v3110
      %3233 = vst.msk [vmem:[#allocation3 + $0xc6] sm:$0xff] %vm875, %v3112
      %3234 = vst.msk [vmem:[#allocation3 + $0xce] sm:$0xff] %vm875, %v3114
      %3235 = vst.msk [vmem:[#allocation3 + $0xd6] sm:$0xff] %vm875, %v3116
      %3236 = vst.msk [vmem:[#allocation3 + $0xde] sm:$0xff] %vm875, %v3118
      %3237 = vst.msk [vmem:[#allocation3 + $0xe6] sm:$0xff] %vm875, %v3120
      %3238 = vst.msk [vmem:[#allocation3 + $0xee] sm:$0xff] %vm875, %v3122
      %3239 = vst.msk [vmem:[#allocation3 + $0xf6] sm:$0xff] %vm875, %v3124
      %3240 = vst.msk [vmem:[#allocation3 + $0xfe] sm:$0xff] %vm875, %v3126
      %3241 = vst.msk [vmem:[#allocation3 + $0x106] sm:$0xff] %vm875, %v3128
      %3242 = vst.msk [vmem:[#allocation3 + $0x10e] sm:$0xff] %vm875, %v3130
      %3243 = vst.msk [vmem:[#allocation3 + $0x116] sm:$0xff] %vm875, %v3132
      %3244 = vst.msk [vmem:[#allocation3 + $0x11e] sm:$0xff] %vm875, %v3134
      %3245 = vst.msk [vmem:[#allocation3 + $0x126] sm:$0xff] %vm875, %v3136
      %3246 = vst.msk [vmem:[#allocation3 + $0x12e] sm:$0xff] %vm875, %v3138
      %3247 = vst.msk [vmem:[#allocation3 + $0x136] sm:$0xff] %vm875, %v3140
      %3248 = vst.msk [vmem:[#allocation3 + $0x13e] sm:$0xff] %vm875, %v3142
      %3249 = vst.msk [vmem:[#allocation3 + $0x146] sm:$0xff] %vm875, %v3144
      %3250 = vst.msk [vmem:[#allocation3 + $0x14e] sm:$0xff] %vm875, %v3146
      %3251 = vst.msk [vmem:[#allocation3 + $0x156] sm:$0xff] %vm875, %v3148
      %3252 = vst.msk [vmem:[#allocation3 + $0x15e] sm:$0xff] %vm875, %v3150
      %3253 = vst.msk [vmem:[#allocation3 + $0x166] sm:$0xff] %vm875, %v3152
      %3254 = vst.msk [vmem:[#allocation3 + $0x16e] sm:$0xff] %vm875, %v3154
      %3255 = vst.msk [vmem:[#allocation3 + $0x176] sm:$0xff] %vm875, %v3156
      %3256 = vst.msk [vmem:[#allocation3 + $0x17e] sm:$0x3] %vm923, %v3158
      %3259 = vrot.lane.b32.xlu0 %v2716, 12
      %v3260 = vpop.permute.xlu0 %3259
      %3261 = vrot.lane.b32.xlu0 %v2717, 12
      %v3262 = vpop.permute.xlu0 %3261
      %3263 = vrot.lane.b32.xlu0 %v2718, 12
      %v3264 = vpop.permute.xlu0 %3263
      %3265 = vrot.lane.b32.xlu0 %v2719, 12
      %v3266 = vpop.permute.xlu0 %3265
      %3267 = vrot.lane.b32.xlu0 %v2720, 12
      %v3268 = vpop.permute.xlu0 %3267
      %3269 = vrot.lane.b32.xlu0 %v2721, 12
      %v3270 = vpop.permute.xlu0 %3269
      %3271 = vrot.lane.b32.xlu0 %v2722, 12
      %v3272 = vpop.permute.xlu0 %3271
      %3273 = vrot.lane.b32.xlu0 %v2723, 12
      %v3274 = vpop.permute.xlu0 %3273
      %3275 = vrot.lane.b32.xlu0 %v2724, 12
      %v3276 = vpop.permute.xlu0 %3275
      %3277 = vrot.lane.b32.xlu0 %v2725, 12
      %v3278 = vpop.permute.xlu0 %3277
      %3279 = vrot.lane.b32.xlu0 %v2726, 12
      %v3280 = vpop.permute.xlu0 %3279
      %3281 = vrot.lane.b32.xlu0 %v2727, 12
      %v3282 = vpop.permute.xlu0 %3281
      %3283 = vrot.lane.b32.xlu0 %v2728, 12
      %v3284 = vpop.permute.xlu0 %3283
      %3285 = vrot.lane.b32.xlu0 %v2729, 12
      %v3286 = vpop.permute.xlu0 %3285
      %3287 = vrot.lane.b32.xlu0 %v2730, 12
      %v3288 = vpop.permute.xlu0 %3287
      %3289 = vrot.lane.b32.xlu0 %v2731, 12
      %v3290 = vpop.permute.xlu0 %3289
      %3291 = vrot.lane.b32.xlu0 %v2732, 12
      %v3292 = vpop.permute.xlu0 %3291
      %3293 = vrot.lane.b32.xlu0 %v2733, 12
      %v3294 = vpop.permute.xlu0 %3293
      %3295 = vrot.lane.b32.xlu0 %v2734, 12
      %v3296 = vpop.permute.xlu0 %3295
      %3297 = vrot.lane.b32.xlu0 %v2735, 12
      %v3298 = vpop.permute.xlu0 %3297
      %3299 = vrot.lane.b32.xlu0 %v2736, 12
      %v3300 = vpop.permute.xlu0 %3299
      %3301 = vrot.lane.b32.xlu0 %v2737, 12
      %v3302 = vpop.permute.xlu0 %3301
      %3303 = vrot.lane.b32.xlu0 %v2738, 12
      %v3304 = vpop.permute.xlu0 %3303
      %3305 = vrot.lane.b32.xlu0 %v2739, 12
      %v3306 = vpop.permute.xlu0 %3305
      %3307 = vrot.lane.b32.xlu0 %v2740, 12
      %v3308 = vpop.permute.xlu0 %3307
      %3309 = vrot.lane.b32.xlu0 %v2741, 12
      %v3310 = vpop.permute.xlu0 %3309
      %3311 = vrot.lane.b32.xlu0 %v2742, 12
      %v3312 = vpop.permute.xlu0 %3311
      %3313 = vrot.lane.b32.xlu0 %v2743, 12
      %v3314 = vpop.permute.xlu0 %3313
      %3315 = vrot.lane.b32.xlu0 %v2744, 12
      %v3316 = vpop.permute.xlu0 %3315
      %3317 = vrot.lane.b32.xlu0 %v2745, 12
      %v3318 = vpop.permute.xlu0 %3317
      %3319 = vrot.lane.b32.xlu0 %v2746, 12
      %v3320 = vpop.permute.xlu0 %3319
      %3321 = vrot.lane.b32.xlu0 %v2747, 12
      %v3322 = vpop.permute.xlu0 %3321
      %3323 = vrot.lane.b32.xlu0 %v2748, 12
      %v3324 = vpop.permute.xlu0 %3323
      %3325 = vrot.lane.b32.xlu0 %v2749, 12
      %v3326 = vpop.permute.xlu0 %3325
      %3327 = vrot.lane.b32.xlu0 %v2750, 12
      %v3328 = vpop.permute.xlu0 %3327
      %3329 = vrot.lane.b32.xlu0 %v2751, 12
      %v3330 = vpop.permute.xlu0 %3329
      %3331 = vrot.lane.b32.xlu0 %v2752, 12
      %v3332 = vpop.permute.xlu0 %3331
      %3333 = vrot.lane.b32.xlu0 %v2753, 12
      %v3334 = vpop.permute.xlu0 %3333
      %3335 = vrot.lane.b32.xlu0 %v2754, 12
      %v3336 = vpop.permute.xlu0 %3335
      %3337 = vrot.lane.b32.xlu0 %v2755, 12
      %v3338 = vpop.permute.xlu0 %3337
      %3339 = vrot.lane.b32.xlu0 %v2756, 12
      %v3340 = vpop.permute.xlu0 %3339
      %3341 = vrot.lane.b32.xlu0 %v2757, 12
      %v3342 = vpop.permute.xlu0 %3341
      %3343 = vrot.lane.b32.xlu0 %v2758, 12
      %v3344 = vpop.permute.xlu0 %3343
      %3345 = vrot.lane.b32.xlu0 %v2759, 12
      %v3346 = vpop.permute.xlu0 %3345
      %3347 = vrot.lane.b32.xlu0 %v2760, 12
      %v3348 = vpop.permute.xlu0 %3347
      %3349 = vrot.lane.b32.xlu0 %v2761, 12
      %v3350 = vpop.permute.xlu0 %3349
      %3351 = vrot.lane.b32.xlu0 %v2762, 12
      %v3352 = vpop.permute.xlu0 %3351
      %3353 = vrot.lane.b32.xlu0 %v2763, 12
      %v3354 = vpop.permute.xlu0 %3353
      %3403 = vst.msk [vmem:[#allocation3] sm:$0xff] %vm1071, %v3260
      %3404 = vst.msk [vmem:[#allocation3 + $0x8] sm:$0xff] %vm1071, %v3262
      %3405 = vst.msk [vmem:[#allocation3 + $0x10] sm:$0xff] %vm1071, %v3264
      %3406 = vst.msk [vmem:[#allocation3 + $0x18] sm:$0xff] %vm1071, %v3266
      %3407 = vst.msk [vmem:[#allocation3 + $0x20] sm:$0xff] %vm1071, %v3268
      %3408 = vst.msk [vmem:[#allocation3 + $0x28] sm:$0xff] %vm1071, %v3270
      %3409 = vst.msk [vmem:[#allocation3 + $0x30] sm:$0xff] %vm1071, %v3272
      %3410 = vst.msk [vmem:[#allocation3 + $0x38] sm:$0xff] %vm1071, %v3274
      %3411 = vst.msk [vmem:[#allocation3 + $0x40] sm:$0xff] %vm1071, %v3276
      %3412 = vst.msk [vmem:[#allocation3 + $0x48] sm:$0xff] %vm1071, %v3278
      %3413 = vst.msk [vmem:[#allocation3 + $0x50] sm:$0xff] %vm1071, %v3280
      %3414 = vst.msk [vmem:[#allocation3 + $0x58] sm:$0xff] %vm1071, %v3282
      %3415 = vst.msk [vmem:[#allocation3 + $0x60] sm:$0xff] %vm1071, %v3284
      %3416 = vst.msk [vmem:[#allocation3 + $0x68] sm:$0xff] %vm1071, %v3286
      %3417 = vst.msk [vmem:[#allocation3 + $0x70] sm:$0xff] %vm1071, %v3288
      %3418 = vst.msk [vmem:[#allocation3 + $0x78] sm:$0xff] %vm1071, %v3290
      %3419 = vst.msk [vmem:[#allocation3 + $0x80] sm:$0xff] %vm1071, %v3292
      %3420 = vst.msk [vmem:[#allocation3 + $0x88] sm:$0xff] %vm1071, %v3294
      %3421 = vst.msk [vmem:[#allocation3 + $0x90] sm:$0xff] %vm1071, %v3296
      %3422 = vst.msk [vmem:[#allocation3 + $0x98] sm:$0xff] %vm1071, %v3298
      %3423 = vst.msk [vmem:[#allocation3 + $0xa0] sm:$0xff] %vm1071, %v3300
      %3424 = vst.msk [vmem:[#allocation3 + $0xa8] sm:$0xff] %vm1071, %v3302
      %3425 = vst.msk [vmem:[#allocation3 + $0xb0] sm:$0xff] %vm1071, %v3304
      %3426 = vst.msk [vmem:[#allocation3 + $0xb8] sm:$0xff] %vm1071, %v3306
      %3427 = vst.msk [vmem:[#allocation3 + $0xc0] sm:$0xff] %vm1071, %v3308
      %3428 = vst.msk [vmem:[#allocation3 + $0xc8] sm:$0xff] %vm1071, %v3310
      %3429 = vst.msk [vmem:[#allocation3 + $0xd0] sm:$0xff] %vm1071, %v3312
      %3430 = vst.msk [vmem:[#allocation3 + $0xd8] sm:$0xff] %vm1071, %v3314
      %3431 = vst.msk [vmem:[#allocation3 + $0xe0] sm:$0xff] %vm1071, %v3316
      %3432 = vst.msk [vmem:[#allocation3 + $0xe8] sm:$0xff] %vm1071, %v3318
      %3433 = vst.msk [vmem:[#allocation3 + $0xf0] sm:$0xff] %vm1071, %v3320
      %3434 = vst.msk [vmem:[#allocation3 + $0xf8] sm:$0xff] %vm1071, %v3322
      %3435 = vst.msk [vmem:[#allocation3 + $0x100] sm:$0xff] %vm1071, %v3324
      %3436 = vst.msk [vmem:[#allocation3 + $0x108] sm:$0xff] %vm1071, %v3326
      %3437 = vst.msk [vmem:[#allocation3 + $0x110] sm:$0xff] %vm1071, %v3328
      %3438 = vst.msk [vmem:[#allocation3 + $0x118] sm:$0xff] %vm1071, %v3330
      %3439 = vst.msk [vmem:[#allocation3 + $0x120] sm:$0xff] %vm1071, %v3332
      %3440 = vst.msk [vmem:[#allocation3 + $0x128] sm:$0xff] %vm1071, %v3334
      %3441 = vst.msk [vmem:[#allocation3 + $0x130] sm:$0xff] %vm1071, %v3336
      %3442 = vst.msk [vmem:[#allocation3 + $0x138] sm:$0xff] %vm1071, %v3338
      %3443 = vst.msk [vmem:[#allocation3 + $0x140] sm:$0xff] %vm1071, %v3340
      %3444 = vst.msk [vmem:[#allocation3 + $0x148] sm:$0xff] %vm1071, %v3342
      %3445 = vst.msk [vmem:[#allocation3 + $0x150] sm:$0xff] %vm1071, %v3344
      %3446 = vst.msk [vmem:[#allocation3 + $0x158] sm:$0xff] %vm1071, %v3346
      %3447 = vst.msk [vmem:[#allocation3 + $0x160] sm:$0xff] %vm1071, %v3348
      %3448 = vst.msk [vmem:[#allocation3 + $0x168] sm:$0xff] %vm1071, %v3350
      %3449 = vst.msk [vmem:[#allocation3 + $0x170] sm:$0xff] %vm1071, %v3352
      %3450 = vst.msk [vmem:[#allocation3 + $0x178] sm:$0xff] %vm1071, %v3354
      %3452 = vrot.lane.b32.xlu0 %v2716, 16
      %v3453 = vpop.permute.xlu0 %3452
      %3454 = vrot.lane.b32.xlu0 %v2717, 16
      %v3455 = vpop.permute.xlu0 %3454
      %3456 = vrot.lane.b32.xlu0 %v2718, 16
      %v3457 = vpop.permute.xlu0 %3456
      %3458 = vrot.lane.b32.xlu0 %v2719, 16
      %v3459 = vpop.permute.xlu0 %3458
      %3460 = vrot.lane.b32.xlu0 %v2720, 16
      %v3461 = vpop.permute.xlu0 %3460
      %3462 = vrot.lane.b32.xlu0 %v2721, 16
      %v3463 = vpop.permute.xlu0 %3462
      %3464 = vrot.lane.b32.xlu0 %v2722, 16
      %v3465 = vpop.permute.xlu0 %3464
      %3466 = vrot.lane.b32.xlu0 %v2723, 16
      %v3467 = vpop.permute.xlu0 %3466
      %3468 = vrot.lane.b32.xlu0 %v2724, 16
      %v3469 = vpop.permute.xlu0 %3468
      %3470 = vrot.lane.b32.xlu0 %v2725, 16
      %v3471 = vpop.permute.xlu0 %3470
      %3472 = vrot.lane.b32.xlu0 %v2726, 16
      %v3473 = vpop.permute.xlu0 %3472
      %3474 = vrot.lane.b32.xlu0 %v2727, 16
      %v3475 = vpop.permute.xlu0 %3474
      %3476 = vrot.lane.b32.xlu0 %v2728, 16
      %v3477 = vpop.permute.xlu0 %3476
      %3478 = vrot.lane.b32.xlu0 %v2729, 16
      %v3479 = vpop.permute.xlu0 %3478
      %3480 = vrot.lane.b32.xlu0 %v2730, 16
      %v3481 = vpop.permute.xlu0 %3480
      %3482 = vrot.lane.b32.xlu0 %v2731, 16
      %v3483 = vpop.permute.xlu0 %3482
      %3484 = vrot.lane.b32.xlu0 %v2732, 16
      %v3485 = vpop.permute.xlu0 %3484
      %3486 = vrot.lane.b32.xlu0 %v2733, 16
      %v3487 = vpop.permute.xlu0 %3486
      %3488 = vrot.lane.b32.xlu0 %v2734, 16
      %v3489 = vpop.permute.xlu0 %3488
      %3490 = vrot.lane.b32.xlu0 %v2735, 16
      %v3491 = vpop.permute.xlu0 %3490
      %3492 = vrot.lane.b32.xlu0 %v2736, 16
      %v3493 = vpop.permute.xlu0 %3492
      %3494 = vrot.lane.b32.xlu0 %v2737, 16
      %v3495 = vpop.permute.xlu0 %3494
      %3496 = vrot.lane.b32.xlu0 %v2738, 16
      %v3497 = vpop.permute.xlu0 %3496
      %3498 = vrot.lane.b32.xlu0 %v2739, 16
      %v3499 = vpop.permute.xlu0 %3498
      %3500 = vrot.lane.b32.xlu0 %v2740, 16
      %v3501 = vpop.permute.xlu0 %3500
      %3502 = vrot.lane.b32.xlu0 %v2741, 16
      %v3503 = vpop.permute.xlu0 %3502
      %3504 = vrot.lane.b32.xlu0 %v2742, 16
      %v3505 = vpop.permute.xlu0 %3504
      %3506 = vrot.lane.b32.xlu0 %v2743, 16
      %v3507 = vpop.permute.xlu0 %3506
      %3508 = vrot.lane.b32.xlu0 %v2744, 16
      %v3509 = vpop.permute.xlu0 %3508
      %3510 = vrot.lane.b32.xlu0 %v2745, 16
      %v3511 = vpop.permute.xlu0 %3510
      %3512 = vrot.lane.b32.xlu0 %v2746, 16
      %v3513 = vpop.permute.xlu0 %3512
      %3514 = vrot.lane.b32.xlu0 %v2747, 16
      %v3515 = vpop.permute.xlu0 %3514
      %3516 = vrot.lane.b32.xlu0 %v2748, 16
      %v3517 = vpop.permute.xlu0 %3516
      %3518 = vrot.lane.b32.xlu0 %v2749, 16
      %v3519 = vpop.permute.xlu0 %3518
      %3520 = vrot.lane.b32.xlu0 %v2750, 16
      %v3521 = vpop.permute.xlu0 %3520
      %3522 = vrot.lane.b32.xlu0 %v2751, 16
      %v3523 = vpop.permute.xlu0 %3522
      %3524 = vrot.lane.b32.xlu0 %v2752, 16
      %v3525 = vpop.permute.xlu0 %3524
      %3526 = vrot.lane.b32.xlu0 %v2753, 16
      %v3527 = vpop.permute.xlu0 %3526
      %3528 = vrot.lane.b32.xlu0 %v2754, 16
      %v3529 = vpop.permute.xlu0 %3528
      %3530 = vrot.lane.b32.xlu0 %v2755, 16
      %v3531 = vpop.permute.xlu0 %3530
      %3532 = vrot.lane.b32.xlu0 %v2756, 16
      %v3533 = vpop.permute.xlu0 %3532
      %3534 = vrot.lane.b32.xlu0 %v2757, 16
      %v3535 = vpop.permute.xlu0 %3534
      %3536 = vrot.lane.b32.xlu0 %v2758, 16
      %v3537 = vpop.permute.xlu0 %3536
      %3538 = vrot.lane.b32.xlu0 %v2759, 16
      %v3539 = vpop.permute.xlu0 %3538
      %3540 = vrot.lane.b32.xlu0 %v2760, 16
      %v3541 = vpop.permute.xlu0 %3540
      %3542 = vrot.lane.b32.xlu0 %v2761, 16
      %v3543 = vpop.permute.xlu0 %3542
      %3544 = vrot.lane.b32.xlu0 %v2762, 16
      %v3545 = vpop.permute.xlu0 %3544
      %3546 = vrot.lane.b32.xlu0 %v2763, 16
      %v3547 = vpop.permute.xlu0 %3546
      %3548 = vrot.lane.b32.xlu0 %v2764, 16
      %v3549 = vpop.permute.xlu0 %3548
      %3599 = vst.msk [vmem:[#allocation3 - $0x1] sm:$0xfe] %vm1268, %v3453
      %3600 = vst.msk [vmem:[#allocation3 + $0x7] sm:$0xff] %vm1270, %v3455
      %3601 = vst.msk [vmem:[#allocation3 + $0xf] sm:$0xff] %vm1270, %v3457
      %3602 = vst.msk [vmem:[#allocation3 + $0x17] sm:$0xff] %vm1270, %v3459
      %3603 = vst.msk [vmem:[#allocation3 + $0x1f] sm:$0xff] %vm1270, %v3461
      %3604 = vst.msk [vmem:[#allocation3 + $0x27] sm:$0xff] %vm1270, %v3463
      %3605 = vst.msk [vmem:[#allocation3 + $0x2f] sm:$0xff] %vm1270, %v3465
      %3606 = vst.msk [vmem:[#allocation3 + $0x37] sm:$0xff] %vm1270, %v3467
      %3607 = vst.msk [vmem:[#allocation3 + $0x3f] sm:$0xff] %vm1270, %v3469
      %3608 = vst.msk [vmem:[#allocation3 + $0x47] sm:$0xff] %vm1270, %v3471
      %3609 = vst.msk [vmem:[#allocation3 + $0x4f] sm:$0xff] %vm1270, %v3473
      %3610 = vst.msk [vmem:[#allocation3 + $0x57] sm:$0xff] %vm1270, %v3475
      %3611 = vst.msk [vmem:[#allocation3 + $0x5f] sm:$0xff] %vm1270, %v3477
      %3612 = vst.msk [vmem:[#allocation3 + $0x67] sm:$0xff] %vm1270, %v3479
      %3613 = vst.msk [vmem:[#allocation3 + $0x6f] sm:$0xff] %vm1270, %v3481
      %3614 = vst.msk [vmem:[#allocation3 + $0x77] sm:$0xff] %vm1270, %v3483
      %3615 = vst.msk [vmem:[#allocation3 + $0x7f] sm:$0xff] %vm1270, %v3485
      %3616 = vst.msk [vmem:[#allocation3 + $0x87] sm:$0xff] %vm1270, %v3487
      %3617 = vst.msk [vmem:[#allocation3 + $0x8f] sm:$0xff] %vm1270, %v3489
      %3618 = vst.msk [vmem:[#allocation3 + $0x97] sm:$0xff] %vm1270, %v3491
      %3619 = vst.msk [vmem:[#allocation3 + $0x9f] sm:$0xff] %vm1270, %v3493
      %3620 = vst.msk [vmem:[#allocation3 + $0xa7] sm:$0xff] %vm1270, %v3495
      %3621 = vst.msk [vmem:[#allocation3 + $0xaf] sm:$0xff] %vm1270, %v3497
      %3622 = vst.msk [vmem:[#allocation3 + $0xb7] sm:$0xff] %vm1270, %v3499
      %3623 = vst.msk [vmem:[#allocation3 + $0xbf] sm:$0xff] %vm1270, %v3501
      %3624 = vst.msk [vmem:[#allocation3 + $0xc7] sm:$0xff] %vm1270, %v3503
      %3625 = vst.msk [vmem:[#allocation3 + $0xcf] sm:$0xff] %vm1270, %v3505
      %3626 = vst.msk [vmem:[#allocation3 + $0xd7] sm:$0xff] %vm1270, %v3507
      %3627 = vst.msk [vmem:[#allocation3 + $0xdf] sm:$0xff] %vm1270, %v3509
      %3628 = vst.msk [vmem:[#allocation3 + $0xe7] sm:$0xff] %vm1270, %v3511
      %3629 = vst.msk [vmem:[#allocation3 + $0xef] sm:$0xff] %vm1270, %v3513
      %3630 = vst.msk [vmem:[#allocation3 + $0xf7] sm:$0xff] %vm1270, %v3515
      %3631 = vst.msk [vmem:[#allocation3 + $0xff] sm:$0xff] %vm1270, %v3517
      %3632 = vst.msk [vmem:[#allocation3 + $0x107] sm:$0xff] %vm1270, %v3519
      %3633 = vst.msk [vmem:[#allocation3 + $0x10f] sm:$0xff] %vm1270, %v3521
      %3634 = vst.msk [vmem:[#allocation3 + $0x117] sm:$0xff] %vm1270, %v3523
      %3635 = vst.msk [vmem:[#allocation3 + $0x11f] sm:$0xff] %vm1270, %v3525
      %3636 = vst.msk [vmem:[#allocation3 + $0x127] sm:$0xff] %vm1270, %v3527
      %3637 = vst.msk [vmem:[#allocation3 + $0x12f] sm:$0xff] %vm1270, %v3529
      %3638 = vst.msk [vmem:[#allocation3 + $0x137] sm:$0xff] %vm1270, %v3531
      %3639 = vst.msk [vmem:[#allocation3 + $0x13f] sm:$0xff] %vm1270, %v3533
      %3640 = vst.msk [vmem:[#allocation3 + $0x147] sm:$0xff] %vm1270, %v3535
      %3641 = vst.msk [vmem:[#allocation3 + $0x14f] sm:$0xff] %vm1270, %v3537
      %3642 = vst.msk [vmem:[#allocation3 + $0x157] sm:$0xff] %vm1270, %v3539
      %3643 = vst.msk [vmem:[#allocation3 + $0x15f] sm:$0xff] %vm1270, %v3541
      %3644 = vst.msk [vmem:[#allocation3 + $0x167] sm:$0xff] %vm1270, %v3543
      %3645 = vst.msk [vmem:[#allocation3 + $0x16f] sm:$0xff] %vm1270, %v3545
      %3646 = vst.msk [vmem:[#allocation3 + $0x177] sm:$0xff] %vm1270, %v3547
      %3647 = vst.msk [vmem:[#allocation3 + $0x17f] sm:$0x1] %vm1318, %v3549
      %3648 = vrot.lane.b32.xlu0 %v2716, 20
      %v3649 = vpop.permute.xlu0 %3648
      %3650 = vrot.lane.b32.xlu0 %v2717, 20
      %v3651 = vpop.permute.xlu0 %3650
      %3652 = vrot.lane.b32.xlu0 %v2718, 20
      %v3653 = vpop.permute.xlu0 %3652
      %3654 = vrot.lane.b32.xlu0 %v2719, 20
      %v3655 = vpop.permute.xlu0 %3654
      %3656 = vrot.lane.b32.xlu0 %v2720, 20
      %v3657 = vpop.permute.xlu0 %3656
      %3658 = vrot.lane.b32.xlu0 %v2721, 20
      %v3659 = vpop.permute.xlu0 %3658
      %3660 = vrot.lane.b32.xlu0 %v2722, 20
      %v3661 = vpop.permute.xlu0 %3660
      %3662 = vrot.lane.b32.xlu0 %v2723, 20
      %v3663 = vpop.permute.xlu0 %3662
      %3664 = vrot.lane.b32.xlu0 %v2724, 20
      %v3665 = vpop.permute.xlu0 %3664
      %3666 = vrot.lane.b32.xlu0 %v2725, 20
      %v3667 = vpop.permute.xlu0 %3666
      %3668 = vrot.lane.b32.xlu0 %v2726, 20
      %v3669 = vpop.permute.xlu0 %3668
      %3670 = vrot.lane.b32.xlu0 %v2727, 20
      %v3671 = vpop.permute.xlu0 %3670
      %3672 = vrot.lane.b32.xlu0 %v2728, 20
      %v3673 = vpop.permute.xlu0 %3672
      %3674 = vrot.lane.b32.xlu0 %v2729, 20
      %v3675 = vpop.permute.xlu0 %3674
      %3676 = vrot.lane.b32.xlu0 %v2730, 20
      %v3677 = vpop.permute.xlu0 %3676
      %3678 = vrot.lane.b32.xlu0 %v2731, 20
      %v3679 = vpop.permute.xlu0 %3678
      %3680 = vrot.lane.b32.xlu0 %v2732, 20
      %v3681 = vpop.permute.xlu0 %3680
      %3682 = vrot.lane.b32.xlu0 %v2733, 20
      %v3683 = vpop.permute.xlu0 %3682
      %3684 = vrot.lane.b32.xlu0 %v2734, 20
      %v3685 = vpop.permute.xlu0 %3684
      %3686 = vrot.lane.b32.xlu0 %v2735, 20
      %v3687 = vpop.permute.xlu0 %3686
      %3688 = vrot.lane.b32.xlu0 %v2736, 20
      %v3689 = vpop.permute.xlu0 %3688
      %3690 = vrot.lane.b32.xlu0 %v2737, 20
      %v3691 = vpop.permute.xlu0 %3690
      %3692 = vrot.lane.b32.xlu0 %v2738, 20
      %v3693 = vpop.permute.xlu0 %3692
      %3694 = vrot.lane.b32.xlu0 %v2739, 20
      %v3695 = vpop.permute.xlu0 %3694
      %3696 = vrot.lane.b32.xlu0 %v2740, 20
      %v3697 = vpop.permute.xlu0 %3696
      %3698 = vrot.lane.b32.xlu0 %v2741, 20
      %v3699 = vpop.permute.xlu0 %3698
      %3700 = vrot.lane.b32.xlu0 %v2742, 20
      %v3701 = vpop.permute.xlu0 %3700
      %3702 = vrot.lane.b32.xlu0 %v2743, 20
      %v3703 = vpop.permute.xlu0 %3702
      %3704 = vrot.lane.b32.xlu0 %v2744, 20
      %v3705 = vpop.permute.xlu0 %3704
      %3706 = vrot.lane.b32.xlu0 %v2745, 20
      %v3707 = vpop.permute.xlu0 %3706
      %3708 = vrot.lane.b32.xlu0 %v2746, 20
      %v3709 = vpop.permute.xlu0 %3708
      %3710 = vrot.lane.b32.xlu0 %v2747, 20
      %v3711 = vpop.permute.xlu0 %3710
      %3712 = vrot.lane.b32.xlu0 %v2748, 20
      %v3713 = vpop.permute.xlu0 %3712
      %3714 = vrot.lane.b32.xlu0 %v2749, 20
      %v3715 = vpop.permute.xlu0 %3714
      %3716 = vrot.lane.b32.xlu0 %v2750, 20
      %v3717 = vpop.permute.xlu0 %3716
      %3718 = vrot.lane.b32.xlu0 %v2751, 20
      %v3719 = vpop.permute.xlu0 %3718
      %3720 = vrot.lane.b32.xlu0 %v2752, 20
      %v3721 = vpop.permute.xlu0 %3720
      %3722 = vrot.lane.b32.xlu0 %v2753, 20
      %v3723 = vpop.permute.xlu0 %3722
      %3724 = vrot.lane.b32.xlu0 %v2754, 20
      %v3725 = vpop.permute.xlu0 %3724
      %3726 = vrot.lane.b32.xlu0 %v2755, 20
      %v3727 = vpop.permute.xlu0 %3726
      %3728 = vrot.lane.b32.xlu0 %v2756, 20
      %v3729 = vpop.permute.xlu0 %3728
      %3730 = vrot.lane.b32.xlu0 %v2757, 20
      %v3731 = vpop.permute.xlu0 %3730
      %3732 = vrot.lane.b32.xlu0 %v2758, 20
      %v3733 = vpop.permute.xlu0 %3732
      %3734 = vrot.lane.b32.xlu0 %v2759, 20
      %v3735 = vpop.permute.xlu0 %3734
      %3736 = vrot.lane.b32.xlu0 %v2760, 20
      %v3737 = vpop.permute.xlu0 %3736
      %3738 = vrot.lane.b32.xlu0 %v2761, 20
      %v3739 = vpop.permute.xlu0 %3738
      %3740 = vrot.lane.b32.xlu0 %v2762, 20
      %v3741 = vpop.permute.xlu0 %3740
      %3742 = vrot.lane.b32.xlu0 %v2763, 20
      %v3743 = vpop.permute.xlu0 %3742
      %3744 = vrot.lane.b32.xlu0 %v2764, 20
      %v3745 = vpop.permute.xlu0 %3744
      %3795 = vst.msk [vmem:[#allocation3 - $0x2] sm:$0xfc] %vm1467, %v3649
      %3796 = vst.msk [vmem:[#allocation3 + $0x6] sm:$0xff] %vm1469, %v3651
      %3797 = vst.msk [vmem:[#allocation3 + $0xe] sm:$0xff] %vm1469, %v3653
      %3798 = vst.msk [vmem:[#allocation3 + $0x16] sm:$0xff] %vm1469, %v3655
      %3799 = vst.msk [vmem:[#allocation3 + $0x1e] sm:$0xff] %vm1469, %v3657
      %3800 = vst.msk [vmem:[#allocation3 + $0x26] sm:$0xff] %vm1469, %v3659
      %3801 = vst.msk [vmem:[#allocation3 + $0x2e] sm:$0xff] %vm1469, %v3661
      %3802 = vst.msk [vmem:[#allocation3 + $0x36] sm:$0xff] %vm1469, %v3663
      %3803 = vst.msk [vmem:[#allocation3 + $0x3e] sm:$0xff] %vm1469, %v3665
      %3804 = vst.msk [vmem:[#allocation3 + $0x46] sm:$0xff] %vm1469, %v3667
      %3805 = vst.msk [vmem:[#allocation3 + $0x4e] sm:$0xff] %vm1469, %v3669
      %3806 = vst.msk [vmem:[#allocation3 + $0x56] sm:$0xff] %vm1469, %v3671
      %3807 = vst.msk [vmem:[#allocation3 + $0x5e] sm:$0xff] %vm1469, %v3673
      %3808 = vst.msk [vmem:[#allocation3 + $0x66] sm:$0xff] %vm1469, %v3675
      %3809 = vst.msk [vmem:[#allocation3 + $0x6e] sm:$0xff] %vm1469, %v3677
      %3810 = vst.msk [vmem:[#allocation3 + $0x76] sm:$0xff] %vm1469, %v3679
      %3811 = vst.msk [vmem:[#allocation3 + $0x7e] sm:$0xff] %vm1469, %v3681
      %3812 = vst.msk [vmem:[#allocation3 + $0x86] sm:$0xff] %vm1469, %v3683
      %3813 = vst.msk [vmem:[#allocation3 + $0x8e] sm:$0xff] %vm1469, %v3685
      %3814 = vst.msk [vmem:[#allocation3 + $0x96] sm:$0xff] %vm1469, %v3687
      %3815 = vst.msk [vmem:[#allocation3 + $0x9e] sm:$0xff] %vm1469, %v3689
      %3816 = vst.msk [vmem:[#allocation3 + $0xa6] sm:$0xff] %vm1469, %v3691
      %3817 = vst.msk [vmem:[#allocation3 + $0xae] sm:$0xff] %vm1469, %v3693
      %3818 = vst.msk [vmem:[#allocation3 + $0xb6] sm:$0xff] %vm1469, %v3695
      %3819 = vst.msk [vmem:[#allocation3 + $0xbe] sm:$0xff] %vm1469, %v3697
      %3820 = vst.msk [vmem:[#allocation3 + $0xc6] sm:$0xff] %vm1469, %v3699
      %3821 = vst.msk [vmem:[#allocation3 + $0xce] sm:$0xff] %vm1469, %v3701
      %3822 = vst.msk [vmem:[#allocation3 + $0xd6] sm:$0xff] %vm1469, %v3703
      %3823 = vst.msk [vmem:[#allocation3 + $0xde] sm:$0xff] %vm1469, %v3705
      %3824 = vst.msk [vmem:[#allocation3 + $0xe6] sm:$0xff] %vm1469, %v3707
      %3825 = vst.msk [vmem:[#allocation3 + $0xee] sm:$0xff] %vm1469, %v3709
      %3826 = vst.msk [vmem:[#allocation3 + $0xf6] sm:$0xff] %vm1469, %v3711
      %3827 = vst.msk [vmem:[#allocation3 + $0xfe] sm:$0xff] %vm1469, %v3713
      %3828 = vst.msk [vmem:[#allocation3 + $0x106] sm:$0xff] %vm1469, %v3715
      %3829 = vst.msk [vmem:[#allocation3 + $0x10e] sm:$0xff] %vm1469, %v3717
      %3830 = vst.msk [vmem:[#allocation3 + $0x116] sm:$0xff] %vm1469, %v3719
      %3831 = vst.msk [vmem:[#allocation3 + $0x11e] sm:$0xff] %vm1469, %v3721
      %3832 = vst.msk [vmem:[#allocation3 + $0x126] sm:$0xff] %vm1469, %v3723
      %3833 = vst.msk [vmem:[#allocation3 + $0x12e] sm:$0xff] %vm1469, %v3725
      %3834 = vst.msk [vmem:[#allocation3 + $0x136] sm:$0xff] %vm1469, %v3727
      %3835 = vst.msk [vmem:[#allocation3 + $0x13e] sm:$0xff] %vm1469, %v3729
      %3836 = vst.msk [vmem:[#allocation3 + $0x146] sm:$0xff] %vm1469, %v3731
      %3837 = vst.msk [vmem:[#allocation3 + $0x14e] sm:$0xff] %vm1469, %v3733
      %3838 = vst.msk [vmem:[#allocation3 + $0x156] sm:$0xff] %vm1469, %v3735
      %3839 = vst.msk [vmem:[#allocation3 + $0x15e] sm:$0xff] %vm1469, %v3737
      %3840 = vst.msk [vmem:[#allocation3 + $0x166] sm:$0xff] %vm1469, %v3739
      %3841 = vst.msk [vmem:[#allocation3 + $0x16e] sm:$0xff] %vm1469, %v3741
      %3842 = vst.msk [vmem:[#allocation3 + $0x176] sm:$0xff] %vm1469, %v3743
      %3843 = vst.msk [vmem:[#allocation3 + $0x17e] sm:$0x3] %vm1517, %v3745
      %3846 = vrot.lane.b32.xlu0 %v2719, 24
      %v3847 = vpop.permute.xlu0 %3846
      %3848 = vrot.lane.b32.xlu0 %v2720, 24
      %v3849 = vpop.permute.xlu0 %3848
      %3850 = vrot.lane.b32.xlu0 %v2721, 24
      %v3851 = vpop.permute.xlu0 %3850
      %3852 = vrot.lane.b32.xlu0 %v2722, 24
      %v3853 = vpop.permute.xlu0 %3852
      %3854 = vrot.lane.b32.xlu0 %v2723, 24
      %v3855 = vpop.permute.xlu0 %3854
      %3856 = vrot.lane.b32.xlu0 %v2724, 24
      %v3857 = vpop.permute.xlu0 %3856
      %3858 = vrot.lane.b32.xlu0 %v2725, 24
      %v3859 = vpop.permute.xlu0 %3858
      %3860 = vrot.lane.b32.xlu0 %v2726, 24
      %v3861 = vpop.permute.xlu0 %3860
      %3862 = vrot.lane.b32.xlu0 %v2727, 24
      %v3863 = vpop.permute.xlu0 %3862
      %3864 = vrot.lane.b32.xlu0 %v2728, 24
      %v3865 = vpop.permute.xlu0 %3864
      %3866 = vrot.lane.b32.xlu0 %v2729, 24
      %v3867 = vpop.permute.xlu0 %3866
      %3868 = vrot.lane.b32.xlu0 %v2730, 24
      %v3869 = vpop.permute.xlu0 %3868
      %3870 = vrot.lane.b32.xlu0 %v2731, 24
      %v3871 = vpop.permute.xlu0 %3870
      %3872 = vrot.lane.b32.xlu0 %v2732, 24
      %v3873 = vpop.permute.xlu0 %3872
      %3874 = vrot.lane.b32.xlu0 %v2733, 24
      %v3875 = vpop.permute.xlu0 %3874
      %3876 = vrot.lane.b32.xlu0 %v2734, 24
      %v3877 = vpop.permute.xlu0 %3876
      %3878 = vrot.lane.b32.xlu0 %v2735, 24
      %v3879 = vpop.permute.xlu0 %3878
      %3880 = vrot.lane.b32.xlu0 %v2736, 24
      %v3881 = vpop.permute.xlu0 %3880
      %3882 = vrot.lane.b32.xlu0 %v2737, 24
      %v3883 = vpop.permute.xlu0 %3882
      %3884 = vrot.lane.b32.xlu0 %v2738, 24
      %v3885 = vpop.permute.xlu0 %3884
      %3886 = vrot.lane.b32.xlu0 %v2739, 24
      %v3887 = vpop.permute.xlu0 %3886
      %3888 = vrot.lane.b32.xlu0 %v2740, 24
      %v3889 = vpop.permute.xlu0 %3888
      %3890 = vrot.lane.b32.xlu0 %v2741, 24
      %v3891 = vpop.permute.xlu0 %3890
      %3892 = vrot.lane.b32.xlu0 %v2742, 24
      %v3893 = vpop.permute.xlu0 %3892
      %3894 = vrot.lane.b32.xlu0 %v2743, 24
      %v3895 = vpop.permute.xlu0 %3894
      %3896 = vrot.lane.b32.xlu0 %v2744, 24
      %v3897 = vpop.permute.xlu0 %3896
      %3898 = vrot.lane.b32.xlu0 %v2745, 24
      %v3899 = vpop.permute.xlu0 %3898
      %3900 = vrot.lane.b32.xlu0 %v2746, 24
      %v3901 = vpop.permute.xlu0 %3900
      %3902 = vrot.lane.b32.xlu0 %v2747, 24
      %v3903 = vpop.permute.xlu0 %3902
      %3904 = vrot.lane.b32.xlu0 %v2748, 24
      %v3905 = vpop.permute.xlu0 %3904
      %3906 = vrot.lane.b32.xlu0 %v2749, 24
      %v3907 = vpop.permute.xlu0 %3906
      %3908 = vrot.lane.b32.xlu0 %v2750, 24
      %v3909 = vpop.permute.xlu0 %3908
      %3910 = vrot.lane.b32.xlu0 %v2751, 24
      %v3911 = vpop.permute.xlu0 %3910
      %3912 = vrot.lane.b32.xlu0 %v2752, 24
      %v3913 = vpop.permute.xlu0 %3912
      %3914 = vrot.lane.b32.xlu0 %v2753, 24
      %v3915 = vpop.permute.xlu0 %3914
      %3916 = vrot.lane.b32.xlu0 %v2754, 24
      %v3917 = vpop.permute.xlu0 %3916
      %3918 = vrot.lane.b32.xlu0 %v2755, 24
      %v3919 = vpop.permute.xlu0 %3918
      %3920 = vrot.lane.b32.xlu0 %v2756, 24
      %v3921 = vpop.permute.xlu0 %3920
      %3922 = vrot.lane.b32.xlu0 %v2757, 24
      %v3923 = vpop.permute.xlu0 %3922
      %3924 = vrot.lane.b32.xlu0 %v2758, 24
      %v3925 = vpop.permute.xlu0 %3924
      %3926 = vrot.lane.b32.xlu0 %v2759, 24
      %v3927 = vpop.permute.xlu0 %3926
      %3928 = vrot.lane.b32.xlu0 %v2760, 24
      %v3929 = vpop.permute.xlu0 %3928
      %3930 = vrot.lane.b32.xlu0 %v2761, 24
      %v3931 = vpop.permute.xlu0 %3930
      %3932 = vrot.lane.b32.xlu0 %v2762, 24
      %v3933 = vpop.permute.xlu0 %3932
      %3934 = vrot.lane.b32.xlu0 %v2763, 24
      %v3935 = vpop.permute.xlu0 %3934
      %3936 = vrot.lane.b32.xlu0 %v2764, 24
      %v3937 = vpop.permute.xlu0 %3936
      %3938 = vrot.lane.b32.xlu0 %v2765, 24
      %v3939 = vpop.permute.xlu0 %3938
      %3940 = vrot.lane.b32.xlu0 %v2766, 24
      %v3941 = vpop.permute.xlu0 %3940
      %3990 = vst.msk [vmem:[#allocation3] sm:$0xff] %vm1665, %v3847
      %3991 = vst.msk [vmem:[#allocation3 + $0x8] sm:$0xff] %vm1665, %v3849
      %3992 = vst.msk [vmem:[#allocation3 + $0x10] sm:$0xff] %vm1665, %v3851
      %3993 = vst.msk [vmem:[#allocation3 + $0x18] sm:$0xff] %vm1665, %v3853
      %3994 = vst.msk [vmem:[#allocation3 + $0x20] sm:$0xff] %vm1665, %v3855
      %3995 = vst.msk [vmem:[#allocation3 + $0x28] sm:$0xff] %vm1665, %v3857
      %3996 = vst.msk [vmem:[#allocation3 + $0x30] sm:$0xff] %vm1665, %v3859
      %3997 = vst.msk [vmem:[#allocation3 + $0x38] sm:$0xff] %vm1665, %v3861
      %3998 = vst.msk [vmem:[#allocation3 + $0x40] sm:$0xff] %vm1665, %v3863
      %3999 = vst.msk [vmem:[#allocation3 + $0x48] sm:$0xff] %vm1665, %v3865
      %4000 = vst.msk [vmem:[#allocation3 + $0x50] sm:$0xff] %vm1665, %v3867
      %4001 = vst.msk [vmem:[#allocation3 + $0x58] sm:$0xff] %vm1665, %v3869
      %4002 = vst.msk [vmem:[#allocation3 + $0x60] sm:$0xff] %vm1665, %v3871
      %4003 = vst.msk [vmem:[#allocation3 + $0x68] sm:$0xff] %vm1665, %v3873
      %4004 = vst.msk [vmem:[#allocation3 + $0x70] sm:$0xff] %vm1665, %v3875
      %4005 = vst.msk [vmem:[#allocation3 + $0x78] sm:$0xff] %vm1665, %v3877
      %4006 = vst.msk [vmem:[#allocation3 + $0x80] sm:$0xff] %vm1665, %v3879
      %4007 = vst.msk [vmem:[#allocation3 + $0x88] sm:$0xff] %vm1665, %v3881
      %4008 = vst.msk [vmem:[#allocation3 + $0x90] sm:$0xff] %vm1665, %v3883
      %4009 = vst.msk [vmem:[#allocation3 + $0x98] sm:$0xff] %vm1665, %v3885
      %4010 = vst.msk [vmem:[#allocation3 + $0xa0] sm:$0xff] %vm1665, %v3887
      %4011 = vst.msk [vmem:[#allocation3 + $0xa8] sm:$0xff] %vm1665, %v3889
      %4012 = vst.msk [vmem:[#allocation3 + $0xb0] sm:$0xff] %vm1665, %v3891
      %4013 = vst.msk [vmem:[#allocation3 + $0xb8] sm:$0xff] %vm1665, %v3893
      %4014 = vst.msk [vmem:[#allocation3 + $0xc0] sm:$0xff] %vm1665, %v3895
      %4015 = vst.msk [vmem:[#allocation3 + $0xc8] sm:$0xff] %vm1665, %v3897
      %4016 = vst.msk [vmem:[#allocation3 + $0xd0] sm:$0xff] %vm1665, %v3899
      %4017 = vst.msk [vmem:[#allocation3 + $0xd8] sm:$0xff] %vm1665, %v3901
      %4018 = vst.msk [vmem:[#allocation3 + $0xe0] sm:$0xff] %vm1665, %v3903
      %4019 = vst.msk [vmem:[#allocation3 + $0xe8] sm:$0xff] %vm1665, %v3905
      %4020 = vst.msk [vmem:[#allocation3 + $0xf0] sm:$0xff] %vm1665, %v3907
      %4021 = vst.msk [vmem:[#allocation3 + $0xf8] sm:$0xff] %vm1665, %v3909
      %4022 = vst.msk [vmem:[#allocation3 + $0x100] sm:$0xff] %vm1665, %v3911
      %4023 = vst.msk [vmem:[#allocation3 + $0x108] sm:$0xff] %vm1665, %v3913
      %4024 = vst.msk [vmem:[#allocation3 + $0x110] sm:$0xff] %vm1665, %v3915
      %4025 = vst.msk [vmem:[#allocation3 + $0x118] sm:$0xff] %vm1665, %v3917
      %4026 = vst.msk [vmem:[#allocation3 + $0x120] sm:$0xff] %vm1665, %v3919
      %4027 = vst.msk [vmem:[#allocation3 + $0x128] sm:$0xff] %vm1665, %v3921
      %4028 = vst.msk [vmem:[#allocation3 + $0x130] sm:$0xff] %vm1665, %v3923
      %4029 = vst.msk [vmem:[#allocation3 + $0x138] sm:$0xff] %vm1665, %v3925
      %4030 = vst.msk [vmem:[#allocation3 + $0x140] sm:$0xff] %vm1665, %v3927
      %4031 = vst.msk [vmem:[#allocation3 + $0x148] sm:$0xff] %vm1665, %v3929
      %4032 = vst.msk [vmem:[#allocation3 + $0x150] sm:$0xff] %vm1665, %v3931
      %4033 = vst.msk [vmem:[#allocation3 + $0x158] sm:$0xff] %vm1665, %v3933
      %4034 = vst.msk [vmem:[#allocation3 + $0x160] sm:$0xff] %vm1665, %v3935
      %4035 = vst.msk [vmem:[#allocation3 + $0x168] sm:$0xff] %vm1665, %v3937
      %4036 = vst.msk [vmem:[#allocation3 + $0x170] sm:$0xff] %vm1665, %v3939
      %4037 = vst.msk [vmem:[#allocation3 + $0x178] sm:$0xff] %vm1665, %v3941
      %4039 = vrot.lane.b32.xlu0 %v2719, 28
      %v4040 = vpop.permute.xlu0 %4039
      %4041 = vrot.lane.b32.xlu0 %v2720, 28
      %v4042 = vpop.permute.xlu0 %4041
      %4043 = vrot.lane.b32.xlu0 %v2721, 28
      %v4044 = vpop.permute.xlu0 %4043
      %4045 = vrot.lane.b32.xlu0 %v2722, 28
      %v4046 = vpop.permute.xlu0 %4045
      %4047 = vrot.lane.b32.xlu0 %v2723, 28
      %v4048 = vpop.permute.xlu0 %4047
      %4049 = vrot.lane.b32.xlu0 %v2724, 28
      %v4050 = vpop.permute.xlu0 %4049
      %4051 = vrot.lane.b32.xlu0 %v2725, 28
      %v4052 = vpop.permute.xlu0 %4051
      %4053 = vrot.lane.b32.xlu0 %v2726, 28
      %v4054 = vpop.permute.xlu0 %4053
      %4055 = vrot.lane.b32.xlu0 %v2727, 28
      %v4056 = vpop.permute.xlu0 %4055
      %4057 = vrot.lane.b32.xlu0 %v2728, 28
      %v4058 = vpop.permute.xlu0 %4057
      %4059 = vrot.lane.b32.xlu0 %v2729, 28
      %v4060 = vpop.permute.xlu0 %4059
      %4061 = vrot.lane.b32.xlu0 %v2730, 28
      %v4062 = vpop.permute.xlu0 %4061
      %4063 = vrot.lane.b32.xlu0 %v2731, 28
      %v4064 = vpop.permute.xlu0 %4063
      %4065 = vrot.lane.b32.xlu0 %v2732, 28
      %v4066 = vpop.permute.xlu0 %4065
      %4067 = vrot.lane.b32.xlu0 %v2733, 28
      %v4068 = vpop.permute.xlu0 %4067
      %4069 = vrot.lane.b32.xlu0 %v2734, 28
      %v4070 = vpop.permute.xlu0 %4069
      %4071 = vrot.lane.b32.xlu0 %v2735, 28
      %v4072 = vpop.permute.xlu0 %4071
      %4073 = vrot.lane.b32.xlu0 %v2736, 28
      %v4074 = vpop.permute.xlu0 %4073
      %4075 = vrot.lane.b32.xlu0 %v2737, 28
      %v4076 = vpop.permute.xlu0 %4075
      %4077 = vrot.lane.b32.xlu0 %v2738, 28
      %v4078 = vpop.permute.xlu0 %4077
      %4079 = vrot.lane.b32.xlu0 %v2739, 28
      %v4080 = vpop.permute.xlu0 %4079
      %4081 = vrot.lane.b32.xlu0 %v2740, 28
      %v4082 = vpop.permute.xlu0 %4081
      %4083 = vrot.lane.b32.xlu0 %v2741, 28
      %v4084 = vpop.permute.xlu0 %4083
      %4085 = vrot.lane.b32.xlu0 %v2742, 28
      %v4086 = vpop.permute.xlu0 %4085
      %4087 = vrot.lane.b32.xlu0 %v2743, 28
      %v4088 = vpop.permute.xlu0 %4087
      %4089 = vrot.lane.b32.xlu0 %v2744, 28
      %v4090 = vpop.permute.xlu0 %4089
      %4091 = vrot.lane.b32.xlu0 %v2745, 28
      %v4092 = vpop.permute.xlu0 %4091
      %4093 = vrot.lane.b32.xlu0 %v2746, 28
      %v4094 = vpop.permute.xlu0 %4093
      %4095 = vrot.lane.b32.xlu0 %v2747, 28
      %v4096 = vpop.permute.xlu0 %4095
      %4097 = vrot.lane.b32.xlu0 %v2748, 28
      %v4098 = vpop.permute.xlu0 %4097
      %4099 = vrot.lane.b32.xlu0 %v2749, 28
      %v4100 = vpop.permute.xlu0 %4099
      %4101 = vrot.lane.b32.xlu0 %v2750, 28
      %v4102 = vpop.permute.xlu0 %4101
      %4103 = vrot.lane.b32.xlu0 %v2751, 28
      %v4104 = vpop.permute.xlu0 %4103
      %4105 = vrot.lane.b32.xlu0 %v2752, 28
      %v4106 = vpop.permute.xlu0 %4105
      %4107 = vrot.lane.b32.xlu0 %v2753, 28
      %v4108 = vpop.permute.xlu0 %4107
      %4109 = vrot.lane.b32.xlu0 %v2754, 28
      %v4110 = vpop.permute.xlu0 %4109
      %4111 = vrot.lane.b32.xlu0 %v2755, 28
      %v4112 = vpop.permute.xlu0 %4111
      %4113 = vrot.lane.b32.xlu0 %v2756, 28
      %v4114 = vpop.permute.xlu0 %4113
      %4115 = vrot.lane.b32.xlu0 %v2757, 28
      %v4116 = vpop.permute.xlu0 %4115
      %4117 = vrot.lane.b32.xlu0 %v2758, 28
      %v4118 = vpop.permute.xlu0 %4117
      %4119 = vrot.lane.b32.xlu0 %v2759, 28
      %v4120 = vpop.permute.xlu0 %4119
      %4121 = vrot.lane.b32.xlu0 %v2760, 28
      %v4122 = vpop.permute.xlu0 %4121
      %4123 = vrot.lane.b32.xlu0 %v2761, 28
      %v4124 = vpop.permute.xlu0 %4123
      %4125 = vrot.lane.b32.xlu0 %v2762, 28
      %v4126 = vpop.permute.xlu0 %4125
      %4127 = vrot.lane.b32.xlu0 %v2763, 28
      %v4128 = vpop.permute.xlu0 %4127
      %4129 = vrot.lane.b32.xlu0 %v2764, 28
      %v4130 = vpop.permute.xlu0 %4129
      %4131 = vrot.lane.b32.xlu0 %v2765, 28
      %v4132 = vpop.permute.xlu0 %4131
      %4133 = vrot.lane.b32.xlu0 %v2766, 28
      %v4134 = vpop.permute.xlu0 %4133
      %4135 = vrot.lane.b32.xlu0 %v2767, 28
      %v4136 = vpop.permute.xlu0 %4135
      %4186 = vst.msk [vmem:[#allocation3 - $0x1] sm:$0xfe] %vm1862, %v4040
      %4187 = vst.msk [vmem:[#allocation3 + $0x7] sm:$0xff] %vm1864, %v4042
      %4188 = vst.msk [vmem:[#allocation3 + $0xf] sm:$0xff] %vm1864, %v4044
      %4189 = vst.msk [vmem:[#allocation3 + $0x17] sm:$0xff] %vm1864, %v4046
      %4190 = vst.msk [vmem:[#allocation3 + $0x1f] sm:$0xff] %vm1864, %v4048
      %4191 = vst.msk [vmem:[#allocation3 + $0x27] sm:$0xff] %vm1864, %v4050
      %4192 = vst.msk [vmem:[#allocation3 + $0x2f] sm:$0xff] %vm1864, %v4052
      %4193 = vst.msk [vmem:[#allocation3 + $0x37] sm:$0xff] %vm1864, %v4054
      %4194 = vst.msk [vmem:[#allocation3 + $0x3f] sm:$0xff] %vm1864, %v4056
      %4195 = vst.msk [vmem:[#allocation3 + $0x47] sm:$0xff] %vm1864, %v4058
      %4196 = vst.msk [vmem:[#allocation3 + $0x4f] sm:$0xff] %vm1864, %v4060
      %4197 = vst.msk [vmem:[#allocation3 + $0x57] sm:$0xff] %vm1864, %v4062
      %4198 = vst.msk [vmem:[#allocation3 + $0x5f] sm:$0xff] %vm1864, %v4064
      %4199 = vst.msk [vmem:[#allocation3 + $0x67] sm:$0xff] %vm1864, %v4066
      %4200 = vst.msk [vmem:[#allocation3 + $0x6f] sm:$0xff] %vm1864, %v4068
      %4201 = vst.msk [vmem:[#allocation3 + $0x77] sm:$0xff] %vm1864, %v4070
      %4202 = vst.msk [vmem:[#allocation3 + $0x7f] sm:$0xff] %vm1864, %v4072
      %4203 = vst.msk [vmem:[#allocation3 + $0x87] sm:$0xff] %vm1864, %v4074
      %4204 = vst.msk [vmem:[#allocation3 + $0x8f] sm:$0xff] %vm1864, %v4076
      %4205 = vst.msk [vmem:[#allocation3 + $0x97] sm:$0xff] %vm1864, %v4078
      %4206 = vst.msk [vmem:[#allocation3 + $0x9f] sm:$0xff] %vm1864, %v4080
      %4207 = vst.msk [vmem:[#allocation3 + $0xa7] sm:$0xff] %vm1864, %v4082
      %4208 = vst.msk [vmem:[#allocation3 + $0xaf] sm:$0xff] %vm1864, %v4084
      %4209 = vst.msk [vmem:[#allocation3 + $0xb7] sm:$0xff] %vm1864, %v4086
      %4210 = vst.msk [vmem:[#allocation3 + $0xbf] sm:$0xff] %vm1864, %v4088
      %4211 = vst.msk [vmem:[#allocation3 + $0xc7] sm:$0xff] %vm1864, %v4090
      %4212 = vst.msk [vmem:[#allocation3 + $0xcf] sm:$0xff] %vm1864, %v4092
      %4213 = vst.msk [vmem:[#allocation3 + $0xd7] sm:$0xff] %vm1864, %v4094
      %4214 = vst.msk [vmem:[#allocation3 + $0xdf] sm:$0xff] %vm1864, %v4096
      %4215 = vst.msk [vmem:[#allocation3 + $0xe7] sm:$0xff] %vm1864, %v4098
      %4216 = vst.msk [vmem:[#allocation3 + $0xef] sm:$0xff] %vm1864, %v4100
      %4217 = vst.msk [vmem:[#allocation3 + $0xf7] sm:$0xff] %vm1864, %v4102
      %4218 = vst.msk [vmem:[#allocation3 + $0xff] sm:$0xff] %vm1864, %v4104
      %4219 = vst.msk [vmem:[#allocation3 + $0x107] sm:$0xff] %vm1864, %v4106
      %4220 = vst.msk [vmem:[#allocation3 + $0x10f] sm:$0xff] %vm1864, %v4108
      %4221 = vst.msk [vmem:[#allocation3 + $0x117] sm:$0xff] %vm1864, %v4110
      %4222 = vst.msk [vmem:[#allocation3 + $0x11f] sm:$0xff] %vm1864, %v4112
      %4223 = vst.msk [vmem:[#allocation3 + $0x127] sm:$0xff] %vm1864, %v4114
      %4224 = vst.msk [vmem:[#allocation3 + $0x12f] sm:$0xff] %vm1864, %v4116
      %4225 = vst.msk [vmem:[#allocation3 + $0x137] sm:$0xff] %vm1864, %v4118
      %4226 = vst.msk [vmem:[#allocation3 + $0x13f] sm:$0xff] %vm1864, %v4120
      %4227 = vst.msk [vmem:[#allocation3 + $0x147] sm:$0xff] %vm1864, %v4122
      %4228 = vst.msk [vmem:[#allocation3 + $0x14f] sm:$0xff] %vm1864, %v4124
      %4229 = vst.msk [vmem:[#allocation3 + $0x157] sm:$0xff] %vm1864, %v4126
      %4230 = vst.msk [vmem:[#allocation3 + $0x15f] sm:$0xff] %vm1864, %v4128
      %4231 = vst.msk [vmem:[#allocation3 + $0x167] sm:$0xff] %vm1864, %v4130
      %4232 = vst.msk [vmem:[#allocation3 + $0x16f] sm:$0xff] %vm1864, %v4132
      %4233 = vst.msk [vmem:[#allocation3 + $0x177] sm:$0xff] %vm1864, %v4134
      %4234 = vst.msk [vmem:[#allocation3 + $0x17f] sm:$0x1] %vm1912, %v4136
      %4235 = vrot.lane.b32.xlu0 %v2719, 32
      %v4236 = vpop.permute.xlu0 %4235
      %4237 = vrot.lane.b32.xlu0 %v2720, 32
      %v4238 = vpop.permute.xlu0 %4237
      %4239 = vrot.lane.b32.xlu0 %v2721, 32
      %v4240 = vpop.permute.xlu0 %4239
      %4241 = vrot.lane.b32.xlu0 %v2722, 32
      %v4242 = vpop.permute.xlu0 %4241
      %4243 = vrot.lane.b32.xlu0 %v2723, 32
      %v4244 = vpop.permute.xlu0 %4243
      %4245 = vrot.lane.b32.xlu0 %v2724, 32
      %v4246 = vpop.permute.xlu0 %4245
      %4247 = vrot.lane.b32.xlu0 %v2725, 32
      %v4248 = vpop.permute.xlu0 %4247
      %4249 = vrot.lane.b32.xlu0 %v2726, 32
      %v4250 = vpop.permute.xlu0 %4249
      %4251 = vrot.lane.b32.xlu0 %v2727, 32
      %v4252 = vpop.permute.xlu0 %4251
      %4253 = vrot.lane.b32.xlu0 %v2728, 32
      %v4254 = vpop.permute.xlu0 %4253
      %4255 = vrot.lane.b32.xlu0 %v2729, 32
      %v4256 = vpop.permute.xlu0 %4255
      %4257 = vrot.lane.b32.xlu0 %v2730, 32
      %v4258 = vpop.permute.xlu0 %4257
      %4259 = vrot.lane.b32.xlu0 %v2731, 32
      %v4260 = vpop.permute.xlu0 %4259
      %4261 = vrot.lane.b32.xlu0 %v2732, 32
      %v4262 = vpop.permute.xlu0 %4261
      %4263 = vrot.lane.b32.xlu0 %v2733, 32
      %v4264 = vpop.permute.xlu0 %4263
      %4265 = vrot.lane.b32.xlu0 %v2734, 32
      %v4266 = vpop.permute.xlu0 %4265
      %4267 = vrot.lane.b32.xlu0 %v2735, 32
      %v4268 = vpop.permute.xlu0 %4267
      %4269 = vrot.lane.b32.xlu0 %v2736, 32
      %v4270 = vpop.permute.xlu0 %4269
      %4271 = vrot.lane.b32.xlu0 %v2737, 32
      %v4272 = vpop.permute.xlu0 %4271
      %4273 = vrot.lane.b32.xlu0 %v2738, 32
      %v4274 = vpop.permute.xlu0 %4273
      %4275 = vrot.lane.b32.xlu0 %v2739, 32
      %v4276 = vpop.permute.xlu0 %4275
      %4277 = vrot.lane.b32.xlu0 %v2740, 32
      %v4278 = vpop.permute.xlu0 %4277
      %4279 = vrot.lane.b32.xlu0 %v2741, 32
      %v4280 = vpop.permute.xlu0 %4279
      %4281 = vrot.lane.b32.xlu0 %v2742, 32
      %v4282 = vpop.permute.xlu0 %4281
      %4283 = vrot.lane.b32.xlu0 %v2743, 32
      %v4284 = vpop.permute.xlu0 %4283
      %4285 = vrot.lane.b32.xlu0 %v2744, 32
      %v4286 = vpop.permute.xlu0 %4285
      %4287 = vrot.lane.b32.xlu0 %v2745, 32
      %v4288 = vpop.permute.xlu0 %4287
      %4289 = vrot.lane.b32.xlu0 %v2746, 32
      %v4290 = vpop.permute.xlu0 %4289
      %4291 = vrot.lane.b32.xlu0 %v2747, 32
      %v4292 = vpop.permute.xlu0 %4291
      %4293 = vrot.lane.b32.xlu0 %v2748, 32
      %v4294 = vpop.permute.xlu0 %4293
      %4295 = vrot.lane.b32.xlu0 %v2749, 32
      %v4296 = vpop.permute.xlu0 %4295
      %4297 = vrot.lane.b32.xlu0 %v2750, 32
      %v4298 = vpop.permute.xlu0 %4297
      %4299 = vrot.lane.b32.xlu0 %v2751, 32
      %v4300 = vpop.permute.xlu0 %4299
      %4301 = vrot.lane.b32.xlu0 %v2752, 32
      %v4302 = vpop.permute.xlu0 %4301
      %4303 = vrot.lane.b32.xlu0 %v2753, 32
      %v4304 = vpop.permute.xlu0 %4303
      %4305 = vrot.lane.b32.xlu0 %v2754, 32
      %v4306 = vpop.permute.xlu0 %4305
      %4307 = vrot.lane.b32.xlu0 %v2755, 32
      %v4308 = vpop.permute.xlu0 %4307
      %4309 = vrot.lane.b32.xlu0 %v2756, 32
      %v4310 = vpop.permute.xlu0 %4309
      %4311 = vrot.lane.b32.xlu0 %v2757, 32
      %v4312 = vpop.permute.xlu0 %4311
      %4313 = vrot.lane.b32.xlu0 %v2758, 32
      %v4314 = vpop.permute.xlu0 %4313
      %4315 = vrot.lane.b32.xlu0 %v2759, 32
      %v4316 = vpop.permute.xlu0 %4315
      %4317 = vrot.lane.b32.xlu0 %v2760, 32
      %v4318 = vpop.permute.xlu0 %4317
      %4319 = vrot.lane.b32.xlu0 %v2761, 32
      %v4320 = vpop.permute.xlu0 %4319
      %4321 = vrot.lane.b32.xlu0 %v2762, 32
      %v4322 = vpop.permute.xlu0 %4321
      %4323 = vrot.lane.b32.xlu0 %v2763, 32
      %v4324 = vpop.permute.xlu0 %4323
      %4325 = vrot.lane.b32.xlu0 %v2764, 32
      %v4326 = vpop.permute.xlu0 %4325
      %4327 = vrot.lane.b32.xlu0 %v2765, 32
      %v4328 = vpop.permute.xlu0 %4327
      %4329 = vrot.lane.b32.xlu0 %v2766, 32
      %v4330 = vpop.permute.xlu0 %4329
      %4331 = vrot.lane.b32.xlu0 %v2767, 32
      %v4332 = vpop.permute.xlu0 %4331
      %4382 = vst.msk [vmem:[#allocation3 - $0x2] sm:$0xfc] %vm2061, %v4236
      %4383 = vst.msk [vmem:[#allocation3 + $0x6] sm:$0xff] %vm2063, %v4238
      %4384 = vst.msk [vmem:[#allocation3 + $0xe] sm:$0xff] %vm2063, %v4240
      %4385 = vst.msk [vmem:[#allocation3 + $0x16] sm:$0xff] %vm2063, %v4242
      %4386 = vst.msk [vmem:[#allocation3 + $0x1e] sm:$0xff] %vm2063, %v4244
      %4387 = vst.msk [vmem:[#allocation3 + $0x26] sm:$0xff] %vm2063, %v4246
      %4388 = vst.msk [vmem:[#allocation3 + $0x2e] sm:$0xff] %vm2063, %v4248
      %4389 = vst.msk [vmem:[#allocation3 + $0x36] sm:$0xff] %vm2063, %v4250
      %4390 = vst.msk [vmem:[#allocation3 + $0x3e] sm:$0xff] %vm2063, %v4252
      %4391 = vst.msk [vmem:[#allocation3 + $0x46] sm:$0xff] %vm2063, %v4254
      %4392 = vst.msk [vmem:[#allocation3 + $0x4e] sm:$0xff] %vm2063, %v4256
      %4393 = vst.msk [vmem:[#allocation3 + $0x56] sm:$0xff] %vm2063, %v4258
      %4394 = vst.msk [vmem:[#allocation3 + $0x5e] sm:$0xff] %vm2063, %v4260
      %4395 = vst.msk [vmem:[#allocation3 + $0x66] sm:$0xff] %vm2063, %v4262
      %4396 = vst.msk [vmem:[#allocation3 + $0x6e] sm:$0xff] %vm2063, %v4264
      %4397 = vst.msk [vmem:[#allocation3 + $0x76] sm:$0xff] %vm2063, %v4266
      %4398 = vst.msk [vmem:[#allocation3 + $0x7e] sm:$0xff] %vm2063, %v4268
      %4399 = vst.msk [vmem:[#allocation3 + $0x86] sm:$0xff] %vm2063, %v4270
      %4400 = vst.msk [vmem:[#allocation3 + $0x8e] sm:$0xff] %vm2063, %v4272
      %4401 = vst.msk [vmem:[#allocation3 + $0x96] sm:$0xff] %vm2063, %v4274
      %4402 = vst.msk [vmem:[#allocation3 + $0x9e] sm:$0xff] %vm2063, %v4276
      %4403 = vst.msk [vmem:[#allocation3 + $0xa6] sm:$0xff] %vm2063, %v4278
      %4404 = vst.msk [vmem:[#allocation3 + $0xae] sm:$0xff] %vm2063, %v4280
      %4405 = vst.msk [vmem:[#allocation3 + $0xb6] sm:$0xff] %vm2063, %v4282
      %4406 = vst.msk [vmem:[#allocation3 + $0xbe] sm:$0xff] %vm2063, %v4284
      %4407 = vst.msk [vmem:[#allocation3 + $0xc6] sm:$0xff] %vm2063, %v4286
      %4408 = vst.msk [vmem:[#allocation3 + $0xce] sm:$0xff] %vm2063, %v4288
      %4409 = vst.msk [vmem:[#allocation3 + $0xd6] sm:$0xff] %vm2063, %v4290
      %4410 = vst.msk [vmem:[#allocation3 + $0xde] sm:$0xff] %vm2063, %v4292
      %4411 = vst.msk [vmem:[#allocation3 + $0xe6] sm:$0xff] %vm2063, %v4294
      %4412 = vst.msk [vmem:[#allocation3 + $0xee] sm:$0xff] %vm2063, %v4296
      %4413 = vst.msk [vmem:[#allocation3 + $0xf6] sm:$0xff] %vm2063, %v4298
      %4414 = vst.msk [vmem:[#allocation3 + $0xfe] sm:$0xff] %vm2063, %v4300
      %4415 = vst.msk [vmem:[#allocation3 + $0x106] sm:$0xff] %vm2063, %v4302
      %4416 = vst.msk [vmem:[#allocation3 + $0x10e] sm:$0xff] %vm2063, %v4304
      %4417 = vst.msk [vmem:[#allocation3 + $0x116] sm:$0xff] %vm2063, %v4306
      %4418 = vst.msk [vmem:[#allocation3 + $0x11e] sm:$0xff] %vm2063, %v4308
      %4419 = vst.msk [vmem:[#allocation3 + $0x126] sm:$0xff] %vm2063, %v4310
      %4420 = vst.msk [vmem:[#allocation3 + $0x12e] sm:$0xff] %vm2063, %v4312
      %4421 = vst.msk [vmem:[#allocation3 + $0x136] sm:$0xff] %vm2063, %v4314
      %4422 = vst.msk [vmem:[#allocation3 + $0x13e] sm:$0xff] %vm2063, %v4316
      %4423 = vst.msk [vmem:[#allocation3 + $0x146] sm:$0xff] %vm2063, %v4318
      %4424 = vst.msk [vmem:[#allocation3 + $0x14e] sm:$0xff] %vm2063, %v4320
      %4425 = vst.msk [vmem:[#allocation3 + $0x156] sm:$0xff] %vm2063, %v4322
      %4426 = vst.msk [vmem:[#allocation3 + $0x15e] sm:$0xff] %vm2063, %v4324
      %4427 = vst.msk [vmem:[#allocation3 + $0x166] sm:$0xff] %vm2063, %v4326
      %4428 = vst.msk [vmem:[#allocation3 + $0x16e] sm:$0xff] %vm2063, %v4328
      %4429 = vst.msk [vmem:[#allocation3 + $0x176] sm:$0xff] %vm2063, %v4330
      %4430 = vst.msk [vmem:[#allocation3 + $0x17e] sm:$0x3] %vm2111, %v4332
      %v4431 = vld [vmem:[#allocation3] sm:$0xff]
      %v4432 = vld [vmem:[#allocation3 + $0x8] sm:$0xff]
      %v4433 = vld [vmem:[#allocation3 + $0x10] sm:$0xff]
      %v4434 = vld [vmem:[#allocation3 + $0x18] sm:$0xff]
      %v4435 = vld [vmem:[#allocation3 + $0x20] sm:$0xff]
      %v4436 = vld [vmem:[#allocation3 + $0x28] sm:$0xff]
      %v4437 = vld [vmem:[#allocation3 + $0x30] sm:$0xff]
      %v4438 = vld [vmem:[#allocation3 + $0x38] sm:$0xff]
      %v4439 = vld [vmem:[#allocation3 + $0x40] sm:$0xff]
      %v4440 = vld [vmem:[#allocation3 + $0x48] sm:$0xff]
      %v4441 = vld [vmem:[#allocation3 + $0x50] sm:$0xff]
      %v4442 = vld [vmem:[#allocation3 + $0x58] sm:$0xff]
      %v4443 = vld [vmem:[#allocation3 + $0x60] sm:$0xff]
      %v4444 = vld [vmem:[#allocation3 + $0x68] sm:$0xff]
      %v4445 = vld [vmem:[#allocation3 + $0x70] sm:$0xff]
      %v4446 = vld [vmem:[#allocation3 + $0x78] sm:$0xff]
      %v4447 = vld [vmem:[#allocation3 + $0x80] sm:$0xff]
      %v4448 = vld [vmem:[#allocation3 + $0x88] sm:$0xff]
      %v4449 = vld [vmem:[#allocation3 + $0x90] sm:$0xff]
      %v4450 = vld [vmem:[#allocation3 + $0x98] sm:$0xff]
      %v4451 = vld [vmem:[#allocation3 + $0xa0] sm:$0xff]
      %v4452 = vld [vmem:[#allocation3 + $0xa8] sm:$0xff]
      %v4453 = vld [vmem:[#allocation3 + $0xb0] sm:$0xff]
      %v4454 = vld [vmem:[#allocation3 + $0xb8] sm:$0xff]
      %v4455 = vld [vmem:[#allocation3 + $0xc0] sm:$0xff]
      %v4456 = vld [vmem:[#allocation3 + $0xc8] sm:$0xff]
      %v4457 = vld [vmem:[#allocation3 + $0xd0] sm:$0xff]
      %v4458 = vld [vmem:[#allocation3 + $0xd8] sm:$0xff]
      %v4459 = vld [vmem:[#allocation3 + $0xe0] sm:$0xff]
      %v4460 = vld [vmem:[#allocation3 + $0xe8] sm:$0xff]
      %v4461 = vld [vmem:[#allocation3 + $0xf0] sm:$0xff]
      %v4462 = vld [vmem:[#allocation3 + $0xf8] sm:$0xff]
      %v4463 = vld [vmem:[#allocation3 + $0x100] sm:$0xff]
      %v4464 = vld [vmem:[#allocation3 + $0x108] sm:$0xff]
      %v4465 = vld [vmem:[#allocation3 + $0x110] sm:$0xff]
      %v4466 = vld [vmem:[#allocation3 + $0x118] sm:$0xff]
      %v4467 = vld [vmem:[#allocation3 + $0x120] sm:$0xff]
      %v4468 = vld [vmem:[#allocation3 + $0x128] sm:$0xff]
      %v4469 = vld [vmem:[#allocation3 + $0x130] sm:$0xff]
      %v4470 = vld [vmem:[#allocation3 + $0x138] sm:$0xff]
      %v4471 = vld [vmem:[#allocation3 + $0x140] sm:$0xff]
      %v4472 = vld [vmem:[#allocation3 + $0x148] sm:$0xff]
      %v4473 = vld [vmem:[#allocation3 + $0x150] sm:$0xff]
      %v4474 = vld [vmem:[#allocation3 + $0x158] sm:$0xff]
      %v4475 = vld [vmem:[#allocation3 + $0x160] sm:$0xff]
      %v4476 = vld [vmem:[#allocation3 + $0x168] sm:$0xff]
      %v4477 = vld [vmem:[#allocation3 + $0x170] sm:$0xff]
      %v4478 = vld [vmem:[#allocation3 + $0x178] sm:$0xff]
      %v4480 = vlaneseq
      %v4481 = vshrl.u32 %v4480, 7
      %v4482 = vsub.s32 0, %v4481
      %v4483 = vrot.slane %v292, %v4482
      %v4486 = vsel %vm2167, %v4431, 0
      %v4489 = vsel %vm2167, %v4432, 0
      %v4492 = vsel %vm2167, %v4433, 0
      %v4495 = vsel %vm2167, %v4434, 0
      %v4498 = vsel %vm2167, %v4435, 0
      %v4501 = vsel %vm2167, %v4436, 0
      %v4504 = vsel %vm2167, %v4437, 0
      %v4507 = vsel %vm2167, %v4438, 0
      %v4510 = vsel %vm2167, %v4439, 0
      %v4513 = vsel %vm2167, %v4440, 0
      %v4516 = vsel %vm2167, %v4441, 0
      %v4519 = vsel %vm2167, %v4442, 0
      %v4522 = vsel %vm2167, %v4443, 0
      %v4525 = vsel %vm2167, %v4444, 0
      %v4528 = vsel %vm2167, %v4445, 0
      %v4531 = vsel %vm2167, %v4446, 0
      %v4534 = vsel %vm2167, %v4447, 0
      %v4537 = vsel %vm2167, %v4448, 0
      %v4540 = vsel %vm2167, %v4449, 0
      %v4543 = vsel %vm2167, %v4450, 0
      %v4546 = vsel %vm2167, %v4451, 0
      %v4549 = vsel %vm2167, %v4452, 0
      %v4552 = vsel %vm2167, %v4453, 0
      %v4555 = vsel %vm2167, %v4454, 0
      %v4558 = vsel %vm2167, %v4455, 0
      %v4561 = vsel %vm2167, %v4456, 0
      %v4564 = vsel %vm2167, %v4457, 0
      %v4567 = vsel %vm2167, %v4458, 0
      %v4570 = vsel %vm2167, %v4459, 0
      %v4573 = vsel %vm2167, %v4460, 0
      %v4576 = vsel %vm2167, %v4461, 0
      %v4579 = vsel %vm2167, %v4462, 0
      %v4582 = vsel %vm2167, %v4463, 0
      %v4585 = vsel %vm2167, %v4464, 0
      %v4588 = vsel %vm2167, %v4465, 0
      %v4591 = vsel %vm2167, %v4466, 0
      %v4594 = vsel %vm2167, %v4467, 0
      %v4597 = vsel %vm2167, %v4468, 0
      %v4600 = vsel %vm2167, %v4469, 0
      %v4603 = vsel %vm2167, %v4470, 0
      %v4606 = vsel %vm2167, %v4471, 0
      %v4609 = vsel %vm2167, %v4472, 0
      %v4612 = vsel %vm2167, %v4473, 0
      %v4615 = vsel %vm2167, %v4474, 0
      %v4618 = vsel %vm2167, %v4475, 0
      %v4621 = vsel %vm2167, %v4476, 0
      %v4624 = vsel %vm2167, %v4477, 0
      %v4627 = vsel %vm2167, %v4478, 0
      %v4630 = vsel %vm2312, %v290, 0
      %4632 = vmatprep.subr.mxu0 0.0
      %4633 = vmatpush1.msra.mxu0 %v286
      %4634 = vmatprep.subr.mxu0 0.0
      %4635 = vmatpush1.msra.mxu0 %v287
      %4636 = vmatprep.subr.mxu0 0.0
      %4637 = vmatpush1.msra.mxu0 %v288
      %4638 = vmatprep.subr.mxu0 0.0
      %4639 = vmatpush1.msra.mxu0 %v289
      %4640 = vmatprep.subr.mxu0 0.0
      %4641 = vmatpush1.msra.mxu0 %v4630
      %4642 = vmatprep.subr.mxu0 0.0
      %4643 = vmatpush1.msra.mxu0 0.0
      %4644 = vmatprep.subr.mxu0 0.0
      %4645 = vmatpush1.msra.mxu0 0.0
      %4646 = vmatprep.subr.mxu0 0.0
      %4647 = vmatpush1.msra.mxu0 0.0
      %4648 = vmatprep.subr.mxu0 0.0
      %4649 = vmatpush1.msra.mxu0 0.0
      %4650 = vmatprep.subr.mxu0 0.0
      %4651 = vmatpush1.msra.mxu0 0.0
      %4652 = vmatprep.subr.mxu0 0.0
      %4653 = vmatpush1.msra.mxu0 0.0
      %4654 = vmatprep.subr.mxu0 0.0
      %4655 = vmatpush1.msra.mxu0 0.0
      %4656 = vmatprep.subr.mxu0 0.0
      %4657 = vmatpush1.msra.mxu0 0.0
      %4658 = vmatprep.subr.mxu0 0.0
      %4659 = vmatpush1.msra.mxu0 0.0
      %4660 = vmatprep.subr.mxu0 0.0
      %4661 = vmatpush1.msra.mxu0 0.0
      %4662 = vmatprep.subr.mxu0 0.0
      %4663 = vmatpush1.msra.mxu0 0.0
      %4664 = vmatprep.subr.mxu0 0.0
      %4665 = vmatpush1.msra.mxu0 0.0
      %4666 = vmatprep.subr.mxu0 0.0
      %4667 = vmatpush1.msra.mxu0 0.0
      %4668 = vmatprep.subr.mxu0 0.0
      %4669 = vmatpush1.msra.mxu0 0.0
      %4670 = vmatprep.subr.mxu0 0.0
      %4671 = vmatpush1.msra.mxu0 0.0
      %4672 = vmatprep.subr.mxu0 0.0
      %4673 = vmatpush1.msra.mxu0 0.0
      %4674 = vmatprep.subr.mxu0 0.0
      %4675 = vmatpush1.msra.mxu0 0.0
      %4676 = vmatprep.subr.mxu0 0.0
      %4677 = vmatpush1.msra.mxu0 0.0
      %4678 = vmatprep.subr.mxu0 0.0
      %4679 = vmatpush1.msra.mxu0 0.0
      %4680 = vmatprep.subr.mxu0 0.0
      %4681 = vmatpush1.msra.mxu0 0.0
      %4682 = vmatprep.subr.mxu0 0.0
      %4683 = vmatpush1.msra.mxu0 0.0
      %4684 = vmatprep.subr.mxu0 0.0
      %4685 = vmatpush1.msra.mxu0 0.0
      %4686 = vmatprep.subr.mxu0 0.0
      %4687 = vmatpush1.msra.mxu0 0.0
      %4688 = vmatprep.subr.mxu0 0.0
      %4689 = vmatpush1.msra.mxu0 0.0
      %4690 = vmatprep.subr.mxu0 0.0
      %4691 = vmatpush1.msra.mxu0 0.0
      %4692 = vmatprep.subr.mxu0 0.0
      %4693 = vmatpush1.msra.mxu0 0.0
      %4694 = vmatprep.subr.mxu0 0.0
      %4695 = vmatpush1.msra.mxu0 0.0
      %4696 = vmatprep.mubr.f32.mxu0 0.0
      %4697 = vmatmul.mubr.f32.gmra.mrb[0].mxu0 %v4486
      %v4698 = vpop.f32.mrb[0].mxu0
      %v4699 = vadd.f32 %v4483, %v4698
      %v4700 = vpop.f32.mrb[0].mxu0
      %4701 = vmatprep.mubr.f32.mxu0 0.0
      %4702 = vmatmul.mubr.f32.gmra.mrb[0].mxu0 %v4489
      %v4703 = vpop.f32.mrb[0].mxu0
      %v4704 = vadd.f32 %v4483, %v4703
      %v4705 = vpop.f32.mrb[0].mxu0
      %4706 = vmatprep.mubr.f32.mxu0 0.0
      %4707 = vmatmul.mubr.f32.gmra.mrb[0].mxu0 %v4492
      %v4708 = vpop.f32.mrb[0].mxu0
      %v4709 = vpop.f32.mrb[0].mxu0
      %4710 = vmatprep.mubr.f32.mxu0 0.0
      %4711 = vmatmul.mubr.f32.gmra.mrb[0].mxu0 %v4495
      %v4712 = vpop.f32.mrb[0].mxu0
      %v4713 = vadd.f32 %v4483, %v4712
      %v4714 = vpop.f32.mrb[0].mxu0
      %4715 = vmatprep.mubr.f32.mxu0 0.0
      %4716 = vmatmul.mubr.f32.gmra.mrb[0].mxu0 %v4498
      %v4717 = vpop.f32.mrb[0].mxu0
      %v4718 = vadd.f32 %v4483, %v4717
      %v4719 = vpop.f32.mrb[0].mxu0
      %4720 = vmatprep.mubr.f32.mxu0 0.0
      %4721 = vmatmul.mubr.f32.gmra.mrb[0].mxu0 %v4501
      %v4722 = vpop.f32.mrb[0].mxu0
      %v4723 = vpop.f32.mrb[0].mxu0
      %4724 = vmatprep.mubr.f32.mxu0 0.0
      %4725 = vmatmul.mubr.f32.gmra.mrb[0].mxu0 %v4504
      %v4726 = vpop.f32.mrb[0].mxu0
      %v4727 = vadd.f32 %v4483, %v4726
      %v4728 = vpop.f32.mrb[0].mxu0
      %4729 = vmatprep.mubr.f32.mxu0 0.0
      %4730 = vmatmul.mubr.f32.gmra.mrb[0].mxu0 %v4507
      %v4731 = vpop.f32.mrb[0].mxu0
      %v4732 = vadd.f32 %v4483, %v4731
      %v4733 = vpop.f32.mrb[0].mxu0
      %4734 = vmatprep.mubr.f32.mxu0 0.0
      %4735 = vmatmul.mubr.f32.gmra.mrb[0].mxu0 %v4510
      %v4736 = vpop.f32.mrb[0].mxu0
      %v4737 = vpop.f32.mrb[0].mxu0
      %4738 = vmatprep.mubr.f32.mxu0 0.0
      %4739 = vmatmul.mubr.f32.gmra.mrb[0].mxu0 %v4513
      %v4740 = vpop.f32.mrb[0].mxu0
      %v4741 = vadd.f32 %v4483, %v4740
      %v4742 = vpop.f32.mrb[0].mxu0
      %4743 = vmatprep.mubr.f32.mxu0 0.0
      %4744 = vmatmul.mubr.f32.gmra.mrb[0].mxu0 %v4516
      %v4745 = vpop.f32.mrb[0].mxu0
      %v4746 = vadd.f32 %v4483, %v4745
      %v4747 = vpop.f32.mrb[0].mxu0
      %4748 = vmatprep.mubr.f32.mxu0 0.0
      %4749 = vmatmul.mubr.f32.gmra.mrb[0].mxu0 %v4519
      %v4750 = vpop.f32.mrb[0].mxu0
      %v4751 = vpop.f32.mrb[0].mxu0
      %4752 = vmatprep.mubr.f32.mxu0 0.0
      %4753 = vmatmul.mubr.f32.gmra.mrb[0].mxu0 %v4522
      %v4754 = vpop.f32.mrb[0].mxu0
      %v4755 = vadd.f32 %v4483, %v4754
      %v4756 = vpop.f32.mrb[0].mxu0
      %4757 = vmatprep.mubr.f32.mxu0 0.0
      %4758 = vmatmul.mubr.f32.gmra.mrb[0].mxu0 %v4525
      %v4759 = vpop.f32.mrb[0].mxu0
      %v4760 = vadd.f32 %v4483, %v4759
      %v4761 = vpop.f32.mrb[0].mxu0
      %4762 = vmatprep.mubr.f32.mxu0 0.0
      %4763 = vmatmul.mubr.f32.gmra.mrb[0].mxu0 %v4528
      %v4764 = vpop.f32.mrb[0].mxu0
      %v4765 = vpop.f32.mrb[0].mxu0
      %4766 = vmatprep.mubr.f32.mxu0 0.0
      %4767 = vmatmul.mubr.f32.gmra.mrb[0].mxu0 %v4531
      %v4768 = vpop.f32.mrb[0].mxu0
      %v4769 = vadd.f32 %v4483, %v4768
      %v4770 = vpop.f32.mrb[0].mxu0
      %4771 = vmatprep.mubr.f32.mxu0 0.0
      %4772 = vmatmul.mubr.f32.gmra.mrb[0].mxu0 %v4534
      %v4773 = vpop.f32.mrb[0].mxu0
      %v4774 = vadd.f32 %v4483, %v4773
      %v4775 = vpop.f32.mrb[0].mxu0
      %4776 = vmatprep.mubr.f32.mxu0 0.0
      %4777 = vmatmul.mubr.f32.gmra.mrb[0].mxu0 %v4537
      %v4778 = vpop.f32.mrb[0].mxu0
      %v4779 = vpop.f32.mrb[0].mxu0
      %4780 = vmatprep.mubr.f32.mxu0 0.0
      %4781 = vmatmul.mubr.f32.gmra.mrb[0].mxu0 %v4540
      %v4782 = vpop.f32.mrb[0].mxu0
      %v4783 = vadd.f32 %v4483, %v4782
      %v4784 = vpop.f32.mrb[0].mxu0
      %4785 = vmatprep.mubr.f32.mxu0 0.0
      %4786 = vmatmul.mubr.f32.gmra.mrb[0].mxu0 %v4543
      %v4787 = vpop.f32.mrb[0].mxu0
      %v4788 = vadd.f32 %v4483, %v4787
      %v4789 = vpop.f32.mrb[0].mxu0
      %4790 = vmatprep.mubr.f32.mxu0 0.0
      %4791 = vmatmul.mubr.f32.gmra.mrb[0].mxu0 %v4546
      %v4792 = vpop.f32.mrb[0].mxu0
      %v4793 = vpop.f32.mrb[0].mxu0
      %4794 = vmatprep.mubr.f32.mxu0 0.0
      %4795 = vmatmul.mubr.f32.gmra.mrb[0].mxu0 %v4549
      %v4796 = vpop.f32.mrb[0].mxu0
      %v4797 = vadd.f32 %v4483, %v4796
      %v4798 = vpop.f32.mrb[0].mxu0
      %4799 = vmatprep.mubr.f32.mxu0 0.0
      %4800 = vmatmul.mubr.f32.gmra.mrb[0].mxu0 %v4552
      %v4801 = vpop.f32.mrb[0].mxu0
      %v4802 = vadd.f32 %v4483, %v4801
      %v4803 = vpop.f32.mrb[0].mxu0
      %4804 = vmatprep.mubr.f32.mxu0 0.0
      %4805 = vmatmul.mubr.f32.gmra.mrb[0].mxu0 %v4555
      %v4806 = vpop.f32.mrb[0].mxu0
      %v4807 = vpop.f32.mrb[0].mxu0
      %4808 = vmatprep.mubr.f32.mxu0 0.0
      %4809 = vmatmul.mubr.f32.gmra.mrb[0].mxu0 %v4558
      %v4810 = vpop.f32.mrb[0].mxu0
      %v4811 = vadd.f32 %v4483, %v4810
      %v4812 = vpop.f32.mrb[0].mxu0
      %4813 = vmatprep.mubr.f32.mxu0 0.0
      %4814 = vmatmul.mubr.f32.gmra.mrb[0].mxu0 %v4561
      %v4815 = vpop.f32.mrb[0].mxu0
      %v4816 = vadd.f32 %v4483, %v4815
      %v4817 = vpop.f32.mrb[0].mxu0
      %4818 = vmatprep.mubr.f32.mxu0 0.0
      %4819 = vmatmul.mubr.f32.gmra.mrb[0].mxu0 %v4564
      %v4820 = vpop.f32.mrb[0].mxu0
      %v4821 = vpop.f32.mrb[0].mxu0
      %4822 = vmatprep.mubr.f32.mxu0 0.0
      %4823 = vmatmul.mubr.f32.gmra.mrb[0].mxu0 %v4567
      %v4824 = vpop.f32.mrb[0].mxu0
      %v4825 = vadd.f32 %v4483, %v4824
      %v4826 = vpop.f32.mrb[0].mxu0
      %4827 = vmatprep.mubr.f32.mxu0 0.0
      %4828 = vmatmul.mubr.f32.gmra.mrb[0].mxu0 %v4570
      %v4829 = vpop.f32.mrb[0].mxu0
      %v4830 = vadd.f32 %v4483, %v4829
      %v4831 = vpop.f32.mrb[0].mxu0
      %4832 = vmatprep.mubr.f32.mxu0 0.0
      %4833 = vmatmul.mubr.f32.gmra.mrb[0].mxu0 %v4573
      %v4834 = vpop.f32.mrb[0].mxu0
      %v4835 = vpop.f32.mrb[0].mxu0
      %4836 = vmatprep.mubr.f32.mxu0 0.0
      %4837 = vmatmul.mubr.f32.gmra.mrb[0].mxu0 %v4576
      %v4838 = vpop.f32.mrb[0].mxu0
      %v4839 = vadd.f32 %v4483, %v4838
      %v4840 = vpop.f32.mrb[0].mxu0
      %4841 = vmatprep.mubr.f32.mxu0 0.0
      %4842 = vmatmul.mubr.f32.gmra.mrb[0].mxu0 %v4579
      %v4843 = vpop.f32.mrb[0].mxu0
      %v4844 = vadd.f32 %v4483, %v4843
      %v4845 = vpop.f32.mrb[0].mxu0
      %4846 = vmatprep.mubr.f32.mxu0 0.0
      %4847 = vmatmul.mubr.f32.gmra.mrb[0].mxu0 %v4582
      %v4848 = vpop.f32.mrb[0].mxu0
      %v4849 = vpop.f32.mrb[0].mxu0
      %4850 = vmatprep.mubr.f32.mxu0 0.0
      %4851 = vmatmul.mubr.f32.gmra.mrb[0].mxu0 %v4585
      %v4852 = vpop.f32.mrb[0].mxu0
      %v4853 = vadd.f32 %v4483, %v4852
      %v4854 = vpop.f32.mrb[0].mxu0
      %4855 = vmatprep.mubr.f32.mxu0 0.0
      %4856 = vmatmul.mubr.f32.gmra.mrb[0].mxu0 %v4588
      %v4857 = vpop.f32.mrb[0].mxu0
      %v4858 = vadd.f32 %v4483, %v4857
      %v4859 = vpop.f32.mrb[0].mxu0
      %4860 = vmatprep.mubr.f32.mxu0 0.0
      %4861 = vmatmul.mubr.f32.gmra.mrb[0].mxu0 %v4591
      %v4862 = vpop.f32.mrb[0].mxu0
      %v4863 = vpop.f32.mrb[0].mxu0
      %4864 = vmatprep.mubr.f32.mxu0 0.0
      %4865 = vmatmul.mubr.f32.gmra.mrb[0].mxu0 %v4594
      %v4866 = vpop.f32.mrb[0].mxu0
      %v4867 = vadd.f32 %v4483, %v4866
      %v4868 = vpop.f32.mrb[0].mxu0
      %4869 = vmatprep.mubr.f32.mxu0 0.0
      %4870 = vmatmul.mubr.f32.gmra.mrb[0].mxu0 %v4597
      %v4871 = vpop.f32.mrb[0].mxu0
      %v4872 = vadd.f32 %v4483, %v4871
      %v4873 = vpop.f32.mrb[0].mxu0
      %4874 = vmatprep.mubr.f32.mxu0 0.0
      %4875 = vmatmul.mubr.f32.gmra.mrb[0].mxu0 %v4600
      %v4876 = vpop.f32.mrb[0].mxu0
      %v4877 = vpop.f32.mrb[0].mxu0
      %4878 = vmatprep.mubr.f32.mxu0 0.0
      %4879 = vmatmul.mubr.f32.gmra.mrb[0].mxu0 %v4603
      %v4880 = vpop.f32.mrb[0].mxu0
      %v4881 = vadd.f32 %v4483, %v4880
      %v4882 = vpop.f32.mrb[0].mxu0
      %4883 = vmatprep.mubr.f32.mxu0 0.0
      %4884 = vmatmul.mubr.f32.gmra.mrb[0].mxu0 %v4606
      %v4885 = vpop.f32.mrb[0].mxu0
      %v4886 = vadd.f32 %v4483, %v4885
      %v4887 = vpop.f32.mrb[0].mxu0
      %4888 = vmatprep.mubr.f32.mxu0 0.0
      %4889 = vmatmul.mubr.f32.gmra.mrb[0].mxu0 %v4609
      %v4890 = vpop.f32.mrb[0].mxu0
      %v4891 = vpop.f32.mrb[0].mxu0
      %4892 = vmatprep.mubr.f32.mxu0 0.0
      %4893 = vmatmul.mubr.f32.gmra.mrb[0].mxu0 %v4612
      %v4894 = vpop.f32.mrb[0].mxu0
      %v4895 = vadd.f32 %v4483, %v4894
      %v4896 = vpop.f32.mrb[0].mxu0
      %4897 = vmatprep.mubr.f32.mxu0 0.0
      %4898 = vmatmul.mubr.f32.gmra.mrb[0].mxu0 %v4615
      %v4899 = vpop.f32.mrb[0].mxu0
      %v4900 = vadd.f32 %v4483, %v4899
      %v4901 = vpop.f32.mrb[0].mxu0
      %4902 = vmatprep.mubr.f32.mxu0 0.0
      %4903 = vmatmul.mubr.f32.gmra.mrb[0].mxu0 %v4618
      %v4904 = vpop.f32.mrb[0].mxu0
      %v4905 = vpop.f32.mrb[0].mxu0
      %4906 = vmatprep.mubr.f32.mxu0 0.0
      %4907 = vmatmul.mubr.f32.gmra.mrb[0].mxu0 %v4621
      %v4908 = vpop.f32.mrb[0].mxu0
      %v4909 = vadd.f32 %v4483, %v4908
      %v4910 = vpop.f32.mrb[0].mxu0
      %4911 = vmatprep.mubr.f32.mxu0 0.0
      %4912 = vmatmul.mubr.f32.gmra.mrb[0].mxu0 %v4624
      %v4913 = vpop.f32.mrb[0].mxu0
      %v4914 = vadd.f32 %v4483, %v4913
      %v4915 = vpop.f32.mrb[0].mxu0
      %4916 = vmatprep.mubr.f32.mxu0 0.0
      %4917 = vmatmul.mubr.f32.gmra.mrb[0].mxu0 %v4627
      %v4918 = vpop.f32.mrb[0].mxu0
      %v4919 = vpop.f32.mrb[0].mxu0
      %4920 = vdwg.mxu0
      %v4921 = vadd.f32 %v4699, %v225
      %v4922 = vadd.f32 %v4704, %v226
      %v4923 = vadd.f32 %v4713, %v227
      %v4924 = vadd.f32 %v4718, %v228
      %v4925 = vadd.f32 %v4727, %v229
      %v4926 = vadd.f32 %v4732, %v230
      %v4927 = vadd.f32 %v4741, %v231
      %v4928 = vadd.f32 %v4746, %v232
      %v4929 = vadd.f32 %v4755, %v233
      %v4930 = vadd.f32 %v4760, %v234
      %v4931 = vadd.f32 %v4769, %v235
      %v4932 = vadd.f32 %v4774, %v236
      %v4933 = vadd.f32 %v4783, %v237
      %v4934 = vadd.f32 %v4788, %v238
      %v4935 = vadd.f32 %v4797, %v239
      %v4936 = vadd.f32 %v4802, %v240
      %v4937 = vadd.f32 %v4811, %v241
      %v4938 = vadd.f32 %v4816, %v242
      %v4939 = vadd.f32 %v4825, %v243
      %v4940 = vadd.f32 %v4830, %v244
      %v4941 = vadd.f32 %v4839, %v245
      %v4942 = vadd.f32 %v4844, %v246
      %v4943 = vadd.f32 %v4853, %v247
      %v4944 = vadd.f32 %v4858, %v248
      %v4945 = vadd.f32 %v4867, %v249
      %v4946 = vadd.f32 %v4872, %v250
      %v4947 = vadd.f32 %v4881, %v251
      %v4948 = vadd.f32 %v4886, %v252
      %v4949 = vadd.f32 %v4895, %v253
      %v4950 = vadd.f32 %v4900, %v254
      %v4951 = vadd.f32 %v4909, %v255
      %v4952 = vadd.f32 %v4914, %v256
      %v4953 = vmax.f32 %v4921, 0.0
      %v4954 = vmax.f32 %v4922, 0.0
      %v4955 = vmax.f32 %v4923, 0.0
      %v4956 = vmax.f32 %v4924, 0.0
      %v4957 = vmax.f32 %v4925, 0.0
      %v4958 = vmax.f32 %v4926, 0.0
      %v4959 = vmax.f32 %v4927, 0.0
      %v4960 = vmax.f32 %v4928, 0.0
      %v4961 = vmax.f32 %v4929, 0.0
      %v4962 = vmax.f32 %v4930, 0.0
      %v4963 = vmax.f32 %v4931, 0.0
      %v4964 = vmax.f32 %v4932, 0.0
      %v4965 = vmax.f32 %v4933, 0.0
      %v4966 = vmax.f32 %v4934, 0.0
      %v4967 = vmax.f32 %v4935, 0.0
      %v4968 = vmax.f32 %v4936, 0.0
      %v4969 = vmax.f32 %v4937, 0.0
      %v4970 = vmax.f32 %v4938, 0.0
      %v4971 = vmax.f32 %v4939, 0.0
      %v4972 = vmax.f32 %v4940, 0.0
      %v4973 = vmax.f32 %v4941, 0.0
      %v4974 = vmax.f32 %v4942, 0.0
      %v4975 = vmax.f32 %v4943, 0.0
      %v4976 = vmax.f32 %v4944, 0.0
      %v4977 = vmax.f32 %v4945, 0.0
      %v4978 = vmax.f32 %v4946, 0.0
      %v4979 = vmax.f32 %v4947, 0.0
      %v4980 = vmax.f32 %v4948, 0.0
      %v4981 = vmax.f32 %v4949, 0.0
      %v4982 = vmax.f32 %v4950, 0.0
      %v4983 = vmax.f32 %v4951, 0.0
      %v4984 = vmax.f32 %v4952, 0.0
      %4985 = vst.msk [vmem:[%s224] sm:$0xff] %vm258, %v4953
      %4986 = vst.msk [vmem:[%s224 + $0x8] sm:$0xff] %vm258, %v4954
      %4987 = vst.msk [vmem:[%s224 + $0x10] sm:$0xff] %vm258, %v4955
      %4988 = vst.msk [vmem:[%s224 + $0x18] sm:$0xff] %vm258, %v4956
      %4989 = vst.msk [vmem:[%s224 + $0x20] sm:$0xff] %vm258, %v4957
      %4990 = vst.msk [vmem:[%s224 + $0x28] sm:$0xff] %vm258, %v4958
      %4991 = vst.msk [vmem:[%s224 + $0x30] sm:$0xff] %vm258, %v4959
      %4992 = vst.msk [vmem:[%s224 + $0x38] sm:$0xff] %vm258, %v4960
      %4993 = vst.msk [vmem:[%s224 + $0x40] sm:$0xff] %vm258, %v4961
      %4994 = vst.msk [vmem:[%s224 + $0x48] sm:$0xff] %vm258, %v4962
      %4995 = vst.msk [vmem:[%s224 + $0x50] sm:$0xff] %vm258, %v4963
      %4996 = vst.msk [vmem:[%s224 + $0x58] sm:$0xff] %vm258, %v4964
      %4997 = vst.msk [vmem:[%s224 + $0x60] sm:$0xff] %vm258, %v4965
      %4998 = vst.msk [vmem:[%s224 + $0x68] sm:$0xff] %vm258, %v4966
      %4999 = vst.msk [vmem:[%s224 + $0x70] sm:$0xff] %vm258, %v4967
      %5000 = vst.msk [vmem:[%s224 + $0x78] sm:$0xff] %vm258, %v4968
      %5001 = vst.msk [vmem:[%s224 + $0x80] sm:$0xff] %vm258, %v4969
      %5002 = vst.msk [vmem:[%s224 + $0x88] sm:$0xff] %vm258, %v4970
      %5003 = vst.msk [vmem:[%s224 + $0x90] sm:$0xff] %vm258, %v4971
      %5004 = vst.msk [vmem:[%s224 + $0x98] sm:$0xff] %vm258, %v4972
      %5005 = vst.msk [vmem:[%s224 + $0xa0] sm:$0xff] %vm258, %v4973
      %5006 = vst.msk [vmem:[%s224 + $0xa8] sm:$0xff] %vm258, %v4974
      %5007 = vst.msk [vmem:[%s224 + $0xb0] sm:$0xff] %vm258, %v4975
      %5008 = vst.msk [vmem:[%s224 + $0xb8] sm:$0xff] %vm258, %v4976
      %5009 = vst.msk [vmem:[%s224 + $0xc0] sm:$0xff] %vm258, %v4977
      %5010 = vst.msk [vmem:[%s224 + $0xc8] sm:$0xff] %vm258, %v4978
      %5011 = vst.msk [vmem:[%s224 + $0xd0] sm:$0xff] %vm258, %v4979
      %5012 = vst.msk [vmem:[%s224 + $0xd8] sm:$0xff] %vm258, %v4980
      %5013 = vst.msk [vmem:[%s224 + $0xe0] sm:$0xff] %vm258, %v4981
      %5014 = vst.msk [vmem:[%s224 + $0xe8] sm:$0xff] %vm258, %v4982
      %5015 = vst.msk [vmem:[%s224 + $0xf0] sm:$0xff] %vm258, %v4983
      %5016 = vst.msk [vmem:[%s224 + $0xf8] sm:$0xff] %vm258, %v4984
      %p5017 = scmp.lt.s32.totalorder %s16, 1
      %s5018 = scalar_select %p5017, %s16, 1
      %s5019 = smul.addr %s5018, 32
      %s5020 = smul.addr %s5019, 8
      %s5021 = scalar_lea.vmem %s5, %s5020
      // Predicated region
      $region41: #{residual_block.1} parent=39 // pred_check
        %p5022 = pneg %p144
      $region42: #{residual_block.1} parent=39 // pred_check_branch
        %5024 = sbr.rel (%p5022) target = $region44
      $region43: #{residual_block.1} parent=39 // pred_region
        _
      $region44: #{residual_block.1} parent=39 // pred_fallthru
        _
    $region40: #{residual_block.1} parent=5 // pred_fallthru
      _
    %p5025 = scmp.le.s32.totalorder 2, %s11
    // Predicated region
    $region45: #{residual_block.1} parent=5 // pred_check
      %p5026 = pneg %p5025
    $region46: #{residual_block.1} parent=5 // pred_check_branch
      %5028 = sbr.rel (%p5026) target = $region48
    $region47: #{residual_block.1} parent=5 // pred_region
      %s5029 = ssub.s32 %s11, 2
      // Predicated region
      $region49: #{residual_block.1} parent=47 // pred_check
        %p5030 = pneg %p150
      $region50: #{residual_block.1} parent=47 // pred_check_branch
        %5032 = sbr.rel (%p5030) target = $region52
      $region51: #{residual_block.1} parent=47 // pred_region
        %p5033 = scmp.lt.s32.totalorder %s17, 1
        %s5034 = scalar_select %p5033, %s17, 1
        %s5035 = smul.addr %s5034, 32
        %s5036 = smul.addr %s5035, 8
        %s5037 = scalar_lea.vmem %s5, %s5036
      $region52: #{residual_block.1} parent=47 // pred_fallthru
        _
    $region48: #{residual_block.1} parent=5 // pred_fallthru
      _
  $region6: #{residual_block.1} parent=0 // loop_footer
    %s15 = sadd.s32 1, %s11
  $region7: #{residual_block.1} parent=0 // loop_footer_branch
    %10 = sbr.rel target = $region3
  $region8: #{residual_block.1} parent=0 // loop_exit
    _

</llo_original>
